<compile_context>
chip_gen: v7x
topology: tpu7x:2x2x1
jax: 0.10.0
libtpu: 0.0.40
codegen_flags: <defaults>
</compile_context>

<pallas_src>
import functools

import jax
import jax.numpy as jnp
from jax import lax
from jax.experimental import pallas as pl
from jax.experimental.pallas import tpu as pltpu


def _full_spec(shape):
    return pl.BlockSpec(shape, lambda i: (0,) * len(shape))


# ----------------------------- fused Pallas kernel -------------------------

def _fused_forward_kernel(a_ref, fpos_ref, cpt_ref, cy_ref, fb_ref, cb_ref, x_ref,
                          *refs, n, nc, k, n_pre, n_end, splits):
    """Full CFDAGCN forward on one grid step.

    a_ref  : (2N, N) bf16, rows [0:N] = A1_hat, rows [N:2N] = A2_hat (VMEM resident)
    x_ref  : (N, 6)  f32   fine_x = cat([batch.x, batch.sdf], 1)
    refs   : flat per-layer (weight parts..., bias) refs, then the output ref.
    splits : number of weight row-parts per layer (static).
    """
    o_ref = refs[-1]
    wb = refs[:-1]

    def xw_of(parts, w_part_refs):
        # x @ W with W row-split to match the un-concatenated activation parts.
        acc = None
        for p, wr in zip(parts, w_part_refs):
            t = jnp.dot(p, wr[...], preferred_element_type=jnp.float32)
            acc = t if acc is None else acc + t
        return acc

    def dual_layer(parts, w_part_refs, b_ref, relu):
        # Shared-weight GCNConv with use_A = -2:
        #   concat([A1 @ (xW) + b, A2 @ (xW) + b], dim=1)   (concat kept as parts)
        xw = xw_of(parts, w_part_refs).astype(jnp.bfloat16)          # (N, c)
        h = jnp.dot(a_ref[...], xw,                                   # one (2N,N)@(N,c)
                    preferred_element_type=jnp.float32) + b_ref[...]  # (2N, c)
        if relu:
            h = jnp.maximum(h, 0.0)
        # Split at the 8-aligned sublane boundary N -> cheap, no lane relayout.
        return [h[:n, :], h[n:, :]]

    # ---------------- pre_convs (3 dual-A layers, each ReLU) ----------------
    parts = [x_ref[...]]
    idx = 0
    li = 0
    for _ in range(n_pre):
        s = splits[li]
        parts = dual_layer(parts, wb[idx:idx + s], wb[idx + s], relu=True)
        idx += s + 1
        li += 1

    # ---------------- knn_interpolate (k = 3) --------------------------------
    # TODO(synk): graphs with fewer than k coarse nodes would need neighbor-count
    # clamping like torch_geometric; not hit at these sizes.
    fpos = fpos_ref[...]                        # (N, 2) fine positions
    fx, fy = fpos[:, 0:1], fpos[:, 1:2]         # (N, 1)
    cpt = cpt_ref[...]                          # (2, Nc) coarse positions (transposed)
    cxx, cyy = cpt[0:1, :], cpt[1:2, :]         # (1, Nc)
    d2 = (fx - cxx) ** 2 + (fy - cyy) ** 2      # (N, Nc)

    same = fb_ref[...] == cb_ref[...]           # int32 (N,1) == (1,Nc) -> (N, Nc)
    big = jnp.float32(1e30)
    d2 = jnp.where(same, d2, big)

    col = lax.broadcasted_iota(jnp.int32, (n, nc), 1)
    wmat = jnp.zeros((n, nc), jnp.float32)      # accumulated interpolation weights
    den = jnp.zeros((n, 1), jnp.float32)
    for _ in range(k):                          # iteratively extract the k smallest
        m = jnp.min(d2, axis=1, keepdims=True)                            # (N, 1)
        idxc = jnp.min(jnp.where(d2 == m, col, nc), axis=1, keepdims=True)
        sel = col == idxc                                                  # one-hot
        w = 1.0 / jnp.maximum(m, jnp.float32(1e-16))
        wmat = wmat + jnp.where(sel, w, 0.0)
        den = den + w
        d2 = jnp.where(sel, big, d2)
    # single (N, Nc) @ (Nc, 3) matmul instead of one tiny matmul per iteration
    interp = jnp.dot(wmat, cy_ref[...], preferred_element_type=jnp.float32) / den

    # ---------------- end convs ----------------------------------------------
    # fine_y = cat([interp, fine_x], dim=1) -> kept as parts [interp, h1, h2]
    parts = [interp] + parts
    for _ in range(n_end - 1):
        s = splits[li]
        parts = dual_layer(parts, wb[idx:idx + s], wb[idx + s], relu=True)
        idx += s + 1
        li += 1

    # final layer: plain GCNConv (use_A = 1), no ReLU; only the A1 half of the
    # stacked adjacency is read (static ref slice, zero cost).
    s = splits[li]
    xw = xw_of(parts, wb[idx:idx + s]).astype(jnp.bfloat16)
    o_ref[...] = jnp.dot(a_ref[:n, :], xw,
                         preferred_element_type=jnp.float32) + wb[idx + s][...]


# ------------------------------- wrapper ------------------------------------

def _split_rows(w, sizes):
    parts, off = [], 0
    for s in sizes:
        parts.append(w[off:off + s, :])
        off += s
    return parts


def cfdagcn_forward(params, batch_x, sdf, a1n, a2n,
                    coarse_pos, coarse_y, fine_batch, coarse_batch, k=3):
    n = batch_x.shape[0]
    nc = coarse_pos.shape[0]
    hidden = params["pre"][0][0].shape[1]
    out_channels = params["end"][-1][0].shape[1]

    # Stack both normalized adjacencies and cast to bf16 ONCE (half the HBM bytes,
    # native MXU rate); they stay resident in VMEM for all layers of the fused kernel.
    a_stacked = jnp.concatenate([a1n, a2n], axis=0).astype(jnp.bfloat16)   # (2N, N)

    fine_x = jnp.concatenate([batch_x, sdf], axis=1)        # (N, 6)
    fpos = batch_x[:, :2]
    cpt = coarse_pos.T                                      # (2, Nc)
    fb = fine_batch.astype(jnp.int32).reshape(n, 1)
    cb = coarse_batch.astype(jnp.int32).reshape(1, nc)

    # Per-layer input-channel splits (how activations are carried inside the kernel).
    in_splits = [
        (6,),                                # pre 0: [cat(x, sdf)]
        (hidden, hidden),                    # pre 1: [A1-half, A2-half]
        (hidden, hidden),                    # pre 2
        (out_channels, hidden, hidden),      # end 0: [knn-interp, A1-half, A2-half]
        (hidden, hidden),                    # end 1
        (hidden, hidden),                    # end 2 (single-A, no ReLU)
    ]
    layers = params["pre"] + params["end"]
    wb = []
    for (w, b), sizes in zip(layers, in_splits):
        wb.extend(_split_rows(w, sizes))     # weight row-parts matching the splits
        wb.append(b.reshape(1, -1))          # bias as a (1, cout) row

    inputs = [a_stacked, fpos, cpt, coarse_y, fb, cb, fine_x] + wb
    in_specs = [_full_spec(v.shape) for v in inputs]

    kern = functools.partial(
        _fused_forward_kernel, n=n, nc=nc, k=k,
        n_pre=len(params["pre"]), n_end=len(params["end"]),
        splits=tuple(len(s) for s in in_splits))

    return pl.pallas_call(
        kern,
        out_shape=jax.ShapeDtypeStruct((n, out_channels), jnp.float32),
        grid=(1,),
        in_specs=in_specs,
        out_specs=_full_spec((n, out_channels)),
        compiler_params=pltpu.CompilerParams(
            dimension_semantics=("arbitrary",),
            vmem_limit_bytes=32 * 1024 * 1024),
    )(*inputs)


# ------------------------------- glue (JAX) ---------------------------------

def gcn_normalize(adj_bin):
    """D^-1/2 (A + I) D^-1/2 with unit edge weights (GCNConv, improved=False)."""
    n = adj_bin.shape[0]
    a_hat = adj_bin + jnp.eye(n, dtype=jnp.float32)
    deg = a_hat.sum(axis=1)
    d_inv_sqrt = 1.0 / jnp.sqrt(deg)
    return a_hat * d_inv_sqrt[:, None] * d_inv_sqrt[None, :]


def cfdagcn_reference(params, fine_x, a1n, a2n, coarse_pos, coarse_y,
                      fpos, fine_batch, coarse_batch, k=3):
    """Plain-JAX reference (same bf16-adjacency math) used only for validation."""
    a1 = a1n.astype(jnp.bfloat16)
    a2 = a2n.astype(jnp.bfloat16)

    def dual(x, w, b, relu):
        xw = jnp.dot(x, w).astype(jnp.bfloat16)
        h1 = jnp.dot(a1, xw, preferred_element_type=jnp.float32) + b
        h2 = jnp.dot(a2, xw, preferred_element_type=jnp.float32) + b
        out = jnp.concatenate([h1, h2], axis=1)
        return jnp.maximum(out, 0.0) if relu else out

    h = fine_x
    for (w, b) in params["pre"]:
        h = dual(h, w, b, True)

    d2 = ((fpos[:, None, :] - coarse_pos[None, :, :]) ** 2).sum(-1)
    same = fine_batch[:, None] == coarse_batch[None, :]
    d2 = jnp.where(same, d2, 1e30)
    n, nc = d2.shape
    col = jnp.arange(nc, dtype=jnp.int32)[None, :]
    wmat = jnp.zeros_like(d2)
    den = jnp.zeros((n, 1), jnp.float32)
    for _ in range(k):
        m = jnp.min(d2, axis=1, keepdims=True)
        idxc = jnp.min(jnp.where(d2 == m, col, nc), axis=1, keepdims=True)
        sel = col == idxc
        w = 1.0 / jnp.maximum(m, 1e-16)
        wmat = wmat + jnp.where(sel, w, 0.0)
        den = den + w
        d2 = jnp.where(sel, 1e30, d2)
    interp = (wmat @ coarse_y) / den

    h = jnp.concatenate([interp, h], axis=1)
    for (w, b) in params["end"][:-1]:
        h = dual(h, w, b, True)
    w, b = params["end"][-1]
    xw = jnp.dot(h, w).astype(jnp.bfloat16)
    return jnp.dot(a1, xw, preferred_element_type=jnp.float32) + b


def glorot(key, shape):
    fan_in, fan_out = shape
    lim = (6.0 / (fan_in + fan_out)) ** 0.5
    return jax.random.uniform(key, shape, jnp.float32, -lim, lim)


if __name__ == "__main__":
    key = jax.random.PRNGKey(0)
    batch_size = 2
    n_per_graph = 64
    nc_per_graph = 8
    N = batch_size * n_per_graph          # fine nodes (128 -> lane friendly)
    NC = batch_size * nc_per_graph        # coarse nodes
    hidden = 32
    out_channels = 3

    ks = jax.random.split(key, 16)

    # batch.x: (N, 5) (first 2 columns are node positions), batch.sdf: (N, 1)
    batch_x = jax.random.normal(ks[0], (N, 5), jnp.float32)
    sdf = jax.random.normal(ks[1], (N, 1), jnp.float32)

    fine_batch = jnp.repeat(jnp.arange(batch_size, dtype=jnp.int32), n_per_graph)
    coarse_batch = jnp.repeat(jnp.arange(batch_size, dtype=jnp.int32), nc_per_graph)

    # random symmetric adjacency restricted to within-graph edges
    block_mask = fine_batch[:, None] == fine_batch[None, :]
    a_rand = jax.random.uniform(ks[2], (N, N)) < 0.15
    a_bin = jnp.logical_and(a_rand, block_mask)
    a_bin = jnp.logical_or(a_bin, a_bin.T)
    a_bin = a_bin.at[jnp.arange(N), jnp.arange(N)].set(False).astype(jnp.float32)
    # two-hop adjacency (batch.edge_indexA2), diagonal removed
    a2_bin = ((a_bin @ a_bin) > 0).astype(jnp.float32)
    a2_bin = a2_bin.at[jnp.arange(N), jnp.arange(N)].set(0.0)

    a1n = gcn_normalize(a_bin)
    a2n = gcn_normalize(a2_bin)

    # synthetic coarse simulation data (positions + 3-channel solution)
    coarse_pos = jax.random.normal(ks[3], (NC, 2), jnp.float32)
    coarse_y = jax.random.normal(ks[4], (NC, out_channels), jnp.float32)

    # parameters (GCNConv: glorot weights, zero bias), A_pow = -2 (shared layer)
    pre_dims = [(6, hidden), (2 * hidden, hidden), (2 * hidden, hidden)]
    end_dims = [(out_channels + 2 * hidden, hidden), (2 * hidden, hidden),
                (2 * hidden, out_channels)]
    params = {
        "pre": [(glorot(ks[5 + i], d), jnp.zeros((d[1],), jnp.float32))
                for i, d in enumerate(pre_dims)],
        "end": [(glorot(ks[8 + i], d), jnp.zeros((d[1],), jnp.float32))
                for i, d in enumerate(end_dims)],
    }

    out = cfdagcn_forward(params, batch_x, sdf, a1n, a2n,
                          coarse_pos, coarse_y, fine_batch, coarse_batch)
    out = jax.block_until_ready(out)

    ref = cfdagcn_reference(params, jnp.concatenate([batch_x, sdf], axis=1),
                            a1n, a2n, coarse_pos, coarse_y,
                            batch_x[:, :2], fine_batch, coarse_batch)

    assert out.shape == (N, out_channels)
    assert bool(jnp.all(jnp.isfinite(out)))
    assert bool(jnp.allclose(out, ref, rtol=5e-2, atol=5e-2)), \
        float(jnp.max(jnp.abs(out - ref)))
    print("KERNEL_OK")
</pallas_src>

<mosaic_0001>
module attributes {stable_mosaic.version = 11 : i64} {
  func.func @_fused_forward_kernel(%arg0: i32, %arg1: memref<256x128xbf16, #tpu.memory_space<vmem>>, %arg2: memref<128x2xf32, #tpu.memory_space<vmem>>, %arg3: memref<2x16xf32, #tpu.memory_space<vmem>>, %arg4: memref<16x3xf32, #tpu.memory_space<vmem>>, %arg5: memref<128x1xi32, #tpu.memory_space<vmem>>, %arg6: memref<1x16xi32, #tpu.memory_space<vmem>>, %arg7: memref<128x6xf32, #tpu.memory_space<vmem>>, %arg8: memref<6x32xf32, #tpu.memory_space<vmem>>, %arg9: memref<1x32xf32, #tpu.memory_space<vmem>>, %arg10: memref<32x32xf32, #tpu.memory_space<vmem>>, %arg11: memref<32x32xf32, #tpu.memory_space<vmem>>, %arg12: memref<1x32xf32, #tpu.memory_space<vmem>>, %arg13: memref<32x32xf32, #tpu.memory_space<vmem>>, %arg14: memref<32x32xf32, #tpu.memory_space<vmem>>, %arg15: memref<1x32xf32, #tpu.memory_space<vmem>>, %arg16: memref<3x32xf32, #tpu.memory_space<vmem>>, %arg17: memref<32x32xf32, #tpu.memory_space<vmem>>, %arg18: memref<32x32xf32, #tpu.memory_space<vmem>>, %arg19: memref<1x32xf32, #tpu.memory_space<vmem>>, %arg20: memref<32x32xf32, #tpu.memory_space<vmem>>, %arg21: memref<32x32xf32, #tpu.memory_space<vmem>>, %arg22: memref<1x32xf32, #tpu.memory_space<vmem>>, %arg23: memref<32x3xf32, #tpu.memory_space<vmem>>, %arg24: memref<32x3xf32, #tpu.memory_space<vmem>>, %arg25: memref<1x3xf32, #tpu.memory_space<vmem>>, %arg26: memref<128x3xf32, #tpu.memory_space<vmem>>) attributes {dimension_semantics = [#tpu.dimension_semantics<arbitrary>], iteration_bounds = array<i64: 1>, scalar_prefetch = 0 : i64, scratch_operands = 0 : i64, tpu.core_type = #tpu.core_type<tc>, window_params = [{pipeline_mode = #tpu.pipeline_mode<synchronous>, transform_indices = @transform_0, window_bounds = array<i64: 256, 128>}, {pipeline_mode = #tpu.pipeline_mode<synchronous>, transform_indices = @transform_1, window_bounds = array<i64: 128, 2>}, {pipeline_mode = #tpu.pipeline_mode<synchronous>, transform_indices = @transform_2, window_bounds = array<i64: 2, 16>}, {pipeline_mode = #tpu.pipeline_mode<synchronous>, transform_indices = @transform_3, window_bounds = array<i64: 16, 3>}, {pipeline_mode = #tpu.pipeline_mode<synchronous>, transform_indices = @transform_4, window_bounds = array<i64: 128, 1>}, {pipeline_mode = #tpu.pipeline_mode<synchronous>, transform_indices = @transform_5, window_bounds = array<i64: 1, 16>}, {pipeline_mode = #tpu.pipeline_mode<synchronous>, transform_indices = @transform_6, window_bounds = array<i64: 128, 6>}, {pipeline_mode = #tpu.pipeline_mode<synchronous>, transform_indices = @transform_7, window_bounds = array<i64: 6, 32>}, {pipeline_mode = #tpu.pipeline_mode<synchronous>, transform_indices = @transform_8, window_bounds = array<i64: 1, 32>}, {pipeline_mode = #tpu.pipeline_mode<synchronous>, transform_indices = @transform_9, window_bounds = array<i64: 32, 32>}, {pipeline_mode = #tpu.pipeline_mode<synchronous>, transform_indices = @transform_10, window_bounds = array<i64: 32, 32>}, {pipeline_mode = #tpu.pipeline_mode<synchronous>, transform_indices = @transform_11, window_bounds = array<i64: 1, 32>}, {pipeline_mode = #tpu.pipeline_mode<synchronous>, transform_indices = @transform_12, window_bounds = array<i64: 32, 32>}, {pipeline_mode = #tpu.pipeline_mode<synchronous>, transform_indices = @transform_13, window_bounds = array<i64: 32, 32>}, {pipeline_mode = #tpu.pipeline_mode<synchronous>, transform_indices = @transform_14, window_bounds = array<i64: 1, 32>}, {pipeline_mode = #tpu.pipeline_mode<synchronous>, transform_indices = @transform_15, window_bounds = array<i64: 3, 32>}, {pipeline_mode = #tpu.pipeline_mode<synchronous>, transform_indices = @transform_16, window_bounds = array<i64: 32, 32>}, {pipeline_mode = #tpu.pipeline_mode<synchronous>, transform_indices = @transform_17, window_bounds = array<i64: 32, 32>}, {pipeline_mode = #tpu.pipeline_mode<synchronous>, transform_indices = @transform_18, window_bounds = array<i64: 1, 32>}, {pipeline_mode = #tpu.pipeline_mode<synchronous>, transform_indices = @transform_19, window_bounds = array<i64: 32, 32>}, {pipeline_mode = #tpu.pipeline_mode<synchronous>, transform_indices = @transform_20, window_bounds = array<i64: 32, 32>}, {pipeline_mode = #tpu.pipeline_mode<synchronous>, transform_indices = @transform_21, window_bounds = array<i64: 1, 32>}, {pipeline_mode = #tpu.pipeline_mode<synchronous>, transform_indices = @transform_22, window_bounds = array<i64: 32, 3>}, {pipeline_mode = #tpu.pipeline_mode<synchronous>, transform_indices = @transform_23, window_bounds = array<i64: 32, 3>}, {pipeline_mode = #tpu.pipeline_mode<synchronous>, transform_indices = @transform_24, window_bounds = array<i64: 1, 3>}, {pipeline_mode = #tpu.pipeline_mode<synchronous>, transform_indices = @transform_25, window_bounds = array<i64: 128, 3>}]} {
    %c0 = arith.constant 0 : index
    %c0_0 = arith.constant 0 : index
    %0 = vector.load %arg7[%c0, %c0_0] : memref<128x6xf32, #tpu.memory_space<vmem>>, vector<128x6xf32>
    %c0_1 = arith.constant 0 : index
    %c0_2 = arith.constant 0 : index
    %1 = vector.load %arg8[%c0_1, %c0_2] : memref<6x32xf32, #tpu.memory_space<vmem>>, vector<6x32xf32>
    %cst = arith.constant dense<0.000000e+00> : vector<128x32xf32>
    %2 = tpu.matmul %0, %1, %cst {dimension_numbers = #tpu.dot_dimension_numbers<[1], [0], [0], [1], [0, 0, 1, 1], [], []>} : vector<128x6xf32>, vector<6x32xf32>, vector<128x32xf32> -> vector<128x32xf32>
    %3 = arith.truncf %2 : vector<128x32xf32> to vector<128x32xbf16>
    %c0_3 = arith.constant 0 : index
    %c0_4 = arith.constant 0 : index
    %4 = vector.load %arg1[%c0_3, %c0_4] : memref<256x128xbf16, #tpu.memory_space<vmem>>, vector<256x128xbf16>
    %cst_5 = arith.constant dense<0.000000e+00> : vector<256x32xf32>
    %5 = tpu.matmul %4, %3, %cst_5 {dimension_numbers = #tpu.dot_dimension_numbers<[1], [0], [0], [1], [0, 0, 1, 1], [], []>} : vector<256x128xbf16>, vector<128x32xbf16>, vector<256x32xf32> -> vector<256x32xf32>
    %c0_6 = arith.constant 0 : index
    %c0_7 = arith.constant 0 : index
    %6 = vector.load %arg9[%c0_6, %c0_7] : memref<1x32xf32, #tpu.memory_space<vmem>>, vector<1x32xf32>
    %7 = vector.broadcast %6 : vector<1x32xf32> to vector<256x32xf32>
    %8 = arith.addf %5, %7 : vector<256x32xf32>
    %cst_8 = arith.constant 0.000000e+00 : f32
    %9 = vector.broadcast %cst_8 : f32 to vector<256x32xf32>
    %10 = arith.maximumf %8, %9 : vector<256x32xf32>
    %11 = vector.extract_strided_slice %10 {offsets = [0, 0], sizes = [128, 32], strides = [1, 1]} : vector<256x32xf32> to vector<128x32xf32>
    %12 = vector.extract_strided_slice %10 {offsets = [128, 0], sizes = [128, 32], strides = [1, 1]} : vector<256x32xf32> to vector<128x32xf32>
    %c0_9 = arith.constant 0 : index
    %c0_10 = arith.constant 0 : index
    %13 = vector.load %arg10[%c0_9, %c0_10] : memref<32x32xf32, #tpu.memory_space<vmem>>, vector<32x32xf32>
    %cst_11 = arith.constant dense<0.000000e+00> : vector<128x32xf32>
    %14 = tpu.matmul %11, %13, %cst_11 {dimension_numbers = #tpu.dot_dimension_numbers<[1], [0], [0], [1], [0, 0, 1, 1], [], []>} : vector<128x32xf32>, vector<32x32xf32>, vector<128x32xf32> -> vector<128x32xf32>
    %c0_12 = arith.constant 0 : index
    %c0_13 = arith.constant 0 : index
    %15 = vector.load %arg11[%c0_12, %c0_13] : memref<32x32xf32, #tpu.memory_space<vmem>>, vector<32x32xf32>
    %cst_14 = arith.constant dense<0.000000e+00> : vector<128x32xf32>
    %16 = tpu.matmul %12, %15, %cst_14 {dimension_numbers = #tpu.dot_dimension_numbers<[1], [0], [0], [1], [0, 0, 1, 1], [], []>} : vector<128x32xf32>, vector<32x32xf32>, vector<128x32xf32> -> vector<128x32xf32>
    %17 = arith.addf %14, %16 : vector<128x32xf32>
    %18 = arith.truncf %17 : vector<128x32xf32> to vector<128x32xbf16>
    %c0_15 = arith.constant 0 : index
    %c0_16 = arith.constant 0 : index
    %19 = vector.load %arg1[%c0_15, %c0_16] : memref<256x128xbf16, #tpu.memory_space<vmem>>, vector<256x128xbf16>
    %cst_17 = arith.constant dense<0.000000e+00> : vector<256x32xf32>
    %20 = tpu.matmul %19, %18, %cst_17 {dimension_numbers = #tpu.dot_dimension_numbers<[1], [0], [0], [1], [0, 0, 1, 1], [], []>} : vector<256x128xbf16>, vector<128x32xbf16>, vector<256x32xf32> -> vector<256x32xf32>
    %c0_18 = arith.constant 0 : index
    %c0_19 = arith.constant 0 : index
    %21 = vector.load %arg12[%c0_18, %c0_19] : memref<1x32xf32, #tpu.memory_space<vmem>>, vector<1x32xf32>
    %22 = vector.broadcast %21 : vector<1x32xf32> to vector<256x32xf32>
    %23 = arith.addf %20, %22 : vector<256x32xf32>
    %cst_20 = arith.constant 0.000000e+00 : f32
    %24 = vector.broadcast %cst_20 : f32 to vector<256x32xf32>
    %25 = arith.maximumf %23, %24 : vector<256x32xf32>
    %26 = vector.extract_strided_slice %25 {offsets = [0, 0], sizes = [128, 32], strides = [1, 1]} : vector<256x32xf32> to vector<128x32xf32>
    %27 = vector.extract_strided_slice %25 {offsets = [128, 0], sizes = [128, 32], strides = [1, 1]} : vector<256x32xf32> to vector<128x32xf32>
    %c0_21 = arith.constant 0 : index
    %c0_22 = arith.constant 0 : index
    %28 = vector.load %arg13[%c0_21, %c0_22] : memref<32x32xf32, #tpu.memory_space<vmem>>, vector<32x32xf32>
    %cst_23 = arith.constant dense<0.000000e+00> : vector<128x32xf32>
    %29 = tpu.matmul %26, %28, %cst_23 {dimension_numbers = #tpu.dot_dimension_numbers<[1], [0], [0], [1], [0, 0, 1, 1], [], []>} : vector<128x32xf32>, vector<32x32xf32>, vector<128x32xf32> -> vector<128x32xf32>
    %c0_24 = arith.constant 0 : index
    %c0_25 = arith.constant 0 : index
    %30 = vector.load %arg14[%c0_24, %c0_25] : memref<32x32xf32, #tpu.memory_space<vmem>>, vector<32x32xf32>
    %cst_26 = arith.constant dense<0.000000e+00> : vector<128x32xf32>
    %31 = tpu.matmul %27, %30, %cst_26 {dimension_numbers = #tpu.dot_dimension_numbers<[1], [0], [0], [1], [0, 0, 1, 1], [], []>} : vector<128x32xf32>, vector<32x32xf32>, vector<128x32xf32> -> vector<128x32xf32>
    %32 = arith.addf %29, %31 : vector<128x32xf32>
    %33 = arith.truncf %32 : vector<128x32xf32> to vector<128x32xbf16>
    %c0_27 = arith.constant 0 : index
    %c0_28 = arith.constant 0 : index
    %34 = vector.load %arg1[%c0_27, %c0_28] : memref<256x128xbf16, #tpu.memory_space<vmem>>, vector<256x128xbf16>
    %cst_29 = arith.constant dense<0.000000e+00> : vector<256x32xf32>
    %35 = tpu.matmul %34, %33, %cst_29 {dimension_numbers = #tpu.dot_dimension_numbers<[1], [0], [0], [1], [0, 0, 1, 1], [], []>} : vector<256x128xbf16>, vector<128x32xbf16>, vector<256x32xf32> -> vector<256x32xf32>
    %c0_30 = arith.constant 0 : index
    %c0_31 = arith.constant 0 : index
    %36 = vector.load %arg15[%c0_30, %c0_31] : memref<1x32xf32, #tpu.memory_space<vmem>>, vector<1x32xf32>
    %37 = vector.broadcast %36 : vector<1x32xf32> to vector<256x32xf32>
    %38 = arith.addf %35, %37 : vector<256x32xf32>
    %cst_32 = arith.constant 0.000000e+00 : f32
    %39 = vector.broadcast %cst_32 : f32 to vector<256x32xf32>
    %40 = arith.maximumf %38, %39 : vector<256x32xf32>
    %41 = vector.extract_strided_slice %40 {offsets = [0, 0], sizes = [128, 32], strides = [1, 1]} : vector<256x32xf32> to vector<128x32xf32>
    %42 = vector.extract_strided_slice %40 {offsets = [128, 0], sizes = [128, 32], strides = [1, 1]} : vector<256x32xf32> to vector<128x32xf32>
    %c0_33 = arith.constant 0 : index
    %c0_34 = arith.constant 0 : index
    %43 = vector.load %arg2[%c0_33, %c0_34] : memref<128x2xf32, #tpu.memory_space<vmem>>, vector<128x2xf32>
    %44 = vector.extract_strided_slice %43 {offsets = [0, 0], sizes = [128, 1], strides = [1, 1]} : vector<128x2xf32> to vector<128x1xf32>
    %45 = vector.extract_strided_slice %43 {offsets = [0, 1], sizes = [128, 1], strides = [1, 1]} : vector<128x2xf32> to vector<128x1xf32>
    %c0_35 = arith.constant 0 : index
    %c0_36 = arith.constant 0 : index
    %46 = vector.load %arg3[%c0_35, %c0_36] : memref<2x16xf32, #tpu.memory_space<vmem>>, vector<2x16xf32>
    %47 = vector.extract_strided_slice %46 {offsets = [0, 0], sizes = [1, 16], strides = [1, 1]} : vector<2x16xf32> to vector<1x16xf32>
    %48 = vector.extract_strided_slice %46 {offsets = [1, 0], sizes = [1, 16], strides = [1, 1]} : vector<2x16xf32> to vector<1x16xf32>
    %49 = vector.broadcast %44 : vector<128x1xf32> to vector<128x16xf32>
    %50 = vector.broadcast %47 : vector<1x16xf32> to vector<128x16xf32>
    %51 = arith.subf %49, %50 : vector<128x16xf32>
    %52 = arith.mulf %51, %51 : vector<128x16xf32>
    %53 = vector.broadcast %45 : vector<128x1xf32> to vector<128x16xf32>
    %54 = vector.broadcast %48 : vector<1x16xf32> to vector<128x16xf32>
    %55 = arith.subf %53, %54 : vector<128x16xf32>
    %56 = arith.mulf %55, %55 : vector<128x16xf32>
    %57 = arith.addf %52, %56 : vector<128x16xf32>
    %c0_37 = arith.constant 0 : index
    %c0_38 = arith.constant 0 : index
    %58 = vector.load %arg5[%c0_37, %c0_38] : memref<128x1xi32, #tpu.memory_space<vmem>>, vector<128x1xi32>
    %c0_39 = arith.constant 0 : index
    %c0_40 = arith.constant 0 : index
    %59 = vector.load %arg6[%c0_39, %c0_40] : memref<1x16xi32, #tpu.memory_space<vmem>>, vector<1x16xi32>
    %60 = vector.broadcast %58 : vector<128x1xi32> to vector<128x16xi32>
    %61 = vector.broadcast %59 : vector<1x16xi32> to vector<128x16xi32>
    %62 = arith.cmpi eq, %60, %61 : vector<128x16xi32>
    %cst_41 = arith.constant 1.000000e+30 : f32
    %63 = vector.broadcast %cst_41 : f32 to vector<128x16xf32>
    %64 = arith.select %62, %57, %63 : vector<128x16xi1>, vector<128x16xf32>
    %65 = tpu.iota {dimensions = array<i32: 1>} : vector<128x16xi32>
    %cst_42 = arith.constant 0.000000e+00 : f32
    %66 = vector.broadcast %cst_42 : f32 to vector<128x16xf32>
    %cst_43 = arith.constant 0.000000e+00 : f32
    %67 = vector.broadcast %cst_43 : f32 to vector<128x1xf32>
    %cst_44 = arith.constant dense<0x7F800000> : vector<128xf32>
    %68 = vector.multi_reduction <minimumf>, %64, %cst_44 [1] : vector<128x16xf32> to vector<128xf32>
    %69 = vector.shape_cast %68 : vector<128xf32> to vector<128x1xf32>
    %70 = vector.broadcast %69 : vector<128x1xf32> to vector<128x16xf32>
    %71 = arith.cmpf oeq, %64, %70 : vector<128x16xf32>
    %c16_i32 = arith.constant 16 : i32
    %72 = vector.broadcast %c16_i32 : i32 to vector<128x16xi32>
    %73 = arith.select %71, %65, %72 : vector<128x16xi1>, vector<128x16xi32>
    %cst_45 = arith.constant dense<2147483647> : vector<128xi32>
    %74 = vector.multi_reduction <minsi>, %73, %cst_45 [1] : vector<128x16xi32> to vector<128xi32>
    %75 = vector.shape_cast %74 : vector<128xi32> to vector<128x1xi32>
    %76 = vector.broadcast %75 : vector<128x1xi32> to vector<128x16xi32>
    %77 = arith.cmpi eq, %65, %76 : vector<128x16xi32>
    %cst_46 = arith.constant 1.000000e-16 : f32
    %78 = vector.broadcast %cst_46 : f32 to vector<128x1xf32>
    %79 = arith.maximumf %69, %78 : vector<128x1xf32>
    %cst_47 = arith.constant 1.000000e+00 : f32
    %80 = vector.broadcast %cst_47 : f32 to vector<128x1xf32>
    %81 = arith.divf %80, %79 : vector<128x1xf32>
    %cst_48 = arith.constant 0.000000e+00 : f32
    %82 = vector.shape_cast %81 : vector<128x1xf32> to vector<128x1xf32>
    %83 = vector.broadcast %82 : vector<128x1xf32> to vector<128x16xf32>
    %84 = vector.broadcast %cst_48 : f32 to vector<128x16xf32>
    %85 = arith.select %77, %83, %84 : vector<128x16xi1>, vector<128x16xf32>
    %86 = arith.addf %66, %85 : vector<128x16xf32>
    %87 = arith.addf %67, %81 : vector<128x1xf32>
    %cst_49 = arith.constant 1.000000e+30 : f32
    %88 = vector.broadcast %cst_49 : f32 to vector<128x16xf32>
    %89 = arith.select %77, %88, %64 : vector<128x16xi1>, vector<128x16xf32>
    %cst_50 = arith.constant dense<0x7F800000> : vector<128xf32>
    %90 = vector.multi_reduction <minimumf>, %89, %cst_50 [1] : vector<128x16xf32> to vector<128xf32>
    %91 = vector.shape_cast %90 : vector<128xf32> to vector<128x1xf32>
    %92 = vector.broadcast %91 : vector<128x1xf32> to vector<128x16xf32>
    %93 = arith.cmpf oeq, %89, %92 : vector<128x16xf32>
    %c16_i32_51 = arith.constant 16 : i32
    %94 = vector.broadcast %c16_i32_51 : i32 to vector<128x16xi32>
    %95 = arith.select %93, %65, %94 : vector<128x16xi1>, vector<128x16xi32>
    %cst_52 = arith.constant dense<2147483647> : vector<128xi32>
    %96 = vector.multi_reduction <minsi>, %95, %cst_52 [1] : vector<128x16xi32> to vector<128xi32>
    %97 = vector.shape_cast %96 : vector<128xi32> to vector<128x1xi32>
    %98 = vector.broadcast %97 : vector<128x1xi32> to vector<128x16xi32>
    %99 = arith.cmpi eq, %65, %98 : vector<128x16xi32>
    %cst_53 = arith.constant 1.000000e-16 : f32
    %100 = vector.broadcast %cst_53 : f32 to vector<128x1xf32>
    %101 = arith.maximumf %91, %100 : vector<128x1xf32>
    %cst_54 = arith.constant 1.000000e+00 : f32
    %102 = vector.broadcast %cst_54 : f32 to vector<128x1xf32>
    %103 = arith.divf %102, %101 : vector<128x1xf32>
    %cst_55 = arith.constant 0.000000e+00 : f32
    %104 = vector.shape_cast %103 : vector<128x1xf32> to vector<128x1xf32>
    %105 = vector.broadcast %104 : vector<128x1xf32> to vector<128x16xf32>
    %106 = vector.broadcast %cst_55 : f32 to vector<128x16xf32>
    %107 = arith.select %99, %105, %106 : vector<128x16xi1>, vector<128x16xf32>
    %108 = arith.addf %86, %107 : vector<128x16xf32>
    %109 = arith.addf %87, %103 : vector<128x1xf32>
    %cst_56 = arith.constant 1.000000e+30 : f32
    %110 = vector.broadcast %cst_56 : f32 to vector<128x16xf32>
    %111 = arith.select %99, %110, %89 : vector<128x16xi1>, vector<128x16xf32>
    %cst_57 = arith.constant dense<0x7F800000> : vector<128xf32>
    %112 = vector.multi_reduction <minimumf>, %111, %cst_57 [1] : vector<128x16xf32> to vector<128xf32>
    %113 = vector.shape_cast %112 : vector<128xf32> to vector<128x1xf32>
    %114 = vector.broadcast %113 : vector<128x1xf32> to vector<128x16xf32>
    %115 = arith.cmpf oeq, %111, %114 : vector<128x16xf32>
    %c16_i32_58 = arith.constant 16 : i32
    %116 = vector.broadcast %c16_i32_58 : i32 to vector<128x16xi32>
    %117 = arith.select %115, %65, %116 : vector<128x16xi1>, vector<128x16xi32>
    %cst_59 = arith.constant dense<2147483647> : vector<128xi32>
    %118 = vector.multi_reduction <minsi>, %117, %cst_59 [1] : vector<128x16xi32> to vector<128xi32>
    %119 = vector.shape_cast %118 : vector<128xi32> to vector<128x1xi32>
    %120 = vector.broadcast %119 : vector<128x1xi32> to vector<128x16xi32>
    %121 = arith.cmpi eq, %65, %120 : vector<128x16xi32>
    %cst_60 = arith.constant 1.000000e-16 : f32
    %122 = vector.broadcast %cst_60 : f32 to vector<128x1xf32>
    %123 = arith.maximumf %113, %122 : vector<128x1xf32>
    %cst_61 = arith.constant 1.000000e+00 : f32
    %124 = vector.broadcast %cst_61 : f32 to vector<128x1xf32>
    %125 = arith.divf %124, %123 : vector<128x1xf32>
    %cst_62 = arith.constant 0.000000e+00 : f32
    %126 = vector.shape_cast %125 : vector<128x1xf32> to vector<128x1xf32>
    %127 = vector.broadcast %126 : vector<128x1xf32> to vector<128x16xf32>
    %128 = vector.broadcast %cst_62 : f32 to vector<128x16xf32>
    %129 = arith.select %121, %127, %128 : vector<128x16xi1>, vector<128x16xf32>
    %130 = arith.addf %108, %129 : vector<128x16xf32>
    %131 = arith.addf %109, %125 : vector<128x1xf32>
    %c0_63 = arith.constant 0 : index
    %c0_64 = arith.constant 0 : index
    %132 = vector.load %arg4[%c0_63, %c0_64] : memref<16x3xf32, #tpu.memory_space<vmem>>, vector<16x3xf32>
    %cst_65 = arith.constant dense<0.000000e+00> : vector<128x3xf32>
    %133 = tpu.matmul %130, %132, %cst_65 {dimension_numbers = #tpu.dot_dimension_numbers<[1], [0], [0], [1], [0, 0, 1, 1], [], []>} : vector<128x16xf32>, vector<16x3xf32>, vector<128x3xf32> -> vector<128x3xf32>
    %134 = vector.broadcast %131 : vector<128x1xf32> to vector<128x3xf32>
    %135 = arith.divf %133, %134 : vector<128x3xf32>
    %c0_66 = arith.constant 0 : index
    %c0_67 = arith.constant 0 : index
    %136 = vector.load %arg16[%c0_66, %c0_67] : memref<3x32xf32, #tpu.memory_space<vmem>>, vector<3x32xf32>
    %cst_68 = arith.constant dense<0.000000e+00> : vector<128x32xf32>
    %137 = tpu.matmul %135, %136, %cst_68 {dimension_numbers = #tpu.dot_dimension_numbers<[1], [0], [0], [1], [0, 0, 1, 1], [], []>} : vector<128x3xf32>, vector<3x32xf32>, vector<128x32xf32> -> vector<128x32xf32>
    %c0_69 = arith.constant 0 : index
    %c0_70 = arith.constant 0 : index
    %138 = vector.load %arg17[%c0_69, %c0_70] : memref<32x32xf32, #tpu.memory_space<vmem>>, vector<32x32xf32>
    %cst_71 = arith.constant dense<0.000000e+00> : vector<128x32xf32>
    %139 = tpu.matmul %41, %138, %cst_71 {dimension_numbers = #tpu.dot_dimension_numbers<[1], [0], [0], [1], [0, 0, 1, 1], [], []>} : vector<128x32xf32>, vector<32x32xf32>, vector<128x32xf32> -> vector<128x32xf32>
    %140 = arith.addf %137, %139 : vector<128x32xf32>
    %c0_72 = arith.constant 0 : index
    %c0_73 = arith.constant 0 : index
    %141 = vector.load %arg18[%c0_72, %c0_73] : memref<32x32xf32, #tpu.memory_space<vmem>>, vector<32x32xf32>
    %cst_74 = arith.constant dense<0.000000e+00> : vector<128x32xf32>
    %142 = tpu.matmul %42, %141, %cst_74 {dimension_numbers = #tpu.dot_dimension_numbers<[1], [0], [0], [1], [0, 0, 1, 1], [], []>} : vector<128x32xf32>, vector<32x32xf32>, vector<128x32xf32> -> vector<128x32xf32>
    %143 = arith.addf %140, %142 : vector<128x32xf32>
    %144 = arith.truncf %143 : vector<128x32xf32> to vector<128x32xbf16>
    %c0_75 = arith.constant 0 : index
    %c0_76 = arith.constant 0 : index
    %145 = vector.load %arg1[%c0_75, %c0_76] : memref<256x128xbf16, #tpu.memory_space<vmem>>, vector<256x128xbf16>
    %cst_77 = arith.constant dense<0.000000e+00> : vector<256x32xf32>
    %146 = tpu.matmul %145, %144, %cst_77 {dimension_numbers = #tpu.dot_dimension_numbers<[1], [0], [0], [1], [0, 0, 1, 1], [], []>} : vector<256x128xbf16>, vector<128x32xbf16>, vector<256x32xf32> -> vector<256x32xf32>
    %c0_78 = arith.constant 0 : index
    %c0_79 = arith.constant 0 : index
    %147 = vector.load %arg19[%c0_78, %c0_79] : memref<1x32xf32, #tpu.memory_space<vmem>>, vector<1x32xf32>
    %148 = vector.broadcast %147 : vector<1x32xf32> to vector<256x32xf32>
    %149 = arith.addf %146, %148 : vector<256x32xf32>
    %cst_80 = arith.constant 0.000000e+00 : f32
    %150 = vector.broadcast %cst_80 : f32 to vector<256x32xf32>
    %151 = arith.maximumf %149, %150 : vector<256x32xf32>
    %152 = vector.extract_strided_slice %151 {offsets = [0, 0], sizes = [128, 32], strides = [1, 1]} : vector<256x32xf32> to vector<128x32xf32>
    %153 = vector.extract_strided_slice %151 {offsets = [128, 0], sizes = [128, 32], strides = [1, 1]} : vector<256x32xf32> to vector<128x32xf32>
    %c0_81 = arith.constant 0 : index
    %c0_82 = arith.constant 0 : index
    %154 = vector.load %arg20[%c0_81, %c0_82] : memref<32x32xf32, #tpu.memory_space<vmem>>, vector<32x32xf32>
    %cst_83 = arith.constant dense<0.000000e+00> : vector<128x32xf32>
    %155 = tpu.matmul %152, %154, %cst_83 {dimension_numbers = #tpu.dot_dimension_numbers<[1], [0], [0], [1], [0, 0, 1, 1], [], []>} : vector<128x32xf32>, vector<32x32xf32>, vector<128x32xf32> -> vector<128x32xf32>
    %c0_84 = arith.constant 0 : index
    %c0_85 = arith.constant 0 : index
    %156 = vector.load %arg21[%c0_84, %c0_85] : memref<32x32xf32, #tpu.memory_space<vmem>>, vector<32x32xf32>
    %cst_86 = arith.constant dense<0.000000e+00> : vector<128x32xf32>
    %157 = tpu.matmul %153, %156, %cst_86 {dimension_numbers = #tpu.dot_dimension_numbers<[1], [0], [0], [1], [0, 0, 1, 1], [], []>} : vector<128x32xf32>, vector<32x32xf32>, vector<128x32xf32> -> vector<128x32xf32>
    %158 = arith.addf %155, %157 : vector<128x32xf32>
    %159 = arith.truncf %158 : vector<128x32xf32> to vector<128x32xbf16>
    %c0_87 = arith.constant 0 : index
    %c0_88 = arith.constant 0 : index
    %160 = vector.load %arg1[%c0_87, %c0_88] : memref<256x128xbf16, #tpu.memory_space<vmem>>, vector<256x128xbf16>
    %cst_89 = arith.constant dense<0.000000e+00> : vector<256x32xf32>
    %161 = tpu.matmul %160, %159, %cst_89 {dimension_numbers = #tpu.dot_dimension_numbers<[1], [0], [0], [1], [0, 0, 1, 1], [], []>} : vector<256x128xbf16>, vector<128x32xbf16>, vector<256x32xf32> -> vector<256x32xf32>
    %c0_90 = arith.constant 0 : index
    %c0_91 = arith.constant 0 : index
    %162 = vector.load %arg22[%c0_90, %c0_91] : memref<1x32xf32, #tpu.memory_space<vmem>>, vector<1x32xf32>
    %163 = vector.broadcast %162 : vector<1x32xf32> to vector<256x32xf32>
    %164 = arith.addf %161, %163 : vector<256x32xf32>
    %cst_92 = arith.constant 0.000000e+00 : f32
    %165 = vector.broadcast %cst_92 : f32 to vector<256x32xf32>
    %166 = arith.maximumf %164, %165 : vector<256x32xf32>
    %167 = vector.extract_strided_slice %166 {offsets = [0, 0], sizes = [128, 32], strides = [1, 1]} : vector<256x32xf32> to vector<128x32xf32>
    %168 = vector.extract_strided_slice %166 {offsets = [128, 0], sizes = [128, 32], strides = [1, 1]} : vector<256x32xf32> to vector<128x32xf32>
    %c0_93 = arith.constant 0 : index
    %c0_94 = arith.constant 0 : index
    %169 = vector.load %arg23[%c0_93, %c0_94] : memref<32x3xf32, #tpu.memory_space<vmem>>, vector<32x3xf32>
    %cst_95 = arith.constant dense<0.000000e+00> : vector<128x3xf32>
    %170 = tpu.matmul %167, %169, %cst_95 {dimension_numbers = #tpu.dot_dimension_numbers<[1], [0], [0], [1], [0, 0, 1, 1], [], []>} : vector<128x32xf32>, vector<32x3xf32>, vector<128x3xf32> -> vector<128x3xf32>
    %c0_96 = arith.constant 0 : index
    %c0_97 = arith.constant 0 : index
    %171 = vector.load %arg24[%c0_96, %c0_97] : memref<32x3xf32, #tpu.memory_space<vmem>>, vector<32x3xf32>
    %cst_98 = arith.constant dense<0.000000e+00> : vector<128x3xf32>
    %172 = tpu.matmul %168, %171, %cst_98 {dimension_numbers = #tpu.dot_dimension_numbers<[1], [0], [0], [1], [0, 0, 1, 1], [], []>} : vector<128x32xf32>, vector<32x3xf32>, vector<128x3xf32> -> vector<128x3xf32>
    %173 = arith.addf %170, %172 : vector<128x3xf32>
    %174 = arith.truncf %173 : vector<128x3xf32> to vector<128x3xbf16>
    %c0_99 = arith.constant 0 : index
    %c0_100 = arith.constant 0 : index
    %175 = vector.load %arg1[%c0_99, %c0_100] : memref<256x128xbf16, #tpu.memory_space<vmem>>, vector<128x128xbf16>
    %cst_101 = arith.constant dense<0.000000e+00> : vector<128x3xf32>
    %176 = tpu.matmul %175, %174, %cst_101 {dimension_numbers = #tpu.dot_dimension_numbers<[1], [0], [0], [1], [0, 0, 1, 1], [], []>} : vector<128x128xbf16>, vector<128x3xbf16>, vector<128x3xf32> -> vector<128x3xf32>
    %c0_102 = arith.constant 0 : index
    %c0_103 = arith.constant 0 : index
    %177 = vector.load %arg25[%c0_102, %c0_103] : memref<1x3xf32, #tpu.memory_space<vmem>>, vector<1x3xf32>
    %178 = vector.broadcast %177 : vector<1x3xf32> to vector<128x3xf32>
    %179 = arith.addf %176, %178 : vector<128x3xf32>
    %c0_104 = arith.constant 0 : index
    %c0_105 = arith.constant 0 : index
    %180 = vector.load %arg26[%c0_104, %c0_105] : memref<128x3xf32, #tpu.memory_space<vmem>>, vector<128x3xf32>
    tpu.vector_store %arg26[%c0_104, %c0_105], %179 {strides = array<i32>} : memref<128x3xf32, #tpu.memory_space<vmem>>, vector<128x3xf32>,
    return
  }
  func.func @transform_0(%arg0: i32) -> (i32, i32) {
    %c0_i32 = arith.constant 0 : i32
    %c0_i32_0 = arith.constant 0 : i32
    %c0_i32_1 = arith.constant 0 : i32
    return %c0_i32, %c0_i32_0 : i32, i32
  }
  func.func @transform_1(%arg0: i32) -> (i32, i32) {
    %c0_i32 = arith.constant 0 : i32
    %c0_i32_0 = arith.constant 0 : i32
    %c0_i32_1 = arith.constant 0 : i32
    return %c0_i32, %c0_i32_0 : i32, i32
  }
  func.func @transform_2(%arg0: i32) -> (i32, i32) {
    %c0_i32 = arith.constant 0 : i32
    %c0_i32_0 = arith.constant 0 : i32
    %c0_i32_1 = arith.constant 0 : i32
    return %c0_i32, %c0_i32_0 : i32, i32
  }
  func.func @transform_3(%arg0: i32) -> (i32, i32) {
    %c0_i32 = arith.constant 0 : i32
    %c0_i32_0 = arith.constant 0 : i32
    %c0_i32_1 = arith.constant 0 : i32
    return %c0_i32, %c0_i32_0 : i32, i32
  }
  func.func @transform_4(%arg0: i32) -> (i32, i32) {
    %c0_i32 = arith.constant 0 : i32
    %c0_i32_0 = arith.constant 0 : i32
    %c0_i32_1 = arith.constant 0 : i32
    return %c0_i32, %c0_i32_0 : i32, i32
  }
  func.func @transform_5(%arg0: i32) -> (i32, i32) {
    %c0_i32 = arith.constant 0 : i32
    %c0_i32_0 = arith.constant 0 : i32
    %c0_i32_1 = arith.constant 0 : i32
    return %c0_i32, %c0_i32_0 : i32, i32
  }
  func.func @transform_6(%arg0: i32) -> (i32, i32) {
    %c0_i32 = arith.constant 0 : i32
    %c0_i32_0 = arith.constant 0 : i32
    %c0_i32_1 = arith.constant 0 : i32
    return %c0_i32, %c0_i32_0 : i32, i32
  }
  func.func @transform_7(%arg0: i32) -> (i32, i32) {
    %c0_i32 = arith.constant 0 : i32
    %c0_i32_0 = arith.constant 0 : i32
    %c0_i32_1 = arith.constant 0 : i32
    return %c0_i32, %c0_i32_0 : i32, i32
  }
  func.func @transform_8(%arg0: i32) -> (i32, i32) {
    %c0_i32 = arith.constant 0 : i32
    %c0_i32_0 = arith.constant 0 : i32
    %c0_i32_1 = arith.constant 0 : i32
    return %c0_i32, %c0_i32_0 : i32, i32
  }
  func.func @transform_9(%arg0: i32) -> (i32, i32) {
    %c0_i32 = arith.constant 0 : i32
    %c0_i32_0 = arith.constant 0 : i32
    %c0_i32_1 = arith.constant 0 : i32
    return %c0_i32, %c0_i32_0 : i32, i32
  }
  func.func @transform_10(%arg0: i32) -> (i32, i32) {
    %c0_i32 = arith.constant 0 : i32
    %c0_i32_0 = arith.constant 0 : i32
    %c0_i32_1 = arith.constant 0 : i32
    return %c0_i32, %c0_i32_0 : i32, i32
  }
  func.func @transform_11(%arg0: i32) -> (i32, i32) {
    %c0_i32 = arith.constant 0 : i32
    %c0_i32_0 = arith.constant 0 : i32
    %c0_i32_1 = arith.constant 0 : i32
    return %c0_i32, %c0_i32_0 : i32, i32
  }
  func.func @transform_12(%arg0: i32) -> (i32, i32) {
    %c0_i32 = arith.constant 0 : i32
    %c0_i32_0 = arith.constant 0 : i32
    %c0_i32_1 = arith.constant 0 : i32
    return %c0_i32, %c0_i32_0 : i32, i32
  }
  func.func @transform_13(%arg0: i32) -> (i32, i32) {
    %c0_i32 = arith.constant 0 : i32
    %c0_i32_0 = arith.constant 0 : i32
    %c0_i32_1 = arith.constant 0 : i32
    return %c0_i32, %c0_i32_0 : i32, i32
  }
  func.func @transform_14(%arg0: i32) -> (i32, i32) {
    %c0_i32 = arith.constant 0 : i32
    %c0_i32_0 = arith.constant 0 : i32
    %c0_i32_1 = arith.constant 0 : i32
    return %c0_i32, %c0_i32_0 : i32, i32
  }
  func.func @transform_15(%arg0: i32) -> (i32, i32) {
    %c0_i32 = arith.constant 0 : i32
    %c0_i32_0 = arith.constant 0 : i32
    %c0_i32_1 = arith.constant 0 : i32
    return %c0_i32, %c0_i32_0 : i32, i32
  }
  func.func @transform_16(%arg0: i32) -> (i32, i32) {
    %c0_i32 = arith.constant 0 : i32
    %c0_i32_0 = arith.constant 0 : i32
    %c0_i32_1 = arith.constant 0 : i32
    return %c0_i32, %c0_i32_0 : i32, i32
  }
  func.func @transform_17(%arg0: i32) -> (i32, i32) {
    %c0_i32 = arith.constant 0 : i32
    %c0_i32_0 = arith.constant 0 : i32
    %c0_i32_1 = arith.constant 0 : i32
    return %c0_i32, %c0_i32_0 : i32, i32
  }
  func.func @transform_18(%arg0: i32) -> (i32, i32) {
    %c0_i32 = arith.constant 0 : i32
    %c0_i32_0 = arith.constant 0 : i32
    %c0_i32_1 = arith.constant 0 : i32
    return %c0_i32, %c0_i32_0 : i32, i32
  }
  func.func @transform_19(%arg0: i32) -> (i32, i32) {
    %c0_i32 = arith.constant 0 : i32
    %c0_i32_0 = arith.constant 0 : i32
    %c0_i32_1 = arith.constant 0 : i32
    return %c0_i32, %c0_i32_0 : i32, i32
  }
  func.func @transform_20(%arg0: i32) -> (i32, i32) {
    %c0_i32 = arith.constant 0 : i32
    %c0_i32_0 = arith.constant 0 : i32
    %c0_i32_1 = arith.constant 0 : i32
    return %c0_i32, %c0_i32_0 : i32, i32
  }
  func.func @transform_21(%arg0: i32) -> (i32, i32) {
    %c0_i32 = arith.constant 0 : i32
    %c0_i32_0 = arith.constant 0 : i32
    %c0_i32_1 = arith.constant 0 : i32
    return %c0_i32, %c0_i32_0 : i32, i32
  }
  func.func @transform_22(%arg0: i32) -> (i32, i32) {
    %c0_i32 = arith.constant 0 : i32
    %c0_i32_0 = arith.constant 0 : i32
    %c0_i32_1 = arith.constant 0 : i32
    return %c0_i32, %c0_i32_0 : i32, i32
  }
  func.func @transform_23(%arg0: i32) -> (i32, i32) {
    %c0_i32 = arith.constant 0 : i32
    %c0_i32_0 = arith.constant 0 : i32
    %c0_i32_1 = arith.constant 0 : i32
    return %c0_i32, %c0_i32_0 : i32, i32
  }
  func.func @transform_24(%arg0: i32) -> (i32, i32) {
    %c0_i32 = arith.constant 0 : i32
    %c0_i32_0 = arith.constant 0 : i32
    %c0_i32_1 = arith.constant 0 : i32
    return %c0_i32, %c0_i32_0 : i32, i32
  }
  func.func @transform_25(%arg0: i32) -> (i32, i32) {
    %c0_i32 = arith.constant 0 : i32
    %c0_i32_0 = arith.constant 0 : i32
    %c0_i32_1 = arith.constant 0 : i32
    return %c0_i32, %c0_i32_0 : i32, i32
  }
}

</mosaic_0001>

<llo_original>
// kernel: tpu_custom_call.1
$region0: #{tpu_custom_call.1}
  #allocation0 [shape = 'u32[]', space=smem, size = 0x4, offset = 0x4, fixed_abs, tag = 'smem constant byte address 0x4 - core index']
  #allocation1 [shape = 'u32[144,128]{1,0:T(1,128)}', space=vmem, size = 0x12000, scoped, tag = 'internal scratch']
  %s0 = inlined_call_operand.vmem [shape: bf16[256,128], index: 0, kind: input, shape index: {}]
  %s1 = inlined_call_operand.vmem [shape: f32[128,2], index: 1, kind: input, shape index: {}]
  %s2 = inlined_call_operand.vmem [shape: f32[2,16], index: 2, kind: input, shape index: {}]
  %s3 = inlined_call_operand.vmem [shape: f32[16,3], index: 3, kind: input, shape index: {}]
  %s4 = inlined_call_operand.vmem [shape: s32[128,1], index: 4, kind: input, shape index: {}]
  %s5 = inlined_call_operand.vmem [shape: s32[1,16], index: 5, kind: input, shape index: {}]
  %s6 = inlined_call_operand.vmem [shape: f32[128,6], index: 6, kind: input, shape index: {}]
  %s7 = inlined_call_operand.vmem [shape: f32[6,32], index: 7, kind: input, shape index: {}]
  %s8 = inlined_call_operand.vmem [shape: f32[1,32], index: 8, kind: input, shape index: {}]
  %s9 = inlined_call_operand.vmem [shape: f32[32,32], index: 9, kind: input, shape index: {}]
  %s10 = inlined_call_operand.vmem [shape: f32[32,32], index: 10, kind: input, shape index: {}]
  %s11 = inlined_call_operand.vmem [shape: f32[1,32], index: 11, kind: input, shape index: {}]
  %s12 = inlined_call_operand.vmem [shape: f32[32,32], index: 12, kind: input, shape index: {}]
  %s13 = inlined_call_operand.vmem [shape: f32[32,32], index: 13, kind: input, shape index: {}]
  %s14 = inlined_call_operand.vmem [shape: f32[1,32], index: 14, kind: input, shape index: {}]
  %s15 = inlined_call_operand.vmem [shape: f32[3,32], index: 15, kind: input, shape index: {}]
  %s16 = inlined_call_operand.vmem [shape: f32[32,32], index: 16, kind: input, shape index: {}]
  %s17 = inlined_call_operand.vmem [shape: f32[32,32], index: 17, kind: input, shape index: {}]
  %s18 = inlined_call_operand.vmem [shape: f32[1,32], index: 18, kind: input, shape index: {}]
  %s19 = inlined_call_operand.vmem [shape: f32[32,32], index: 19, kind: input, shape index: {}]
  %s20 = inlined_call_operand.vmem [shape: f32[32,32], index: 20, kind: input, shape index: {}]
  %s21 = inlined_call_operand.vmem [shape: f32[1,32], index: 21, kind: input, shape index: {}]
  %s22 = inlined_call_operand.vmem [shape: f32[32,3], index: 22, kind: input, shape index: {}]
  %s23 = inlined_call_operand.vmem [shape: f32[32,3], index: 23, kind: input, shape index: {}]
  %s24 = inlined_call_operand.vmem [shape: f32[1,3], index: 24, kind: input, shape index: {}]
  %s25 = inlined_call_operand.vmem [shape: f32[128,3], index: 25, kind: output, shape index: {}]
  %s26 = sld [smem:[#allocation0]]
  $region110: #{tpu_custom_call.1} parent=0
    _
  %s28 = ssub.s32 1, %s26
  %s29 = scalar_select 0, %s28, %s26
  // Predicated region
  $region2: #{tpu_custom_call.1} parent=0 // pred_check
    _
  $region3: #{tpu_custom_call.1} parent=0 // pred_check_branch
    %31 = sbr.rel (0) target = $region5
  $region4: #{tpu_custom_call.1} parent=0 // pred_region
    _
  $region5: #{tpu_custom_call.1} parent=0 // pred_fallthru
    _
  // Predicated region
  $region6: #{tpu_custom_call.1} parent=0 // pred_check
    _
  $region7: #{tpu_custom_call.1} parent=0 // pred_check_branch
    %33 = sbr.rel (0) target = $region9
  $region8: #{tpu_custom_call.1} parent=0 // pred_region
    _
  $region9: #{tpu_custom_call.1} parent=0 // pred_fallthru
    _
  // Predicated region
  $region10: #{tpu_custom_call.1} parent=0 // pred_check
    _
  $region11: #{tpu_custom_call.1} parent=0 // pred_check_branch
    %35 = sbr.rel (0) target = $region13
  $region12: #{tpu_custom_call.1} parent=0 // pred_region
    _
  $region13: #{tpu_custom_call.1} parent=0 // pred_fallthru
    _
  // Predicated region
  $region14: #{tpu_custom_call.1} parent=0 // pred_check
    _
  $region15: #{tpu_custom_call.1} parent=0 // pred_check_branch
    %37 = sbr.rel (0) target = $region17
  $region16: #{tpu_custom_call.1} parent=0 // pred_region
    _
  $region17: #{tpu_custom_call.1} parent=0 // pred_fallthru
    _
  // Predicated region
  $region18: #{tpu_custom_call.1} parent=0 // pred_check
    _
  $region19: #{tpu_custom_call.1} parent=0 // pred_check_branch
    %39 = sbr.rel (0) target = $region21
  $region20: #{tpu_custom_call.1} parent=0 // pred_region
    _
  $region21: #{tpu_custom_call.1} parent=0 // pred_fallthru
    _
  // Predicated region
  $region22: #{tpu_custom_call.1} parent=0 // pred_check
    _
  $region23: #{tpu_custom_call.1} parent=0 // pred_check_branch
    %41 = sbr.rel (0) target = $region25
  $region24: #{tpu_custom_call.1} parent=0 // pred_region
    _
  $region25: #{tpu_custom_call.1} parent=0 // pred_fallthru
    _
  // Predicated region
  $region26: #{tpu_custom_call.1} parent=0 // pred_check
    _
  $region27: #{tpu_custom_call.1} parent=0 // pred_check_branch
    %43 = sbr.rel (0) target = $region29
  $region28: #{tpu_custom_call.1} parent=0 // pred_region
    _
  $region29: #{tpu_custom_call.1} parent=0 // pred_fallthru
    _
  // Predicated region
  $region30: #{tpu_custom_call.1} parent=0 // pred_check
    _
  $region31: #{tpu_custom_call.1} parent=0 // pred_check_branch
    %45 = sbr.rel (0) target = $region33
  $region32: #{tpu_custom_call.1} parent=0 // pred_region
    _
  $region33: #{tpu_custom_call.1} parent=0 // pred_fallthru
    _
  // Predicated region
  $region34: #{tpu_custom_call.1} parent=0 // pred_check
    _
  $region35: #{tpu_custom_call.1} parent=0 // pred_check_branch
    %47 = sbr.rel (0) target = $region37
  $region36: #{tpu_custom_call.1} parent=0 // pred_region
    _
  $region37: #{tpu_custom_call.1} parent=0 // pred_fallthru
    _
  // Predicated region
  $region38: #{tpu_custom_call.1} parent=0 // pred_check
    _
  $region39: #{tpu_custom_call.1} parent=0 // pred_check_branch
    %49 = sbr.rel (0) target = $region41
  $region40: #{tpu_custom_call.1} parent=0 // pred_region
    _
  $region41: #{tpu_custom_call.1} parent=0 // pred_fallthru
    _
  // Predicated region
  $region42: #{tpu_custom_call.1} parent=0 // pred_check
    _
  $region43: #{tpu_custom_call.1} parent=0 // pred_check_branch
    %51 = sbr.rel (0) target = $region45
  $region44: #{tpu_custom_call.1} parent=0 // pred_region
    _
  $region45: #{tpu_custom_call.1} parent=0 // pred_fallthru
    _
  // Predicated region
  $region46: #{tpu_custom_call.1} parent=0 // pred_check
    _
  $region47: #{tpu_custom_call.1} parent=0 // pred_check_branch
    %53 = sbr.rel (0) target = $region49
  $region48: #{tpu_custom_call.1} parent=0 // pred_region
    _
  $region49: #{tpu_custom_call.1} parent=0 // pred_fallthru
    _
  // Predicated region
  $region50: #{tpu_custom_call.1} parent=0 // pred_check
    _
  $region51: #{tpu_custom_call.1} parent=0 // pred_check_branch
    %55 = sbr.rel (0) target = $region53
  $region52: #{tpu_custom_call.1} parent=0 // pred_region
    _
  $region53: #{tpu_custom_call.1} parent=0 // pred_fallthru
    _
  // Predicated region
  $region54: #{tpu_custom_call.1} parent=0 // pred_check
    _
  $region55: #{tpu_custom_call.1} parent=0 // pred_check_branch
    %57 = sbr.rel (0) target = $region57
  $region56: #{tpu_custom_call.1} parent=0 // pred_region
    _
  $region57: #{tpu_custom_call.1} parent=0 // pred_fallthru
    _
  // Predicated region
  $region58: #{tpu_custom_call.1} parent=0 // pred_check
    _
  $region59: #{tpu_custom_call.1} parent=0 // pred_check_branch
    %59 = sbr.rel (0) target = $region61
  $region60: #{tpu_custom_call.1} parent=0 // pred_region
    _
  $region61: #{tpu_custom_call.1} parent=0 // pred_fallthru
    _
  // Predicated region
  $region62: #{tpu_custom_call.1} parent=0 // pred_check
    _
  $region63: #{tpu_custom_call.1} parent=0 // pred_check_branch
    %61 = sbr.rel (0) target = $region65
  $region64: #{tpu_custom_call.1} parent=0 // pred_region
    _
  $region65: #{tpu_custom_call.1} parent=0 // pred_fallthru
    _
  // Predicated region
  $region66: #{tpu_custom_call.1} parent=0 // pred_check
    _
  $region67: #{tpu_custom_call.1} parent=0 // pred_check_branch
    %63 = sbr.rel (0) target = $region69
  $region68: #{tpu_custom_call.1} parent=0 // pred_region
    _
  $region69: #{tpu_custom_call.1} parent=0 // pred_fallthru
    _
  // Predicated region
  $region70: #{tpu_custom_call.1} parent=0 // pred_check
    _
  $region71: #{tpu_custom_call.1} parent=0 // pred_check_branch
    %65 = sbr.rel (0) target = $region73
  $region72: #{tpu_custom_call.1} parent=0 // pred_region
    _
  $region73: #{tpu_custom_call.1} parent=0 // pred_fallthru
    _
  // Predicated region
  $region74: #{tpu_custom_call.1} parent=0 // pred_check
    _
  $region75: #{tpu_custom_call.1} parent=0 // pred_check_branch
    %67 = sbr.rel (0) target = $region77
  $region76: #{tpu_custom_call.1} parent=0 // pred_region
    _
  $region77: #{tpu_custom_call.1} parent=0 // pred_fallthru
    _
  // Predicated region
  $region78: #{tpu_custom_call.1} parent=0 // pred_check
    _
  $region79: #{tpu_custom_call.1} parent=0 // pred_check_branch
    %69 = sbr.rel (0) target = $region81
  $region80: #{tpu_custom_call.1} parent=0 // pred_region
    _
  $region81: #{tpu_custom_call.1} parent=0 // pred_fallthru
    _
  // Predicated region
  $region82: #{tpu_custom_call.1} parent=0 // pred_check
    _
  $region83: #{tpu_custom_call.1} parent=0 // pred_check_branch
    %71 = sbr.rel (0) target = $region85
  $region84: #{tpu_custom_call.1} parent=0 // pred_region
    _
  $region85: #{tpu_custom_call.1} parent=0 // pred_fallthru
    _
  // Predicated region
  $region86: #{tpu_custom_call.1} parent=0 // pred_check
    _
  $region87: #{tpu_custom_call.1} parent=0 // pred_check_branch
    %73 = sbr.rel (0) target = $region89
  $region88: #{tpu_custom_call.1} parent=0 // pred_region
    _
  $region89: #{tpu_custom_call.1} parent=0 // pred_fallthru
    _
  // Predicated region
  $region90: #{tpu_custom_call.1} parent=0 // pred_check
    _
  $region91: #{tpu_custom_call.1} parent=0 // pred_check_branch
    %75 = sbr.rel (0) target = $region93
  $region92: #{tpu_custom_call.1} parent=0 // pred_region
    _
  $region93: #{tpu_custom_call.1} parent=0 // pred_fallthru
    _
  // Predicated region
  $region94: #{tpu_custom_call.1} parent=0 // pred_check
    _
  $region95: #{tpu_custom_call.1} parent=0 // pred_check_branch
    %77 = sbr.rel (0) target = $region97
  $region96: #{tpu_custom_call.1} parent=0 // pred_region
    _
  $region97: #{tpu_custom_call.1} parent=0 // pred_fallthru
    _
  // Predicated region
  $region98: #{tpu_custom_call.1} parent=0 // pred_check
    _
  $region99: #{tpu_custom_call.1} parent=0 // pred_check_branch
    %79 = sbr.rel (0) target = $region101
  $region100: #{tpu_custom_call.1} parent=0 // pred_region
    _
  $region101: #{tpu_custom_call.1} parent=0 // pred_fallthru
    _
  %v81 = vld [vmem:[%s6] sm:$0xff]
  %v82 = vld [vmem:[%s6 + $0x8] sm:$0xff]
  %v83 = vld [vmem:[%s6 + $0x10] sm:$0xff]
  %v84 = vld [vmem:[%s6 + $0x18] sm:$0xff]
  %v85 = vld [vmem:[%s6 + $0x20] sm:$0xff]
  %v86 = vld [vmem:[%s6 + $0x28] sm:$0xff]
  %v87 = vld [vmem:[%s6 + $0x30] sm:$0xff]
  %v88 = vld [vmem:[%s6 + $0x38] sm:$0xff]
  %v89 = vld [vmem:[%s6 + $0x40] sm:$0xff]
  %v90 = vld [vmem:[%s6 + $0x48] sm:$0xff]
  %v91 = vld [vmem:[%s6 + $0x50] sm:$0xff]
  %v92 = vld [vmem:[%s6 + $0x58] sm:$0xff]
  %v93 = vld [vmem:[%s6 + $0x60] sm:$0xff]
  %v94 = vld [vmem:[%s6 + $0x68] sm:$0xff]
  %v95 = vld [vmem:[%s6 + $0x70] sm:$0xff]
  %v96 = vld [vmem:[%s6 + $0x78] sm:$0xff]
  %v97 = vld [vmem:[%s7] sm:$0x3f]
  %vm98 = vcmask 48128
  %v100 = vsel %vm98, %v81, 0
  %v103 = vsel %vm98, %v82, 0
  %v106 = vsel %vm98, %v83, 0
  %v109 = vsel %vm98, %v84, 0
  %v112 = vsel %vm98, %v85, 0
  %v115 = vsel %vm98, %v86, 0
  %v118 = vsel %vm98, %v87, 0
  %v121 = vsel %vm98, %v88, 0
  %v124 = vsel %vm98, %v89, 0
  %v127 = vsel %vm98, %v90, 0
  %v130 = vsel %vm98, %v91, 0
  %v133 = vsel %vm98, %v92, 0
  %v136 = vsel %vm98, %v93, 0
  %v139 = vsel %vm98, %v94, 0
  %v142 = vsel %vm98, %v95, 0
  %v145 = vsel %vm98, %v96, 0
  %vm147 = vcmask 1045504
  %v149 = vsel %vm147, %v97, 0
  %151 = vmatprep.subr.mxu0 0.0
  %152 = vmatpush1.msra.mxu0 %v149
  %153 = vmatprep.subr.mxu0 0.0
  %154 = vmatpush1.msra.mxu0 0.0
  %155 = vmatprep.subr.mxu0 0.0
  %156 = vmatpush1.msra.mxu0 0.0
  %157 = vmatprep.subr.mxu0 0.0
  %158 = vmatpush1.msra.mxu0 0.0
  %159 = vmatprep.subr.mxu0 0.0
  %160 = vmatpush1.msra.mxu0 0.0
  %161 = vmatprep.subr.mxu0 0.0
  %162 = vmatpush1.msra.mxu0 0.0
  %163 = vmatprep.subr.mxu0 0.0
  %164 = vmatpush1.msra.mxu0 0.0
  %165 = vmatprep.subr.mxu0 0.0
  %166 = vmatpush1.msra.mxu0 0.0
  %167 = vmatprep.subr.mxu0 0.0
  %168 = vmatpush1.msra.mxu0 0.0
  %169 = vmatprep.subr.mxu0 0.0
  %170 = vmatpush1.msra.mxu0 0.0
  %171 = vmatprep.subr.mxu0 0.0
  %172 = vmatpush1.msra.mxu0 0.0
  %173 = vmatprep.subr.mxu0 0.0
  %174 = vmatpush1.msra.mxu0 0.0
  %175 = vmatprep.subr.mxu0 0.0
  %176 = vmatpush1.msra.mxu0 0.0
  %177 = vmatprep.subr.mxu0 0.0
  %178 = vmatpush1.msra.mxu0 0.0
  %179 = vmatprep.subr.mxu0 0.0
  %180 = vmatpush1.msra.mxu0 0.0
  %181 = vmatprep.subr.mxu0 0.0
  %182 = vmatpush1.msra.mxu0 0.0
  %183 = vmatprep.subr.mxu0 0.0
  %184 = vmatpush1.msra.mxu0 0.0
  %185 = vmatprep.subr.mxu0 0.0
  %186 = vmatpush1.msra.mxu0 0.0
  %187 = vmatprep.subr.mxu0 0.0
  %188 = vmatpush1.msra.mxu0 0.0
  %189 = vmatprep.subr.mxu0 0.0
  %190 = vmatpush1.msra.mxu0 0.0
  %191 = vmatprep.subr.mxu0 0.0
  %192 = vmatpush1.msra.mxu0 0.0
  %193 = vmatprep.subr.mxu0 0.0
  %194 = vmatpush1.msra.mxu0 0.0
  %195 = vmatprep.subr.mxu0 0.0
  %196 = vmatpush1.msra.mxu0 0.0
  %197 = vmatprep.subr.mxu0 0.0
  %198 = vmatpush1.msra.mxu0 0.0
  %199 = vmatprep.subr.mxu0 0.0
  %200 = vmatpush1.msra.mxu0 0.0
  %201 = vmatprep.subr.mxu0 0.0
  %202 = vmatpush1.msra.mxu0 0.0
  %203 = vmatprep.subr.mxu0 0.0
  %204 = vmatpush1.msra.mxu0 0.0
  %205 = vmatprep.subr.mxu0 0.0
  %206 = vmatpush1.msra.mxu0 0.0
  %207 = vmatprep.subr.mxu0 0.0
  %208 = vmatpush1.msra.mxu0 0.0
  %209 = vmatprep.subr.mxu0 0.0
  %210 = vmatpush1.msra.mxu0 0.0
  %211 = vmatprep.subr.mxu0 0.0
  %212 = vmatpush1.msra.mxu0 0.0
  %213 = vmatprep.subr.mxu0 0.0
  %214 = vmatpush1.msra.mxu0 0.0
  %215 = vmatprep.mubr.f32.mxu0 0.0
  %216 = vmatmul.mubr.f32.gmra.mrb[0].mxu0 %v100
  %v217 = vpop.f32.mrb[0].mxu0
  %v218 = vadd.f32 0.0, %v217
  %v219 = vpop.f32.mrb[0].mxu0
  %220 = vmatprep.mubr.f32.mxu0 0.0
  %221 = vmatmul.mubr.f32.gmra.mrb[0].mxu0 %v103
  %v222 = vpop.f32.mrb[0].mxu0
  %v223 = vadd.f32 0.0, %v222
  %v224 = vpop.f32.mrb[0].mxu0
  %225 = vmatprep.mubr.f32.mxu0 0.0
  %226 = vmatmul.mubr.f32.gmra.mrb[0].mxu0 %v106
  %v227 = vpop.f32.mrb[0].mxu0
  %v228 = vadd.f32 0.0, %v227
  %v229 = vpop.f32.mrb[0].mxu0
  %230 = vmatprep.mubr.f32.mxu0 0.0
  %231 = vmatmul.mubr.f32.gmra.mrb[0].mxu0 %v109
  %v232 = vpop.f32.mrb[0].mxu0
  %v233 = vadd.f32 0.0, %v232
  %v234 = vpop.f32.mrb[0].mxu0
  %235 = vmatprep.mubr.f32.mxu0 0.0
  %236 = vmatmul.mubr.f32.gmra.mrb[0].mxu0 %v112
  %v237 = vpop.f32.mrb[0].mxu0
  %v238 = vadd.f32 0.0, %v237
  %v239 = vpop.f32.mrb[0].mxu0
  %240 = vmatprep.mubr.f32.mxu0 0.0
  %241 = vmatmul.mubr.f32.gmra.mrb[0].mxu0 %v115
  %v242 = vpop.f32.mrb[0].mxu0
  %v243 = vadd.f32 0.0, %v242
  %v244 = vpop.f32.mrb[0].mxu0
  %245 = vmatprep.mubr.f32.mxu0 0.0
  %246 = vmatmul.mubr.f32.gmra.mrb[0].mxu0 %v118
  %v247 = vpop.f32.mrb[0].mxu0
  %v248 = vadd.f32 0.0, %v247
  %v249 = vpop.f32.mrb[0].mxu0
  %250 = vmatprep.mubr.f32.mxu0 0.0
  %251 = vmatmul.mubr.f32.gmra.mrb[0].mxu0 %v121
  %v252 = vpop.f32.mrb[0].mxu0
  %v253 = vadd.f32 0.0, %v252
  %v254 = vpop.f32.mrb[0].mxu0
  %255 = vmatprep.mubr.f32.mxu0 0.0
  %256 = vmatmul.mubr.f32.gmra.mrb[0].mxu0 %v124
  %v257 = vpop.f32.mrb[0].mxu0
  %v258 = vadd.f32 0.0, %v257
  %v259 = vpop.f32.mrb[0].mxu0
  %260 = vmatprep.mubr.f32.mxu0 0.0
  %261 = vmatmul.mubr.f32.gmra.mrb[0].mxu0 %v127
  %v262 = vpop.f32.mrb[0].mxu0
  %v263 = vadd.f32 0.0, %v262
  %v264 = vpop.f32.mrb[0].mxu0
  %265 = vmatprep.mubr.f32.mxu0 0.0
  %266 = vmatmul.mubr.f32.gmra.mrb[0].mxu0 %v130
  %v267 = vpop.f32.mrb[0].mxu0
  %v268 = vadd.f32 0.0, %v267
  %v269 = vpop.f32.mrb[0].mxu0
  %270 = vmatprep.mubr.f32.mxu0 0.0
  %271 = vmatmul.mubr.f32.gmra.mrb[0].mxu0 %v133
  %v272 = vpop.f32.mrb[0].mxu0
  %v273 = vadd.f32 0.0, %v272
  %v274 = vpop.f32.mrb[0].mxu0
  %275 = vmatprep.mubr.f32.mxu0 0.0
  %276 = vmatmul.mubr.f32.gmra.mrb[0].mxu0 %v136
  %v277 = vpop.f32.mrb[0].mxu0
  %v278 = vadd.f32 0.0, %v277
  %v279 = vpop.f32.mrb[0].mxu0
  %280 = vmatprep.mubr.f32.mxu0 0.0
  %281 = vmatmul.mubr.f32.gmra.mrb[0].mxu0 %v139
  %v282 = vpop.f32.mrb[0].mxu0
  %v283 = vadd.f32 0.0, %v282
  %v284 = vpop.f32.mrb[0].mxu0
  %285 = vmatprep.mubr.f32.mxu0 0.0
  %286 = vmatmul.mubr.f32.gmra.mrb[0].mxu0 %v142
  %v287 = vpop.f32.mrb[0].mxu0
  %v288 = vadd.f32 0.0, %v287
  %v289 = vpop.f32.mrb[0].mxu0
  %290 = vmatprep.mubr.f32.mxu0 0.0
  %291 = vmatmul.mubr.f32.gmra.mrb[0].mxu0 %v145
  %v292 = vpop.f32.mrb[0].mxu0
  %v293 = vadd.f32 0.0, %v292
  %v294 = vpop.f32.mrb[0].mxu0
  %295 = vdwg.mxu0
  %v296 = vpack.c.bf16 %v223, %v218
  %v297 = vpack.c.bf16 %v233, %v228
  %v298 = vpack.c.bf16 %v243, %v238
  %v299 = vpack.c.bf16 %v253, %v248
  %v300 = vpack.c.bf16 %v263, %v258
  %v301 = vpack.c.bf16 %v273, %v268
  %v302 = vpack.c.bf16 %v283, %v278
  %v303 = vpack.c.bf16 %v293, %v288
  %v304 = vld [vmem:[%s0] sm:$0xf]
  %v305 = vld [vmem:[%s0 + $0x4] sm:$0xf]
  %v306 = vld [vmem:[%s0 + $0x8] sm:$0xf]
  %v307 = vld [vmem:[%s0 + $0xc] sm:$0xf]
  %v308 = vld [vmem:[%s0 + $0x10] sm:$0xf]
  %v309 = vld [vmem:[%s0 + $0x14] sm:$0xf]
  %v310 = vld [vmem:[%s0 + $0x18] sm:$0xf]
  %v311 = vld [vmem:[%s0 + $0x1c] sm:$0xf]
  %v312 = vld [vmem:[%s0 + $0x20] sm:$0xf]
  %v313 = vld [vmem:[%s0 + $0x24] sm:$0xf]
  %v314 = vld [vmem:[%s0 + $0x28] sm:$0xf]
  %v315 = vld [vmem:[%s0 + $0x2c] sm:$0xf]
  %v316 = vld [vmem:[%s0 + $0x30] sm:$0xf]
  %v317 = vld [vmem:[%s0 + $0x34] sm:$0xf]
  %v318 = vld [vmem:[%s0 + $0x38] sm:$0xf]
  %v319 = vld [vmem:[%s0 + $0x3c] sm:$0xf]
  %v320 = vld [vmem:[%s0 + $0x40] sm:$0xf]
  %v321 = vld [vmem:[%s0 + $0x44] sm:$0xf]
  %v322 = vld [vmem:[%s0 + $0x48] sm:$0xf]
  %v323 = vld [vmem:[%s0 + $0x4c] sm:$0xf]
  %v324 = vld [vmem:[%s0 + $0x50] sm:$0xf]
  %v325 = vld [vmem:[%s0 + $0x54] sm:$0xf]
  %v326 = vld [vmem:[%s0 + $0x58] sm:$0xf]
  %v327 = vld [vmem:[%s0 + $0x5c] sm:$0xf]
  %v328 = vld [vmem:[%s0 + $0x60] sm:$0xf]
  %v329 = vld [vmem:[%s0 + $0x64] sm:$0xf]
  %v330 = vld [vmem:[%s0 + $0x68] sm:$0xf]
  %v331 = vld [vmem:[%s0 + $0x6c] sm:$0xf]
  %v332 = vld [vmem:[%s0 + $0x70] sm:$0xf]
  %v333 = vld [vmem:[%s0 + $0x74] sm:$0xf]
  %v334 = vld [vmem:[%s0 + $0x78] sm:$0xf]
  %v335 = vld [vmem:[%s0 + $0x7c] sm:$0xf]
  %v336 = vld [vmem:[%s8] sm:$0x1]
  %v338 = vlaneseq
  %v339 = vshrl.u32 %v338, 7
  %v340 = vsub.s32 0, %v339
  %v341 = vrot.slane %v336, %v340
  %v375 = vunpack.c.l.b16 %v304
  %v376 = vunpack.c.l.b16 %v305
  %v377 = vunpack.c.l.b16 %v306
  %v378 = vunpack.c.l.b16 %v307
  %v379 = vunpack.c.l.b16 %v308
  %v380 = vunpack.c.l.b16 %v309
  %v381 = vunpack.c.l.b16 %v310
  %v382 = vunpack.c.l.b16 %v311
  %v383 = vunpack.c.l.b16 %v312
  %v384 = vunpack.c.l.b16 %v313
  %v385 = vunpack.c.l.b16 %v314
  %v386 = vunpack.c.l.b16 %v315
  %v387 = vunpack.c.l.b16 %v316
  %v388 = vunpack.c.l.b16 %v317
  %v389 = vunpack.c.l.b16 %v318
  %v390 = vunpack.c.l.b16 %v319
  %v391 = vunpack.c.l.b16 %v320
  %v392 = vunpack.c.l.b16 %v321
  %v393 = vunpack.c.l.b16 %v322
  %v394 = vunpack.c.l.b16 %v323
  %v395 = vunpack.c.l.b16 %v324
  %v396 = vunpack.c.l.b16 %v325
  %v397 = vunpack.c.l.b16 %v326
  %v398 = vunpack.c.l.b16 %v327
  %v399 = vunpack.c.l.b16 %v328
  %v400 = vunpack.c.l.b16 %v329
  %v401 = vunpack.c.l.b16 %v330
  %v402 = vunpack.c.l.b16 %v331
  %v403 = vunpack.c.l.b16 %v332
  %v404 = vunpack.c.l.b16 %v333
  %v405 = vunpack.c.l.b16 %v334
  %v406 = vunpack.c.l.b16 %v335
  %v407 = vpack.c.b16 %v376, %v375
  %v408 = vpack.c.b16 %v378, %v377
  %v409 = vpack.c.b16 %v380, %v379
  %v410 = vpack.c.b16 %v382, %v381
  %v411 = vpack.c.b16 %v384, %v383
  %v412 = vpack.c.b16 %v386, %v385
  %v413 = vpack.c.b16 %v388, %v387
  %v414 = vpack.c.b16 %v390, %v389
  %v415 = vpack.c.b16 %v392, %v391
  %v416 = vpack.c.b16 %v394, %v393
  %v417 = vpack.c.b16 %v396, %v395
  %v418 = vpack.c.b16 %v398, %v397
  %v419 = vpack.c.b16 %v400, %v399
  %v420 = vpack.c.b16 %v402, %v401
  %v421 = vpack.c.b16 %v404, %v403
  %v422 = vpack.c.b16 %v406, %v405
  %439 = vmatprep.subr.bf16.mxu0 0
  %440 = vmatpush1.bf16.msra.mxu0 %v296
  %441 = vmatprep.subr.bf16.mxu0 0
  %442 = vmatpush1.bf16.msra.mxu0 %v297
  %443 = vmatprep.subr.bf16.mxu0 0
  %444 = vmatpush1.bf16.msra.mxu0 %v298
  %445 = vmatprep.subr.bf16.mxu0 0
  %446 = vmatpush1.bf16.msra.mxu0 %v299
  %447 = vmatprep.subr.bf16.mxu0 0
  %448 = vmatpush1.bf16.msra.mxu0 %v300
  %449 = vmatprep.subr.bf16.mxu0 0
  %450 = vmatpush1.bf16.msra.mxu0 %v301
  %451 = vmatprep.subr.bf16.mxu0 0
  %452 = vmatpush1.bf16.msra.mxu0 %v302
  %453 = vmatprep.subr.bf16.mxu0 0
  %454 = vmatpush1.bf16.msra.mxu0 %v303
  %455 = vmatprep.subr.bf16.mxu0 0
  %456 = vmatpush1.bf16.msra.mxu0 0
  %457 = vmatprep.subr.bf16.mxu0 0
  %458 = vmatpush1.bf16.msra.mxu0 0
  %459 = vmatprep.subr.bf16.mxu0 0
  %460 = vmatpush1.bf16.msra.mxu0 0
  %461 = vmatprep.subr.bf16.mxu0 0
  %462 = vmatpush1.bf16.msra.mxu0 0
  %463 = vmatprep.subr.bf16.mxu0 0
  %464 = vmatpush1.bf16.msra.mxu0 0
  %465 = vmatprep.subr.bf16.mxu0 0
  %466 = vmatpush1.bf16.msra.mxu0 0
  %467 = vmatprep.subr.bf16.mxu0 0
  %468 = vmatpush1.bf16.msra.mxu0 0
  %469 = vmatprep.subr.bf16.mxu0 0
  %470 = vmatpush1.bf16.msra.mxu0 0
  %471 = vmatprep.mubr.bf16.mxu0 0
  %472 = vmatmul.mubr.bf16.gmra.mrb[0].mxu0 %v407
  %v473 = vpop.f32.mrb[0].mxu0
  %v474 = vadd.f32 %v341, %v473
  %v475 = vpop.f32.mrb[0].mxu0
  %v476 = vpop.f32.mrb[0].mxu0
  %v477 = vadd.f32 %v341, %v476
  %v478 = vpop.f32.mrb[0].mxu0
  %479 = vmatprep.mubr.bf16.mxu0 0
  %480 = vmatmul.mubr.bf16.gmra.mrb[0].mxu0 %v408
  %v481 = vpop.f32.mrb[0].mxu0
  %v482 = vadd.f32 %v341, %v481
  %v483 = vpop.f32.mrb[0].mxu0
  %v484 = vpop.f32.mrb[0].mxu0
  %v485 = vadd.f32 %v341, %v484
  %v486 = vpop.f32.mrb[0].mxu0
  %487 = vmatprep.mubr.bf16.mxu0 0
  %488 = vmatmul.mubr.bf16.gmra.mrb[0].mxu0 %v409
  %v489 = vpop.f32.mrb[0].mxu0
  %v490 = vadd.f32 %v341, %v489
  %v491 = vpop.f32.mrb[0].mxu0
  %v492 = vpop.f32.mrb[0].mxu0
  %v493 = vadd.f32 %v341, %v492
  %v494 = vpop.f32.mrb[0].mxu0
  %495 = vmatprep.mubr.bf16.mxu0 0
  %496 = vmatmul.mubr.bf16.gmra.mrb[0].mxu0 %v410
  %v497 = vpop.f32.mrb[0].mxu0
  %v498 = vadd.f32 %v341, %v497
  %v499 = vpop.f32.mrb[0].mxu0
  %v500 = vpop.f32.mrb[0].mxu0
  %v501 = vadd.f32 %v341, %v500
  %v502 = vpop.f32.mrb[0].mxu0
  %503 = vmatprep.mubr.bf16.mxu0 0
  %504 = vmatmul.mubr.bf16.gmra.mrb[0].mxu0 %v411
  %v505 = vpop.f32.mrb[0].mxu0
  %v506 = vadd.f32 %v341, %v505
  %v507 = vpop.f32.mrb[0].mxu0
  %v508 = vpop.f32.mrb[0].mxu0
  %v509 = vadd.f32 %v341, %v508
  %v510 = vpop.f32.mrb[0].mxu0
  %511 = vmatprep.mubr.bf16.mxu0 0
  %512 = vmatmul.mubr.bf16.gmra.mrb[0].mxu0 %v412
  %v513 = vpop.f32.mrb[0].mxu0
  %v514 = vadd.f32 %v341, %v513
  %v515 = vpop.f32.mrb[0].mxu0
  %v516 = vpop.f32.mrb[0].mxu0
  %v517 = vadd.f32 %v341, %v516
  %v518 = vpop.f32.mrb[0].mxu0
  %519 = vmatprep.mubr.bf16.mxu0 0
  %520 = vmatmul.mubr.bf16.gmra.mrb[0].mxu0 %v413
  %v521 = vpop.f32.mrb[0].mxu0
  %v522 = vadd.f32 %v341, %v521
  %v523 = vpop.f32.mrb[0].mxu0
  %v524 = vpop.f32.mrb[0].mxu0
  %v525 = vadd.f32 %v341, %v524
  %v526 = vpop.f32.mrb[0].mxu0
  %527 = vmatprep.mubr.bf16.mxu0 0
  %528 = vmatmul.mubr.bf16.gmra.mrb[0].mxu0 %v414
  %v529 = vpop.f32.mrb[0].mxu0
  %v530 = vadd.f32 %v341, %v529
  %v531 = vpop.f32.mrb[0].mxu0
  %v532 = vpop.f32.mrb[0].mxu0
  %v533 = vadd.f32 %v341, %v532
  %v534 = vpop.f32.mrb[0].mxu0
  %535 = vmatprep.mubr.bf16.mxu0 0
  %536 = vmatmul.mubr.bf16.gmra.mrb[0].mxu0 %v415
  %v537 = vpop.f32.mrb[0].mxu0
  %v538 = vadd.f32 %v341, %v537
  %v539 = vpop.f32.mrb[0].mxu0
  %v540 = vpop.f32.mrb[0].mxu0
  %v541 = vadd.f32 %v341, %v540
  %v542 = vpop.f32.mrb[0].mxu0
  %543 = vmatprep.mubr.bf16.mxu0 0
  %544 = vmatmul.mubr.bf16.gmra.mrb[0].mxu0 %v416
  %v545 = vpop.f32.mrb[0].mxu0
  %v546 = vadd.f32 %v341, %v545
  %v547 = vpop.f32.mrb[0].mxu0
  %v548 = vpop.f32.mrb[0].mxu0
  %v549 = vadd.f32 %v341, %v548
  %v550 = vpop.f32.mrb[0].mxu0
  %551 = vmatprep.mubr.bf16.mxu0 0
  %552 = vmatmul.mubr.bf16.gmra.mrb[0].mxu0 %v417
  %v553 = vpop.f32.mrb[0].mxu0
  %v554 = vadd.f32 %v341, %v553
  %v555 = vpop.f32.mrb[0].mxu0
  %v556 = vpop.f32.mrb[0].mxu0
  %v557 = vadd.f32 %v341, %v556
  %v558 = vpop.f32.mrb[0].mxu0
  %559 = vmatprep.mubr.bf16.mxu0 0
  %560 = vmatmul.mubr.bf16.gmra.mrb[0].mxu0 %v418
  %v561 = vpop.f32.mrb[0].mxu0
  %v562 = vadd.f32 %v341, %v561
  %v563 = vpop.f32.mrb[0].mxu0
  %v564 = vpop.f32.mrb[0].mxu0
  %v565 = vadd.f32 %v341, %v564
  %v566 = vpop.f32.mrb[0].mxu0
  %567 = vmatprep.mubr.bf16.mxu0 0
  %568 = vmatmul.mubr.bf16.gmra.mrb[0].mxu0 %v419
  %v569 = vpop.f32.mrb[0].mxu0
  %v570 = vadd.f32 %v341, %v569
  %v571 = vpop.f32.mrb[0].mxu0
  %v572 = vpop.f32.mrb[0].mxu0
  %v573 = vadd.f32 %v341, %v572
  %v574 = vpop.f32.mrb[0].mxu0
  %575 = vmatprep.mubr.bf16.mxu0 0
  %576 = vmatmul.mubr.bf16.gmra.mrb[0].mxu0 %v420
  %v577 = vpop.f32.mrb[0].mxu0
  %v578 = vadd.f32 %v341, %v577
  %v579 = vpop.f32.mrb[0].mxu0
  %v580 = vpop.f32.mrb[0].mxu0
  %v581 = vadd.f32 %v341, %v580
  %v582 = vpop.f32.mrb[0].mxu0
  %583 = vmatprep.mubr.bf16.mxu0 0
  %584 = vmatmul.mubr.bf16.gmra.mrb[0].mxu0 %v421
  %v585 = vpop.f32.mrb[0].mxu0
  %v586 = vadd.f32 %v341, %v585
  %v587 = vpop.f32.mrb[0].mxu0
  %v588 = vpop.f32.mrb[0].mxu0
  %v589 = vadd.f32 %v341, %v588
  %v590 = vpop.f32.mrb[0].mxu0
  %591 = vmatprep.mubr.bf16.mxu0 0
  %592 = vmatmul.mubr.bf16.gmra.mrb[0].mxu0 %v422
  %v593 = vpop.f32.mrb[0].mxu0
  %v594 = vadd.f32 %v341, %v593
  %v595 = vpop.f32.mrb[0].mxu0
  %v596 = vpop.f32.mrb[0].mxu0
  %v597 = vadd.f32 %v341, %v596
  %v598 = vpop.f32.mrb[0].mxu0
  %599 = vdwg.mxu0
  %v600 = vmax.f32 %v474, 0.0
  %v601 = vmax.f32 %v477, 0.0
  %v602 = vmax.f32 %v482, 0.0
  %v603 = vmax.f32 %v485, 0.0
  %v604 = vmax.f32 %v490, 0.0
  %v605 = vmax.f32 %v493, 0.0
  %v606 = vmax.f32 %v498, 0.0
  %v607 = vmax.f32 %v501, 0.0
  %v608 = vmax.f32 %v506, 0.0
  %v609 = vmax.f32 %v509, 0.0
  %v610 = vmax.f32 %v514, 0.0
  %v611 = vmax.f32 %v517, 0.0
  %v612 = vmax.f32 %v522, 0.0
  %v613 = vmax.f32 %v525, 0.0
  %v614 = vmax.f32 %v530, 0.0
  %v615 = vmax.f32 %v533, 0.0
  %v616 = vmax.f32 %v538, 0.0
  %v617 = vmax.f32 %v541, 0.0
  %v618 = vmax.f32 %v546, 0.0
  %v619 = vmax.f32 %v549, 0.0
  %v620 = vmax.f32 %v554, 0.0
  %v621 = vmax.f32 %v557, 0.0
  %v622 = vmax.f32 %v562, 0.0
  %v623 = vmax.f32 %v565, 0.0
  %v624 = vmax.f32 %v570, 0.0
  %v625 = vmax.f32 %v573, 0.0
  %v626 = vmax.f32 %v578, 0.0
  %v627 = vmax.f32 %v581, 0.0
  %v628 = vmax.f32 %v586, 0.0
  %v629 = vmax.f32 %v589, 0.0
  %v630 = vmax.f32 %v594, 0.0
  %v631 = vmax.f32 %v597, 0.0
  %v632 = vld [vmem:[%s9] sm:$0xff]
  %v633 = vld [vmem:[%s9 + $0x8] sm:$0xff]
  %v634 = vld [vmem:[%s9 + $0x10] sm:$0xff]
  %v635 = vld [vmem:[%s9 + $0x18] sm:$0xff]
  %v636 = vld [vmem:[%s10] sm:$0xff]
  %v637 = vld [vmem:[%s10 + $0x8] sm:$0xff]
  %v638 = vld [vmem:[%s10 + $0x10] sm:$0xff]
  %v639 = vld [vmem:[%s10 + $0x18] sm:$0xff]
  %vm640 = vcmask 261120
  %v642 = vsel %vm640, %v616, 0
  %v645 = vsel %vm640, %v617, 0
  %v648 = vsel %vm640, %v618, 0
  %v651 = vsel %vm640, %v619, 0
  %v654 = vsel %vm640, %v620, 0
  %v657 = vsel %vm640, %v621, 0
  %v660 = vsel %vm640, %v622, 0
  %v663 = vsel %vm640, %v623, 0
  %v666 = vsel %vm640, %v624, 0
  %v669 = vsel %vm640, %v625, 0
  %v672 = vsel %vm640, %v626, 0
  %v675 = vsel %vm640, %v627, 0
  %v678 = vsel %vm640, %v628, 0
  %v681 = vsel %vm640, %v629, 0
  %v684 = vsel %vm640, %v630, 0
  %v687 = vsel %vm640, %v631, 0
  %689 = vmatprep.subr.mxu0 0.0
  %690 = vmatpush1.msra.mxu0 %v636
  %691 = vmatprep.subr.mxu0 0.0
  %692 = vmatpush1.msra.mxu0 %v637
  %693 = vmatprep.subr.mxu0 0.0
  %694 = vmatpush1.msra.mxu0 %v638
  %695 = vmatprep.subr.mxu0 0.0
  %696 = vmatpush1.msra.mxu0 %v639
  %697 = vmatprep.subr.mxu0 0.0
  %698 = vmatpush1.msra.mxu0 0.0
  %699 = vmatprep.subr.mxu0 0.0
  %700 = vmatpush1.msra.mxu0 0.0
  %701 = vmatprep.subr.mxu0 0.0
  %702 = vmatpush1.msra.mxu0 0.0
  %703 = vmatprep.subr.mxu0 0.0
  %704 = vmatpush1.msra.mxu0 0.0
  %705 = vmatprep.subr.mxu0 0.0
  %706 = vmatpush1.msra.mxu0 0.0
  %707 = vmatprep.subr.mxu0 0.0
  %708 = vmatpush1.msra.mxu0 0.0
  %709 = vmatprep.subr.mxu0 0.0
  %710 = vmatpush1.msra.mxu0 0.0
  %711 = vmatprep.subr.mxu0 0.0
  %712 = vmatpush1.msra.mxu0 0.0
  %713 = vmatprep.subr.mxu0 0.0
  %714 = vmatpush1.msra.mxu0 0.0
  %715 = vmatprep.subr.mxu0 0.0
  %716 = vmatpush1.msra.mxu0 0.0
  %717 = vmatprep.subr.mxu0 0.0
  %718 = vmatpush1.msra.mxu0 0.0
  %719 = vmatprep.subr.mxu0 0.0
  %720 = vmatpush1.msra.mxu0 0.0
  %721 = vmatprep.subr.mxu0 0.0
  %722 = vmatpush1.msra.mxu0 0.0
  %723 = vmatprep.subr.mxu0 0.0
  %724 = vmatpush1.msra.mxu0 0.0
  %725 = vmatprep.subr.mxu0 0.0
  %726 = vmatpush1.msra.mxu0 0.0
  %727 = vmatprep.subr.mxu0 0.0
  %728 = vmatpush1.msra.mxu0 0.0
  %729 = vmatprep.subr.mxu0 0.0
  %730 = vmatpush1.msra.mxu0 0.0
  %731 = vmatprep.subr.mxu0 0.0
  %732 = vmatpush1.msra.mxu0 0.0
  %733 = vmatprep.subr.mxu0 0.0
  %734 = vmatpush1.msra.mxu0 0.0
  %735 = vmatprep.subr.mxu0 0.0
  %736 = vmatpush1.msra.mxu0 0.0
  %737 = vmatprep.subr.mxu0 0.0
  %738 = vmatpush1.msra.mxu0 0.0
  %739 = vmatprep.subr.mxu0 0.0
  %740 = vmatpush1.msra.mxu0 0.0
  %741 = vmatprep.subr.mxu0 0.0
  %742 = vmatpush1.msra.mxu0 0.0
  %743 = vmatprep.subr.mxu0 0.0
  %744 = vmatpush1.msra.mxu0 0.0
  %745 = vmatprep.subr.mxu0 0.0
  %746 = vmatpush1.msra.mxu0 0.0
  %747 = vmatprep.subr.mxu0 0.0
  %748 = vmatpush1.msra.mxu0 0.0
  %749 = vmatprep.subr.mxu0 0.0
  %750 = vmatpush1.msra.mxu0 0.0
  %751 = vmatprep.subr.mxu0 0.0
  %752 = vmatpush1.msra.mxu0 0.0
  %753 = vmatprep.mubr.f32.mxu0 0.0
  %754 = vmatmul.mubr.f32.gmra.mrb[0].mxu0 %v642
  %v755 = vpop.f32.mrb[0].mxu0
  %v756 = vadd.f32 0.0, %v755
  %v757 = vpop.f32.mrb[0].mxu0
  %758 = vmatprep.mubr.f32.mxu0 0.0
  %759 = vmatmul.mubr.f32.gmra.mrb[0].mxu0 %v645
  %v760 = vpop.f32.mrb[0].mxu0
  %v761 = vadd.f32 0.0, %v760
  %v762 = vpop.f32.mrb[0].mxu0
  %763 = vmatprep.mubr.f32.mxu0 0.0
  %764 = vmatmul.mubr.f32.gmra.mrb[0].mxu0 %v648
  %v765 = vpop.f32.mrb[0].mxu0
  %v766 = vadd.f32 0.0, %v765
  %v767 = vpop.f32.mrb[0].mxu0
  %768 = vmatprep.mubr.f32.mxu0 0.0
  %769 = vmatmul.mubr.f32.gmra.mrb[0].mxu0 %v651
  %v770 = vpop.f32.mrb[0].mxu0
  %v771 = vadd.f32 0.0, %v770
  %v772 = vpop.f32.mrb[0].mxu0
  %773 = vmatprep.mubr.f32.mxu0 0.0
  %774 = vmatmul.mubr.f32.gmra.mrb[0].mxu0 %v654
  %v775 = vpop.f32.mrb[0].mxu0
  %v776 = vadd.f32 0.0, %v775
  %v777 = vpop.f32.mrb[0].mxu0
  %778 = vmatprep.mubr.f32.mxu0 0.0
  %779 = vmatmul.mubr.f32.gmra.mrb[0].mxu0 %v657
  %v780 = vpop.f32.mrb[0].mxu0
  %v781 = vadd.f32 0.0, %v780
  %v782 = vpop.f32.mrb[0].mxu0
  %783 = vmatprep.mubr.f32.mxu0 0.0
  %784 = vmatmul.mubr.f32.gmra.mrb[0].mxu0 %v660
  %v785 = vpop.f32.mrb[0].mxu0
  %v786 = vadd.f32 0.0, %v785
  %v787 = vpop.f32.mrb[0].mxu0
  %788 = vmatprep.mubr.f32.mxu0 0.0
  %789 = vmatmul.mubr.f32.gmra.mrb[0].mxu0 %v663
  %v790 = vpop.f32.mrb[0].mxu0
  %v791 = vadd.f32 0.0, %v790
  %v792 = vpop.f32.mrb[0].mxu0
  %793 = vmatprep.mubr.f32.mxu0 0.0
  %794 = vmatmul.mubr.f32.gmra.mrb[0].mxu0 %v666
  %v795 = vpop.f32.mrb[0].mxu0
  %v796 = vadd.f32 0.0, %v795
  %v797 = vpop.f32.mrb[0].mxu0
  %798 = vmatprep.mubr.f32.mxu0 0.0
  %799 = vmatmul.mubr.f32.gmra.mrb[0].mxu0 %v669
  %v800 = vpop.f32.mrb[0].mxu0
  %v801 = vadd.f32 0.0, %v800
  %v802 = vpop.f32.mrb[0].mxu0
  %803 = vmatprep.mubr.f32.mxu0 0.0
  %804 = vmatmul.mubr.f32.gmra.mrb[0].mxu0 %v672
  %v805 = vpop.f32.mrb[0].mxu0
  %v806 = vadd.f32 0.0, %v805
  %v807 = vpop.f32.mrb[0].mxu0
  %808 = vmatprep.mubr.f32.mxu0 0.0
  %809 = vmatmul.mubr.f32.gmra.mrb[0].mxu0 %v675
  %v810 = vpop.f32.mrb[0].mxu0
  %v811 = vadd.f32 0.0, %v810
  %v812 = vpop.f32.mrb[0].mxu0
  %813 = vmatprep.mubr.f32.mxu0 0.0
  %814 = vmatmul.mubr.f32.gmra.mrb[0].mxu0 %v678
  %v815 = vpop.f32.mrb[0].mxu0
  %v816 = vadd.f32 0.0, %v815
  %v817 = vpop.f32.mrb[0].mxu0
  %818 = vmatprep.mubr.f32.mxu0 0.0
  %819 = vmatmul.mubr.f32.gmra.mrb[0].mxu0 %v681
  %v820 = vpop.f32.mrb[0].mxu0
  %v821 = vadd.f32 0.0, %v820
  %v822 = vpop.f32.mrb[0].mxu0
  %823 = vmatprep.mubr.f32.mxu0 0.0
  %824 = vmatmul.mubr.f32.gmra.mrb[0].mxu0 %v684
  %v825 = vpop.f32.mrb[0].mxu0
  %v826 = vadd.f32 0.0, %v825
  %v827 = vpop.f32.mrb[0].mxu0
  %828 = vmatprep.mubr.f32.mxu0 0.0
  %829 = vmatmul.mubr.f32.gmra.mrb[0].mxu0 %v687
  %v830 = vpop.f32.mrb[0].mxu0
  %v831 = vadd.f32 0.0, %v830
  %v832 = vpop.f32.mrb[0].mxu0
  %833 = vdwg.mxu0
  %v835 = vsel %vm640, %v600, 0
  %v838 = vsel %vm640, %v601, 0
  %v841 = vsel %vm640, %v602, 0
  %v844 = vsel %vm640, %v603, 0
  %v847 = vsel %vm640, %v604, 0
  %v850 = vsel %vm640, %v605, 0
  %v853 = vsel %vm640, %v606, 0
  %v856 = vsel %vm640, %v607, 0
  %v859 = vsel %vm640, %v608, 0
  %v862 = vsel %vm640, %v609, 0
  %v865 = vsel %vm640, %v610, 0
  %v868 = vsel %vm640, %v611, 0
  %v871 = vsel %vm640, %v612, 0
  %v874 = vsel %vm640, %v613, 0
  %v877 = vsel %vm640, %v614, 0
  %v880 = vsel %vm640, %v615, 0
  %882 = vmatprep.subr.mxu0 0.0
  %883 = vmatpush1.msra.mxu0 %v632
  %884 = vmatprep.subr.mxu0 0.0
  %885 = vmatpush1.msra.mxu0 %v633
  %886 = vmatprep.subr.mxu0 0.0
  %887 = vmatpush1.msra.mxu0 %v634
  %888 = vmatprep.subr.mxu0 0.0
  %889 = vmatpush1.msra.mxu0 %v635
  %890 = vmatprep.subr.mxu0 0.0
  %891 = vmatpush1.msra.mxu0 0.0
  %892 = vmatprep.subr.mxu0 0.0
  %893 = vmatpush1.msra.mxu0 0.0
  %894 = vmatprep.subr.mxu0 0.0
  %895 = vmatpush1.msra.mxu0 0.0
  %896 = vmatprep.subr.mxu0 0.0
  %897 = vmatpush1.msra.mxu0 0.0
  %898 = vmatprep.subr.mxu0 0.0
  %899 = vmatpush1.msra.mxu0 0.0
  %900 = vmatprep.subr.mxu0 0.0
  %901 = vmatpush1.msra.mxu0 0.0
  %902 = vmatprep.subr.mxu0 0.0
  %903 = vmatpush1.msra.mxu0 0.0
  %904 = vmatprep.subr.mxu0 0.0
  %905 = vmatpush1.msra.mxu0 0.0
  %906 = vmatprep.subr.mxu0 0.0
  %907 = vmatpush1.msra.mxu0 0.0
  %908 = vmatprep.subr.mxu0 0.0
  %909 = vmatpush1.msra.mxu0 0.0
  %910 = vmatprep.subr.mxu0 0.0
  %911 = vmatpush1.msra.mxu0 0.0
  %912 = vmatprep.subr.mxu0 0.0
  %913 = vmatpush1.msra.mxu0 0.0
  %914 = vmatprep.subr.mxu0 0.0
  %915 = vmatpush1.msra.mxu0 0.0
  %916 = vmatprep.subr.mxu0 0.0
  %917 = vmatpush1.msra.mxu0 0.0
  %918 = vmatprep.subr.mxu0 0.0
  %919 = vmatpush1.msra.mxu0 0.0
  %920 = vmatprep.subr.mxu0 0.0
  %921 = vmatpush1.msra.mxu0 0.0
  %922 = vmatprep.subr.mxu0 0.0
  %923 = vmatpush1.msra.mxu0 0.0
  %924 = vmatprep.subr.mxu0 0.0
  %925 = vmatpush1.msra.mxu0 0.0
  %926 = vmatprep.subr.mxu0 0.0
  %927 = vmatpush1.msra.mxu0 0.0
  %928 = vmatprep.subr.mxu0 0.0
  %929 = vmatpush1.msra.mxu0 0.0
  %930 = vmatprep.subr.mxu0 0.0
  %931 = vmatpush1.msra.mxu0 0.0
  %932 = vmatprep.subr.mxu0 0.0
  %933 = vmatpush1.msra.mxu0 0.0
  %934 = vmatprep.subr.mxu0 0.0
  %935 = vmatpush1.msra.mxu0 0.0
  %936 = vmatprep.subr.mxu0 0.0
  %937 = vmatpush1.msra.mxu0 0.0
  %938 = vmatprep.subr.mxu0 0.0
  %939 = vmatpush1.msra.mxu0 0.0
  %940 = vmatprep.subr.mxu0 0.0
  %941 = vmatpush1.msra.mxu0 0.0
  %942 = vmatprep.subr.mxu0 0.0
  %943 = vmatpush1.msra.mxu0 0.0
  %944 = vmatprep.subr.mxu0 0.0
  %945 = vmatpush1.msra.mxu0 0.0
  %946 = vmatprep.mubr.f32.mxu0 0.0
  %947 = vmatmul.mubr.f32.gmra.mrb[0].mxu0 %v835
  %v948 = vpop.f32.mrb[0].mxu0
  %v949 = vadd.f32 %v756, %v948
  %v950 = vpop.f32.mrb[0].mxu0
  %951 = vmatprep.mubr.f32.mxu0 0.0
  %952 = vmatmul.mubr.f32.gmra.mrb[0].mxu0 %v838
  %v953 = vpop.f32.mrb[0].mxu0
  %v954 = vadd.f32 %v761, %v953
  %v955 = vpop.f32.mrb[0].mxu0
  %956 = vmatprep.mubr.f32.mxu0 0.0
  %957 = vmatmul.mubr.f32.gmra.mrb[0].mxu0 %v841
  %v958 = vpop.f32.mrb[0].mxu0
  %v959 = vadd.f32 %v766, %v958
  %v960 = vpop.f32.mrb[0].mxu0
  %961 = vmatprep.mubr.f32.mxu0 0.0
  %962 = vmatmul.mubr.f32.gmra.mrb[0].mxu0 %v844
  %v963 = vpop.f32.mrb[0].mxu0
  %v964 = vadd.f32 %v771, %v963
  %v965 = vpop.f32.mrb[0].mxu0
  %966 = vmatprep.mubr.f32.mxu0 0.0
  %967 = vmatmul.mubr.f32.gmra.mrb[0].mxu0 %v847
  %v968 = vpop.f32.mrb[0].mxu0
  %v969 = vadd.f32 %v776, %v968
  %v970 = vpop.f32.mrb[0].mxu0
  %971 = vmatprep.mubr.f32.mxu0 0.0
  %972 = vmatmul.mubr.f32.gmra.mrb[0].mxu0 %v850
  %v973 = vpop.f32.mrb[0].mxu0
  %v974 = vadd.f32 %v781, %v973
  %v975 = vpop.f32.mrb[0].mxu0
  %976 = vmatprep.mubr.f32.mxu0 0.0
  %977 = vmatmul.mubr.f32.gmra.mrb[0].mxu0 %v853
  %v978 = vpop.f32.mrb[0].mxu0
  %v979 = vadd.f32 %v786, %v978
  %v980 = vpop.f32.mrb[0].mxu0
  %981 = vmatprep.mubr.f32.mxu0 0.0
  %982 = vmatmul.mubr.f32.gmra.mrb[0].mxu0 %v856
  %v983 = vpop.f32.mrb[0].mxu0
  %v984 = vadd.f32 %v791, %v983
  %v985 = vpop.f32.mrb[0].mxu0
  %986 = vmatprep.mubr.f32.mxu0 0.0
  %987 = vmatmul.mubr.f32.gmra.mrb[0].mxu0 %v859
  %v988 = vpop.f32.mrb[0].mxu0
  %v989 = vadd.f32 %v796, %v988
  %v990 = vpop.f32.mrb[0].mxu0
  %991 = vmatprep.mubr.f32.mxu0 0.0
  %992 = vmatmul.mubr.f32.gmra.mrb[0].mxu0 %v862
  %v993 = vpop.f32.mrb[0].mxu0
  %v994 = vadd.f32 %v801, %v993
  %v995 = vpop.f32.mrb[0].mxu0
  %996 = vmatprep.mubr.f32.mxu0 0.0
  %997 = vmatmul.mubr.f32.gmra.mrb[0].mxu0 %v865
  %v998 = vpop.f32.mrb[0].mxu0
  %v999 = vadd.f32 %v806, %v998
  %v1000 = vpop.f32.mrb[0].mxu0
  %1001 = vmatprep.mubr.f32.mxu0 0.0
  %1002 = vmatmul.mubr.f32.gmra.mrb[0].mxu0 %v868
  %v1003 = vpop.f32.mrb[0].mxu0
  %v1004 = vadd.f32 %v811, %v1003
  %v1005 = vpop.f32.mrb[0].mxu0
  %1006 = vmatprep.mubr.f32.mxu0 0.0
  %1007 = vmatmul.mubr.f32.gmra.mrb[0].mxu0 %v871
  %v1008 = vpop.f32.mrb[0].mxu0
  %v1009 = vadd.f32 %v816, %v1008
  %v1010 = vpop.f32.mrb[0].mxu0
  %1011 = vmatprep.mubr.f32.mxu0 0.0
  %1012 = vmatmul.mubr.f32.gmra.mrb[0].mxu0 %v874
  %v1013 = vpop.f32.mrb[0].mxu0
  %v1014 = vadd.f32 %v821, %v1013
  %v1015 = vpop.f32.mrb[0].mxu0
  %1016 = vmatprep.mubr.f32.mxu0 0.0
  %1017 = vmatmul.mubr.f32.gmra.mrb[0].mxu0 %v877
  %v1018 = vpop.f32.mrb[0].mxu0
  %v1019 = vadd.f32 %v826, %v1018
  %v1020 = vpop.f32.mrb[0].mxu0
  %1021 = vmatprep.mubr.f32.mxu0 0.0
  %1022 = vmatmul.mubr.f32.gmra.mrb[0].mxu0 %v880
  %v1023 = vpop.f32.mrb[0].mxu0
  %v1024 = vadd.f32 %v831, %v1023
  %v1025 = vpop.f32.mrb[0].mxu0
  %1026 = vdwg.mxu0
  %v1027 = vpack.c.bf16 %v954, %v949
  %v1028 = vpack.c.bf16 %v964, %v959
  %v1029 = vpack.c.bf16 %v974, %v969
  %v1030 = vpack.c.bf16 %v984, %v979
  %v1031 = vpack.c.bf16 %v994, %v989
  %v1032 = vpack.c.bf16 %v1004, %v999
  %v1033 = vpack.c.bf16 %v1014, %v1009
  %v1034 = vpack.c.bf16 %v1024, %v1019
  %v1035 = vld [vmem:[%s11] sm:$0x1]
  %v1037 = vlaneseq
  %v1038 = vshrl.u32 %v1037, 7
  %v1039 = vsub.s32 0, %v1038
  %v1040 = vrot.slane %v1035, %v1039
  %1042 = vmatprep.subr.bf16.mxu0 0
  %1043 = vmatpush1.bf16.msra.mxu0 %v1027
  %1044 = vmatprep.subr.bf16.mxu0 0
  %1045 = vmatpush1.bf16.msra.mxu0 %v1028
  %1046 = vmatprep.subr.bf16.mxu0 0
  %1047 = vmatpush1.bf16.msra.mxu0 %v1029
  %1048 = vmatprep.subr.bf16.mxu0 0
  %1049 = vmatpush1.bf16.msra.mxu0 %v1030
  %1050 = vmatprep.subr.bf16.mxu0 0
  %1051 = vmatpush1.bf16.msra.mxu0 %v1031
  %1052 = vmatprep.subr.bf16.mxu0 0
  %1053 = vmatpush1.bf16.msra.mxu0 %v1032
  %1054 = vmatprep.subr.bf16.mxu0 0
  %1055 = vmatpush1.bf16.msra.mxu0 %v1033
  %1056 = vmatprep.subr.bf16.mxu0 0
  %1057 = vmatpush1.bf16.msra.mxu0 %v1034
  %1058 = vmatprep.subr.bf16.mxu0 0
  %1059 = vmatpush1.bf16.msra.mxu0 0
  %1060 = vmatprep.subr.bf16.mxu0 0
  %1061 = vmatpush1.bf16.msra.mxu0 0
  %1062 = vmatprep.subr.bf16.mxu0 0
  %1063 = vmatpush1.bf16.msra.mxu0 0
  %1064 = vmatprep.subr.bf16.mxu0 0
  %1065 = vmatpush1.bf16.msra.mxu0 0
  %1066 = vmatprep.subr.bf16.mxu0 0
  %1067 = vmatpush1.bf16.msra.mxu0 0
  %1068 = vmatprep.subr.bf16.mxu0 0
  %1069 = vmatpush1.bf16.msra.mxu0 0
  %1070 = vmatprep.subr.bf16.mxu0 0
  %1071 = vmatpush1.bf16.msra.mxu0 0
  %1072 = vmatprep.subr.bf16.mxu0 0
  %1073 = vmatpush1.bf16.msra.mxu0 0
  %1074 = vmatprep.mubr.bf16.mxu0 0
  %1075 = vmatmul.mubr.bf16.gmra.mrb[0].mxu0 %v407
  %v1076 = vpop.f32.mrb[0].mxu0
  %v1077 = vadd.f32 %v1040, %v1076
  %v1078 = vpop.f32.mrb[0].mxu0
  %v1079 = vpop.f32.mrb[0].mxu0
  %v1080 = vadd.f32 %v1040, %v1079
  %v1081 = vpop.f32.mrb[0].mxu0
  %1082 = vmatprep.mubr.bf16.mxu0 0
  %1083 = vmatmul.mubr.bf16.gmra.mrb[0].mxu0 %v408
  %v1084 = vpop.f32.mrb[0].mxu0
  %v1085 = vadd.f32 %v1040, %v1084
  %v1086 = vpop.f32.mrb[0].mxu0
  %v1087 = vpop.f32.mrb[0].mxu0
  %v1088 = vadd.f32 %v1040, %v1087
  %v1089 = vpop.f32.mrb[0].mxu0
  %1090 = vmatprep.mubr.bf16.mxu0 0
  %1091 = vmatmul.mubr.bf16.gmra.mrb[0].mxu0 %v409
  %v1092 = vpop.f32.mrb[0].mxu0
  %v1093 = vadd.f32 %v1040, %v1092
  %v1094 = vpop.f32.mrb[0].mxu0
  %v1095 = vpop.f32.mrb[0].mxu0
  %v1096 = vadd.f32 %v1040, %v1095
  %v1097 = vpop.f32.mrb[0].mxu0
  %1098 = vmatprep.mubr.bf16.mxu0 0
  %1099 = vmatmul.mubr.bf16.gmra.mrb[0].mxu0 %v410
  %v1100 = vpop.f32.mrb[0].mxu0
  %v1101 = vadd.f32 %v1040, %v1100
  %v1102 = vpop.f32.mrb[0].mxu0
  %v1103 = vpop.f32.mrb[0].mxu0
  %v1104 = vadd.f32 %v1040, %v1103
  %v1105 = vpop.f32.mrb[0].mxu0
  %1106 = vmatprep.mubr.bf16.mxu0 0
  %1107 = vmatmul.mubr.bf16.gmra.mrb[0].mxu0 %v411
  %v1108 = vpop.f32.mrb[0].mxu0
  %v1109 = vadd.f32 %v1040, %v1108
  %v1110 = vpop.f32.mrb[0].mxu0
  %v1111 = vpop.f32.mrb[0].mxu0
  %v1112 = vadd.f32 %v1040, %v1111
  %v1113 = vpop.f32.mrb[0].mxu0
  %1114 = vmatprep.mubr.bf16.mxu0 0
  %1115 = vmatmul.mubr.bf16.gmra.mrb[0].mxu0 %v412
  %v1116 = vpop.f32.mrb[0].mxu0
  %v1117 = vadd.f32 %v1040, %v1116
  %v1118 = vpop.f32.mrb[0].mxu0
  %v1119 = vpop.f32.mrb[0].mxu0
  %v1120 = vadd.f32 %v1040, %v1119
  %v1121 = vpop.f32.mrb[0].mxu0
  %1122 = vmatprep.mubr.bf16.mxu0 0
  %1123 = vmatmul.mubr.bf16.gmra.mrb[0].mxu0 %v413
  %v1124 = vpop.f32.mrb[0].mxu0
  %v1125 = vadd.f32 %v1040, %v1124
  %v1126 = vpop.f32.mrb[0].mxu0
  %v1127 = vpop.f32.mrb[0].mxu0
  %v1128 = vadd.f32 %v1040, %v1127
  %v1129 = vpop.f32.mrb[0].mxu0
  %1130 = vmatprep.mubr.bf16.mxu0 0
  %1131 = vmatmul.mubr.bf16.gmra.mrb[0].mxu0 %v414
  %v1132 = vpop.f32.mrb[0].mxu0
  %v1133 = vadd.f32 %v1040, %v1132
  %v1134 = vpop.f32.mrb[0].mxu0
  %v1135 = vpop.f32.mrb[0].mxu0
  %v1136 = vadd.f32 %v1040, %v1135
  %v1137 = vpop.f32.mrb[0].mxu0
  %1138 = vmatprep.mubr.bf16.mxu0 0
  %1139 = vmatmul.mubr.bf16.gmra.mrb[0].mxu0 %v415
  %v1140 = vpop.f32.mrb[0].mxu0
  %v1141 = vadd.f32 %v1040, %v1140
  %v1142 = vpop.f32.mrb[0].mxu0
  %v1143 = vpop.f32.mrb[0].mxu0
  %v1144 = vadd.f32 %v1040, %v1143
  %v1145 = vpop.f32.mrb[0].mxu0
  %1146 = vmatprep.mubr.bf16.mxu0 0
  %1147 = vmatmul.mubr.bf16.gmra.mrb[0].mxu0 %v416
  %v1148 = vpop.f32.mrb[0].mxu0
  %v1149 = vadd.f32 %v1040, %v1148
  %v1150 = vpop.f32.mrb[0].mxu0
  %v1151 = vpop.f32.mrb[0].mxu0
  %v1152 = vadd.f32 %v1040, %v1151
  %v1153 = vpop.f32.mrb[0].mxu0
  %1154 = vmatprep.mubr.bf16.mxu0 0
  %1155 = vmatmul.mubr.bf16.gmra.mrb[0].mxu0 %v417
  %v1156 = vpop.f32.mrb[0].mxu0
  %v1157 = vadd.f32 %v1040, %v1156
  %v1158 = vpop.f32.mrb[0].mxu0
  %v1159 = vpop.f32.mrb[0].mxu0
  %v1160 = vadd.f32 %v1040, %v1159
  %v1161 = vpop.f32.mrb[0].mxu0
  %1162 = vmatprep.mubr.bf16.mxu0 0
  %1163 = vmatmul.mubr.bf16.gmra.mrb[0].mxu0 %v418
  %v1164 = vpop.f32.mrb[0].mxu0
  %v1165 = vadd.f32 %v1040, %v1164
  %v1166 = vpop.f32.mrb[0].mxu0
  %v1167 = vpop.f32.mrb[0].mxu0
  %v1168 = vadd.f32 %v1040, %v1167
  %v1169 = vpop.f32.mrb[0].mxu0
  %1170 = vmatprep.mubr.bf16.mxu0 0
  %1171 = vmatmul.mubr.bf16.gmra.mrb[0].mxu0 %v419
  %v1172 = vpop.f32.mrb[0].mxu0
  %v1173 = vadd.f32 %v1040, %v1172
  %v1174 = vpop.f32.mrb[0].mxu0
  %v1175 = vpop.f32.mrb[0].mxu0
  %v1176 = vadd.f32 %v1040, %v1175
  %v1177 = vpop.f32.mrb[0].mxu0
  %1178 = vmatprep.mubr.bf16.mxu0 0
  %1179 = vmatmul.mubr.bf16.gmra.mrb[0].mxu0 %v420
  %v1180 = vpop.f32.mrb[0].mxu0
  %v1181 = vadd.f32 %v1040, %v1180
  %v1182 = vpop.f32.mrb[0].mxu0
  %v1183 = vpop.f32.mrb[0].mxu0
  %v1184 = vadd.f32 %v1040, %v1183
  %v1185 = vpop.f32.mrb[0].mxu0
  %1186 = vmatprep.mubr.bf16.mxu0 0
  %1187 = vmatmul.mubr.bf16.gmra.mrb[0].mxu0 %v421
  %v1188 = vpop.f32.mrb[0].mxu0
  %v1189 = vadd.f32 %v1040, %v1188
  %v1190 = vpop.f32.mrb[0].mxu0
  %v1191 = vpop.f32.mrb[0].mxu0
  %v1192 = vadd.f32 %v1040, %v1191
  %v1193 = vpop.f32.mrb[0].mxu0
  %1194 = vmatprep.mubr.bf16.mxu0 0
  %1195 = vmatmul.mubr.bf16.gmra.mrb[0].mxu0 %v422
  %v1196 = vpop.f32.mrb[0].mxu0
  %v1197 = vadd.f32 %v1040, %v1196
  %v1198 = vpop.f32.mrb[0].mxu0
  %v1199 = vpop.f32.mrb[0].mxu0
  %v1200 = vadd.f32 %v1040, %v1199
  %v1201 = vpop.f32.mrb[0].mxu0
  %1202 = vdwg.mxu0
  %v1203 = vmax.f32 %v1077, 0.0
  %v1204 = vmax.f32 %v1080, 0.0
  %v1205 = vmax.f32 %v1085, 0.0
  %v1206 = vmax.f32 %v1088, 0.0
  %v1207 = vmax.f32 %v1093, 0.0
  %v1208 = vmax.f32 %v1096, 0.0
  %v1209 = vmax.f32 %v1101, 0.0
  %v1210 = vmax.f32 %v1104, 0.0
  %v1211 = vmax.f32 %v1109, 0.0
  %v1212 = vmax.f32 %v1112, 0.0
  %v1213 = vmax.f32 %v1117, 0.0
  %v1214 = vmax.f32 %v1120, 0.0
  %v1215 = vmax.f32 %v1125, 0.0
  %v1216 = vmax.f32 %v1128, 0.0
  %v1217 = vmax.f32 %v1133, 0.0
  %v1218 = vmax.f32 %v1136, 0.0
  %v1219 = vmax.f32 %v1141, 0.0
  %v1220 = vmax.f32 %v1144, 0.0
  %v1221 = vmax.f32 %v1149, 0.0
  %v1222 = vmax.f32 %v1152, 0.0
  %v1223 = vmax.f32 %v1157, 0.0
  %v1224 = vmax.f32 %v1160, 0.0
  %v1225 = vmax.f32 %v1165, 0.0
  %v1226 = vmax.f32 %v1168, 0.0
  %v1227 = vmax.f32 %v1173, 0.0
  %v1228 = vmax.f32 %v1176, 0.0
  %v1229 = vmax.f32 %v1181, 0.0
  %v1230 = vmax.f32 %v1184, 0.0
  %v1231 = vmax.f32 %v1189, 0.0
  %v1232 = vmax.f32 %v1192, 0.0
  %v1233 = vmax.f32 %v1197, 0.0
  %v1234 = vmax.f32 %v1200, 0.0
  %v1235 = vld [vmem:[%s12] sm:$0xff]
  %v1236 = vld [vmem:[%s12 + $0x8] sm:$0xff]
  %v1237 = vld [vmem:[%s12 + $0x10] sm:$0xff]
  %v1238 = vld [vmem:[%s12 + $0x18] sm:$0xff]
  %v1239 = vld [vmem:[%s13] sm:$0xff]
  %v1240 = vld [vmem:[%s13 + $0x8] sm:$0xff]
  %v1241 = vld [vmem:[%s13 + $0x10] sm:$0xff]
  %v1242 = vld [vmem:[%s13 + $0x18] sm:$0xff]
  %v1244 = vsel %vm640, %v1219, 0
  %v1247 = vsel %vm640, %v1220, 0
  %v1250 = vsel %vm640, %v1221, 0
  %v1253 = vsel %vm640, %v1222, 0
  %v1256 = vsel %vm640, %v1223, 0
  %v1259 = vsel %vm640, %v1224, 0
  %v1262 = vsel %vm640, %v1225, 0
  %v1265 = vsel %vm640, %v1226, 0
  %v1268 = vsel %vm640, %v1227, 0
  %v1271 = vsel %vm640, %v1228, 0
  %v1274 = vsel %vm640, %v1229, 0
  %v1277 = vsel %vm640, %v1230, 0
  %v1280 = vsel %vm640, %v1231, 0
  %v1283 = vsel %vm640, %v1232, 0
  %v1286 = vsel %vm640, %v1233, 0
  %v1289 = vsel %vm640, %v1234, 0
  %1291 = vmatprep.subr.mxu0 0.0
  %1292 = vmatpush1.msra.mxu0 %v1239
  %1293 = vmatprep.subr.mxu0 0.0
  %1294 = vmatpush1.msra.mxu0 %v1240
  %1295 = vmatprep.subr.mxu0 0.0
  %1296 = vmatpush1.msra.mxu0 %v1241
  %1297 = vmatprep.subr.mxu0 0.0
  %1298 = vmatpush1.msra.mxu0 %v1242
  %1299 = vmatprep.subr.mxu0 0.0
  %1300 = vmatpush1.msra.mxu0 0.0
  %1301 = vmatprep.subr.mxu0 0.0
  %1302 = vmatpush1.msra.mxu0 0.0
  %1303 = vmatprep.subr.mxu0 0.0
  %1304 = vmatpush1.msra.mxu0 0.0
  %1305 = vmatprep.subr.mxu0 0.0
  %1306 = vmatpush1.msra.mxu0 0.0
  %1307 = vmatprep.subr.mxu0 0.0
  %1308 = vmatpush1.msra.mxu0 0.0
  %1309 = vmatprep.subr.mxu0 0.0
  %1310 = vmatpush1.msra.mxu0 0.0
  %1311 = vmatprep.subr.mxu0 0.0
  %1312 = vmatpush1.msra.mxu0 0.0
  %1313 = vmatprep.subr.mxu0 0.0
  %1314 = vmatpush1.msra.mxu0 0.0
  %1315 = vmatprep.subr.mxu0 0.0
  %1316 = vmatpush1.msra.mxu0 0.0
  %1317 = vmatprep.subr.mxu0 0.0
  %1318 = vmatpush1.msra.mxu0 0.0
  %1319 = vmatprep.subr.mxu0 0.0
  %1320 = vmatpush1.msra.mxu0 0.0
  %1321 = vmatprep.subr.mxu0 0.0
  %1322 = vmatpush1.msra.mxu0 0.0
  %1323 = vmatprep.subr.mxu0 0.0
  %1324 = vmatpush1.msra.mxu0 0.0
  %1325 = vmatprep.subr.mxu0 0.0
  %1326 = vmatpush1.msra.mxu0 0.0
  %1327 = vmatprep.subr.mxu0 0.0
  %1328 = vmatpush1.msra.mxu0 0.0
  %1329 = vmatprep.subr.mxu0 0.0
  %1330 = vmatpush1.msra.mxu0 0.0
  %1331 = vmatprep.subr.mxu0 0.0
  %1332 = vmatpush1.msra.mxu0 0.0
  %1333 = vmatprep.subr.mxu0 0.0
  %1334 = vmatpush1.msra.mxu0 0.0
  %1335 = vmatprep.subr.mxu0 0.0
  %1336 = vmatpush1.msra.mxu0 0.0
  %1337 = vmatprep.subr.mxu0 0.0
  %1338 = vmatpush1.msra.mxu0 0.0
  %1339 = vmatprep.subr.mxu0 0.0
  %1340 = vmatpush1.msra.mxu0 0.0
  %1341 = vmatprep.subr.mxu0 0.0
  %1342 = vmatpush1.msra.mxu0 0.0
  %1343 = vmatprep.subr.mxu0 0.0
  %1344 = vmatpush1.msra.mxu0 0.0
  %1345 = vmatprep.subr.mxu0 0.0
  %1346 = vmatpush1.msra.mxu0 0.0
  %1347 = vmatprep.subr.mxu0 0.0
  %1348 = vmatpush1.msra.mxu0 0.0
  %1349 = vmatprep.subr.mxu0 0.0
  %1350 = vmatpush1.msra.mxu0 0.0
  %1351 = vmatprep.subr.mxu0 0.0
  %1352 = vmatpush1.msra.mxu0 0.0
  %1353 = vmatprep.subr.mxu0 0.0
  %1354 = vmatpush1.msra.mxu0 0.0
  %1355 = vmatprep.mubr.f32.mxu0 0.0
  %1356 = vmatmul.mubr.f32.gmra.mrb[0].mxu0 %v1244
  %v1357 = vpop.f32.mrb[0].mxu0
  %v1358 = vadd.f32 0.0, %v1357
  %v1359 = vpop.f32.mrb[0].mxu0
  %1360 = vmatprep.mubr.f32.mxu0 0.0
  %1361 = vmatmul.mubr.f32.gmra.mrb[0].mxu0 %v1247
  %v1362 = vpop.f32.mrb[0].mxu0
  %v1363 = vadd.f32 0.0, %v1362
  %v1364 = vpop.f32.mrb[0].mxu0
  %1365 = vmatprep.mubr.f32.mxu0 0.0
  %1366 = vmatmul.mubr.f32.gmra.mrb[0].mxu0 %v1250
  %v1367 = vpop.f32.mrb[0].mxu0
  %v1368 = vadd.f32 0.0, %v1367
  %v1369 = vpop.f32.mrb[0].mxu0
  %1370 = vmatprep.mubr.f32.mxu0 0.0
  %1371 = vmatmul.mubr.f32.gmra.mrb[0].mxu0 %v1253
  %v1372 = vpop.f32.mrb[0].mxu0
  %v1373 = vadd.f32 0.0, %v1372
  %v1374 = vpop.f32.mrb[0].mxu0
  %1375 = vmatprep.mubr.f32.mxu0 0.0
  %1376 = vmatmul.mubr.f32.gmra.mrb[0].mxu0 %v1256
  %v1377 = vpop.f32.mrb[0].mxu0
  %v1378 = vadd.f32 0.0, %v1377
  %v1379 = vpop.f32.mrb[0].mxu0
  %1380 = vmatprep.mubr.f32.mxu0 0.0
  %1381 = vmatmul.mubr.f32.gmra.mrb[0].mxu0 %v1259
  %v1382 = vpop.f32.mrb[0].mxu0
  %v1383 = vadd.f32 0.0, %v1382
  %v1384 = vpop.f32.mrb[0].mxu0
  %1385 = vmatprep.mubr.f32.mxu0 0.0
  %1386 = vmatmul.mubr.f32.gmra.mrb[0].mxu0 %v1262
  %v1387 = vpop.f32.mrb[0].mxu0
  %v1388 = vadd.f32 0.0, %v1387
  %v1389 = vpop.f32.mrb[0].mxu0
  %1390 = vmatprep.mubr.f32.mxu0 0.0
  %1391 = vmatmul.mubr.f32.gmra.mrb[0].mxu0 %v1265
  %v1392 = vpop.f32.mrb[0].mxu0
  %v1393 = vadd.f32 0.0, %v1392
  %v1394 = vpop.f32.mrb[0].mxu0
  %1395 = vmatprep.mubr.f32.mxu0 0.0
  %1396 = vmatmul.mubr.f32.gmra.mrb[0].mxu0 %v1268
  %v1397 = vpop.f32.mrb[0].mxu0
  %v1398 = vadd.f32 0.0, %v1397
  %v1399 = vpop.f32.mrb[0].mxu0
  %1400 = vmatprep.mubr.f32.mxu0 0.0
  %1401 = vmatmul.mubr.f32.gmra.mrb[0].mxu0 %v1271
  %v1402 = vpop.f32.mrb[0].mxu0
  %v1403 = vadd.f32 0.0, %v1402
  %v1404 = vpop.f32.mrb[0].mxu0
  %1405 = vmatprep.mubr.f32.mxu0 0.0
  %1406 = vmatmul.mubr.f32.gmra.mrb[0].mxu0 %v1274
  %v1407 = vpop.f32.mrb[0].mxu0
  %v1408 = vadd.f32 0.0, %v1407
  %v1409 = vpop.f32.mrb[0].mxu0
  %1410 = vmatprep.mubr.f32.mxu0 0.0
  %1411 = vmatmul.mubr.f32.gmra.mrb[0].mxu0 %v1277
  %v1412 = vpop.f32.mrb[0].mxu0
  %v1413 = vadd.f32 0.0, %v1412
  %v1414 = vpop.f32.mrb[0].mxu0
  %1415 = vmatprep.mubr.f32.mxu0 0.0
  %1416 = vmatmul.mubr.f32.gmra.mrb[0].mxu0 %v1280
  %v1417 = vpop.f32.mrb[0].mxu0
  %v1418 = vadd.f32 0.0, %v1417
  %v1419 = vpop.f32.mrb[0].mxu0
  %1420 = vmatprep.mubr.f32.mxu0 0.0
  %1421 = vmatmul.mubr.f32.gmra.mrb[0].mxu0 %v1283
  %v1422 = vpop.f32.mrb[0].mxu0
  %v1423 = vadd.f32 0.0, %v1422
  %v1424 = vpop.f32.mrb[0].mxu0
  %1425 = vmatprep.mubr.f32.mxu0 0.0
  %1426 = vmatmul.mubr.f32.gmra.mrb[0].mxu0 %v1286
  %v1427 = vpop.f32.mrb[0].mxu0
  %v1428 = vadd.f32 0.0, %v1427
  %v1429 = vpop.f32.mrb[0].mxu0
  %1430 = vmatprep.mubr.f32.mxu0 0.0
  %1431 = vmatmul.mubr.f32.gmra.mrb[0].mxu0 %v1289
  %v1432 = vpop.f32.mrb[0].mxu0
  %v1433 = vadd.f32 0.0, %v1432
  %v1434 = vpop.f32.mrb[0].mxu0
  %1435 = vdwg.mxu0
  %v1437 = vsel %vm640, %v1203, 0
  %v1440 = vsel %vm640, %v1204, 0
  %v1443 = vsel %vm640, %v1205, 0
  %v1446 = vsel %vm640, %v1206, 0
  %v1449 = vsel %vm640, %v1207, 0
  %v1452 = vsel %vm640, %v1208, 0
  %v1455 = vsel %vm640, %v1209, 0
  %v1458 = vsel %vm640, %v1210, 0
  %v1461 = vsel %vm640, %v1211, 0
  %v1464 = vsel %vm640, %v1212, 0
  %v1467 = vsel %vm640, %v1213, 0
  %v1470 = vsel %vm640, %v1214, 0
  %v1473 = vsel %vm640, %v1215, 0
  %v1476 = vsel %vm640, %v1216, 0
  %v1479 = vsel %vm640, %v1217, 0
  %v1482 = vsel %vm640, %v1218, 0
  %1484 = vmatprep.subr.mxu0 0.0
  %1485 = vmatpush1.msra.mxu0 %v1235
  %1486 = vmatprep.subr.mxu0 0.0
  %1487 = vmatpush1.msra.mxu0 %v1236
  %1488 = vmatprep.subr.mxu0 0.0
  %1489 = vmatpush1.msra.mxu0 %v1237
  %1490 = vmatprep.subr.mxu0 0.0
  %1491 = vmatpush1.msra.mxu0 %v1238
  %1492 = vmatprep.subr.mxu0 0.0
  %1493 = vmatpush1.msra.mxu0 0.0
  %1494 = vmatprep.subr.mxu0 0.0
  %1495 = vmatpush1.msra.mxu0 0.0
  %1496 = vmatprep.subr.mxu0 0.0
  %1497 = vmatpush1.msra.mxu0 0.0
  %1498 = vmatprep.subr.mxu0 0.0
  %1499 = vmatpush1.msra.mxu0 0.0
  %1500 = vmatprep.subr.mxu0 0.0
  %1501 = vmatpush1.msra.mxu0 0.0
  %1502 = vmatprep.subr.mxu0 0.0
  %1503 = vmatpush1.msra.mxu0 0.0
  %1504 = vmatprep.subr.mxu0 0.0
  %1505 = vmatpush1.msra.mxu0 0.0
  %1506 = vmatprep.subr.mxu0 0.0
  %1507 = vmatpush1.msra.mxu0 0.0
  %1508 = vmatprep.subr.mxu0 0.0
  %1509 = vmatpush1.msra.mxu0 0.0
  %1510 = vmatprep.subr.mxu0 0.0
  %1511 = vmatpush1.msra.mxu0 0.0
  %1512 = vmatprep.subr.mxu0 0.0
  %1513 = vmatpush1.msra.mxu0 0.0
  %1514 = vmatprep.subr.mxu0 0.0
  %1515 = vmatpush1.msra.mxu0 0.0
  %1516 = vmatprep.subr.mxu0 0.0
  %1517 = vmatpush1.msra.mxu0 0.0
  %1518 = vmatprep.subr.mxu0 0.0
  %1519 = vmatpush1.msra.mxu0 0.0
  %1520 = vmatprep.subr.mxu0 0.0
  %1521 = vmatpush1.msra.mxu0 0.0
  %1522 = vmatprep.subr.mxu0 0.0
  %1523 = vmatpush1.msra.mxu0 0.0
  %1524 = vmatprep.subr.mxu0 0.0
  %1525 = vmatpush1.msra.mxu0 0.0
  %1526 = vmatprep.subr.mxu0 0.0
  %1527 = vmatpush1.msra.mxu0 0.0
  %1528 = vmatprep.subr.mxu0 0.0
  %1529 = vmatpush1.msra.mxu0 0.0
  %1530 = vmatprep.subr.mxu0 0.0
  %1531 = vmatpush1.msra.mxu0 0.0
  %1532 = vmatprep.subr.mxu0 0.0
  %1533 = vmatpush1.msra.mxu0 0.0
  %1534 = vmatprep.subr.mxu0 0.0
  %1535 = vmatpush1.msra.mxu0 0.0
  %1536 = vmatprep.subr.mxu0 0.0
  %1537 = vmatpush1.msra.mxu0 0.0
  %1538 = vmatprep.subr.mxu0 0.0
  %1539 = vmatpush1.msra.mxu0 0.0
  %1540 = vmatprep.subr.mxu0 0.0
  %1541 = vmatpush1.msra.mxu0 0.0
  %1542 = vmatprep.subr.mxu0 0.0
  %1543 = vmatpush1.msra.mxu0 0.0
  %1544 = vmatprep.subr.mxu0 0.0
  %1545 = vmatpush1.msra.mxu0 0.0
  %1546 = vmatprep.subr.mxu0 0.0
  %1547 = vmatpush1.msra.mxu0 0.0
  %1548 = vmatprep.mubr.f32.mxu0 0.0
  %1549 = vmatmul.mubr.f32.gmra.mrb[0].mxu0 %v1437
  %v1550 = vpop.f32.mrb[0].mxu0
  %v1551 = vadd.f32 %v1358, %v1550
  %v1552 = vpop.f32.mrb[0].mxu0
  %1553 = vmatprep.mubr.f32.mxu0 0.0
  %1554 = vmatmul.mubr.f32.gmra.mrb[0].mxu0 %v1440
  %v1555 = vpop.f32.mrb[0].mxu0
  %v1556 = vadd.f32 %v1363, %v1555
  %v1557 = vpop.f32.mrb[0].mxu0
  %1558 = vmatprep.mubr.f32.mxu0 0.0
  %1559 = vmatmul.mubr.f32.gmra.mrb[0].mxu0 %v1443
  %v1560 = vpop.f32.mrb[0].mxu0
  %v1561 = vadd.f32 %v1368, %v1560
  %v1562 = vpop.f32.mrb[0].mxu0
  %1563 = vmatprep.mubr.f32.mxu0 0.0
  %1564 = vmatmul.mubr.f32.gmra.mrb[0].mxu0 %v1446
  %v1565 = vpop.f32.mrb[0].mxu0
  %v1566 = vadd.f32 %v1373, %v1565
  %v1567 = vpop.f32.mrb[0].mxu0
  %1568 = vmatprep.mubr.f32.mxu0 0.0
  %1569 = vmatmul.mubr.f32.gmra.mrb[0].mxu0 %v1449
  %v1570 = vpop.f32.mrb[0].mxu0
  %v1571 = vadd.f32 %v1378, %v1570
  %v1572 = vpop.f32.mrb[0].mxu0
  %1573 = vmatprep.mubr.f32.mxu0 0.0
  %1574 = vmatmul.mubr.f32.gmra.mrb[0].mxu0 %v1452
  %v1575 = vpop.f32.mrb[0].mxu0
  %v1576 = vadd.f32 %v1383, %v1575
  %v1577 = vpop.f32.mrb[0].mxu0
  %1578 = vmatprep.mubr.f32.mxu0 0.0
  %1579 = vmatmul.mubr.f32.gmra.mrb[0].mxu0 %v1455
  %v1580 = vpop.f32.mrb[0].mxu0
  %v1581 = vadd.f32 %v1388, %v1580
  %v1582 = vpop.f32.mrb[0].mxu0
  %1583 = vmatprep.mubr.f32.mxu0 0.0
  %1584 = vmatmul.mubr.f32.gmra.mrb[0].mxu0 %v1458
  %v1585 = vpop.f32.mrb[0].mxu0
  %v1586 = vadd.f32 %v1393, %v1585
  %v1587 = vpop.f32.mrb[0].mxu0
  %1588 = vmatprep.mubr.f32.mxu0 0.0
  %1589 = vmatmul.mubr.f32.gmra.mrb[0].mxu0 %v1461
  %v1590 = vpop.f32.mrb[0].mxu0
  %v1591 = vadd.f32 %v1398, %v1590
  %v1592 = vpop.f32.mrb[0].mxu0
  %1593 = vmatprep.mubr.f32.mxu0 0.0
  %1594 = vmatmul.mubr.f32.gmra.mrb[0].mxu0 %v1464
  %v1595 = vpop.f32.mrb[0].mxu0
  %v1596 = vadd.f32 %v1403, %v1595
  %v1597 = vpop.f32.mrb[0].mxu0
  %1598 = vmatprep.mubr.f32.mxu0 0.0
  %1599 = vmatmul.mubr.f32.gmra.mrb[0].mxu0 %v1467
  %v1600 = vpop.f32.mrb[0].mxu0
  %v1601 = vadd.f32 %v1408, %v1600
  %v1602 = vpop.f32.mrb[0].mxu0
  %1603 = vmatprep.mubr.f32.mxu0 0.0
  %1604 = vmatmul.mubr.f32.gmra.mrb[0].mxu0 %v1470
  %v1605 = vpop.f32.mrb[0].mxu0
  %v1606 = vadd.f32 %v1413, %v1605
  %v1607 = vpop.f32.mrb[0].mxu0
  %1608 = vmatprep.mubr.f32.mxu0 0.0
  %1609 = vmatmul.mubr.f32.gmra.mrb[0].mxu0 %v1473
  %v1610 = vpop.f32.mrb[0].mxu0
  %v1611 = vadd.f32 %v1418, %v1610
  %v1612 = vpop.f32.mrb[0].mxu0
  %1613 = vmatprep.mubr.f32.mxu0 0.0
  %1614 = vmatmul.mubr.f32.gmra.mrb[0].mxu0 %v1476
  %v1615 = vpop.f32.mrb[0].mxu0
  %v1616 = vadd.f32 %v1423, %v1615
  %v1617 = vpop.f32.mrb[0].mxu0
  %1618 = vmatprep.mubr.f32.mxu0 0.0
  %1619 = vmatmul.mubr.f32.gmra.mrb[0].mxu0 %v1479
  %v1620 = vpop.f32.mrb[0].mxu0
  %v1621 = vadd.f32 %v1428, %v1620
  %v1622 = vpop.f32.mrb[0].mxu0
  %1623 = vmatprep.mubr.f32.mxu0 0.0
  %1624 = vmatmul.mubr.f32.gmra.mrb[0].mxu0 %v1482
  %v1625 = vpop.f32.mrb[0].mxu0
  %v1626 = vadd.f32 %v1433, %v1625
  %v1627 = vpop.f32.mrb[0].mxu0
  %1628 = vdwg.mxu0
  %v1629 = vpack.c.bf16 %v1556, %v1551
  %v1630 = vpack.c.bf16 %v1566, %v1561
  %v1631 = vpack.c.bf16 %v1576, %v1571
  %v1632 = vpack.c.bf16 %v1586, %v1581
  %v1633 = vpack.c.bf16 %v1596, %v1591
  %v1634 = vpack.c.bf16 %v1606, %v1601
  %v1635 = vpack.c.bf16 %v1616, %v1611
  %v1636 = vpack.c.bf16 %v1626, %v1621
  %v1637 = vld [vmem:[%s14] sm:$0x1]
  %v1639 = vlaneseq
  %v1640 = vshrl.u32 %v1639, 7
  %v1641 = vsub.s32 0, %v1640
  %v1642 = vrot.slane %v1637, %v1641
  %1644 = vmatprep.subr.bf16.mxu0 0
  %1645 = vmatpush1.bf16.msra.mxu0 %v1629
  %1646 = vmatprep.subr.bf16.mxu0 0
  %1647 = vmatpush1.bf16.msra.mxu0 %v1630
  %1648 = vmatprep.subr.bf16.mxu0 0
  %1649 = vmatpush1.bf16.msra.mxu0 %v1631
  %1650 = vmatprep.subr.bf16.mxu0 0
  %1651 = vmatpush1.bf16.msra.mxu0 %v1632
  %1652 = vmatprep.subr.bf16.mxu0 0
  %1653 = vmatpush1.bf16.msra.mxu0 %v1633
  %1654 = vmatprep.subr.bf16.mxu0 0
  %1655 = vmatpush1.bf16.msra.mxu0 %v1634
  %1656 = vmatprep.subr.bf16.mxu0 0
  %1657 = vmatpush1.bf16.msra.mxu0 %v1635
  %1658 = vmatprep.subr.bf16.mxu0 0
  %1659 = vmatpush1.bf16.msra.mxu0 %v1636
  %1660 = vmatprep.subr.bf16.mxu0 0
  %1661 = vmatpush1.bf16.msra.mxu0 0
  %1662 = vmatprep.subr.bf16.mxu0 0
  %1663 = vmatpush1.bf16.msra.mxu0 0
  %1664 = vmatprep.subr.bf16.mxu0 0
  %1665 = vmatpush1.bf16.msra.mxu0 0
  %1666 = vmatprep.subr.bf16.mxu0 0
  %1667 = vmatpush1.bf16.msra.mxu0 0
  %1668 = vmatprep.subr.bf16.mxu0 0
  %1669 = vmatpush1.bf16.msra.mxu0 0
  %1670 = vmatprep.subr.bf16.mxu0 0
  %1671 = vmatpush1.bf16.msra.mxu0 0
  %1672 = vmatprep.subr.bf16.mxu0 0
  %1673 = vmatpush1.bf16.msra.mxu0 0
  %1674 = vmatprep.subr.bf16.mxu0 0
  %1675 = vmatpush1.bf16.msra.mxu0 0
  %1676 = vmatprep.mubr.bf16.mxu0 0
  %1677 = vmatmul.mubr.bf16.gmra.mrb[0].mxu0 %v407
  %v1678 = vpop.f32.mrb[0].mxu0
  %v1679 = vadd.f32 %v1642, %v1678
  %v1680 = vpop.f32.mrb[0].mxu0
  %v1681 = vpop.f32.mrb[0].mxu0
  %v1682 = vadd.f32 %v1642, %v1681
  %v1683 = vpop.f32.mrb[0].mxu0
  %1684 = vmatprep.mubr.bf16.mxu0 0
  %1685 = vmatmul.mubr.bf16.gmra.mrb[0].mxu0 %v408
  %v1686 = vpop.f32.mrb[0].mxu0
  %v1687 = vadd.f32 %v1642, %v1686
  %v1688 = vpop.f32.mrb[0].mxu0
  %v1689 = vpop.f32.mrb[0].mxu0
  %v1690 = vadd.f32 %v1642, %v1689
  %v1691 = vpop.f32.mrb[0].mxu0
  %1692 = vmatprep.mubr.bf16.mxu0 0
  %1693 = vmatmul.mubr.bf16.gmra.mrb[0].mxu0 %v409
  %v1694 = vpop.f32.mrb[0].mxu0
  %v1695 = vadd.f32 %v1642, %v1694
  %v1696 = vpop.f32.mrb[0].mxu0
  %v1697 = vpop.f32.mrb[0].mxu0
  %v1698 = vadd.f32 %v1642, %v1697
  %v1699 = vpop.f32.mrb[0].mxu0
  %1700 = vmatprep.mubr.bf16.mxu0 0
  %1701 = vmatmul.mubr.bf16.gmra.mrb[0].mxu0 %v410
  %v1702 = vpop.f32.mrb[0].mxu0
  %v1703 = vadd.f32 %v1642, %v1702
  %v1704 = vpop.f32.mrb[0].mxu0
  %v1705 = vpop.f32.mrb[0].mxu0
  %v1706 = vadd.f32 %v1642, %v1705
  %v1707 = vpop.f32.mrb[0].mxu0
  %1708 = vmatprep.mubr.bf16.mxu0 0
  %1709 = vmatmul.mubr.bf16.gmra.mrb[0].mxu0 %v411
  %v1710 = vpop.f32.mrb[0].mxu0
  %v1711 = vadd.f32 %v1642, %v1710
  %v1712 = vpop.f32.mrb[0].mxu0
  %v1713 = vpop.f32.mrb[0].mxu0
  %v1714 = vadd.f32 %v1642, %v1713
  %v1715 = vpop.f32.mrb[0].mxu0
  %1716 = vmatprep.mubr.bf16.mxu0 0
  %1717 = vmatmul.mubr.bf16.gmra.mrb[0].mxu0 %v412
  %v1718 = vpop.f32.mrb[0].mxu0
  %v1719 = vadd.f32 %v1642, %v1718
  %v1720 = vpop.f32.mrb[0].mxu0
  %v1721 = vpop.f32.mrb[0].mxu0
  %v1722 = vadd.f32 %v1642, %v1721
  %v1723 = vpop.f32.mrb[0].mxu0
  %1724 = vmatprep.mubr.bf16.mxu0 0
  %1725 = vmatmul.mubr.bf16.gmra.mrb[0].mxu0 %v413
  %v1726 = vpop.f32.mrb[0].mxu0
  %v1727 = vadd.f32 %v1642, %v1726
  %v1728 = vpop.f32.mrb[0].mxu0
  %v1729 = vpop.f32.mrb[0].mxu0
  %v1730 = vadd.f32 %v1642, %v1729
  %v1731 = vpop.f32.mrb[0].mxu0
  %1732 = vmatprep.mubr.bf16.mxu0 0
  %1733 = vmatmul.mubr.bf16.gmra.mrb[0].mxu0 %v414
  %v1734 = vpop.f32.mrb[0].mxu0
  %v1735 = vadd.f32 %v1642, %v1734
  %v1736 = vpop.f32.mrb[0].mxu0
  %v1737 = vpop.f32.mrb[0].mxu0
  %v1738 = vadd.f32 %v1642, %v1737
  %v1739 = vpop.f32.mrb[0].mxu0
  %1740 = vmatprep.mubr.bf16.mxu0 0
  %1741 = vmatmul.mubr.bf16.gmra.mrb[0].mxu0 %v415
  %v1742 = vpop.f32.mrb[0].mxu0
  %v1743 = vadd.f32 %v1642, %v1742
  %v1744 = vpop.f32.mrb[0].mxu0
  %v1745 = vpop.f32.mrb[0].mxu0
  %v1746 = vadd.f32 %v1642, %v1745
  %v1747 = vpop.f32.mrb[0].mxu0
  %1748 = vmatprep.mubr.bf16.mxu0 0
  %1749 = vmatmul.mubr.bf16.gmra.mrb[0].mxu0 %v416
  %v1750 = vpop.f32.mrb[0].mxu0
  %v1751 = vadd.f32 %v1642, %v1750
  %v1752 = vpop.f32.mrb[0].mxu0
  %v1753 = vpop.f32.mrb[0].mxu0
  %v1754 = vadd.f32 %v1642, %v1753
  %v1755 = vpop.f32.mrb[0].mxu0
  %1756 = vmatprep.mubr.bf16.mxu0 0
  %1757 = vmatmul.mubr.bf16.gmra.mrb[0].mxu0 %v417
  %v1758 = vpop.f32.mrb[0].mxu0
  %v1759 = vadd.f32 %v1642, %v1758
  %v1760 = vpop.f32.mrb[0].mxu0
  %v1761 = vpop.f32.mrb[0].mxu0
  %v1762 = vadd.f32 %v1642, %v1761
  %v1763 = vpop.f32.mrb[0].mxu0
  %1764 = vmatprep.mubr.bf16.mxu0 0
  %1765 = vmatmul.mubr.bf16.gmra.mrb[0].mxu0 %v418
  %v1766 = vpop.f32.mrb[0].mxu0
  %v1767 = vadd.f32 %v1642, %v1766
  %v1768 = vpop.f32.mrb[0].mxu0
  %v1769 = vpop.f32.mrb[0].mxu0
  %v1770 = vadd.f32 %v1642, %v1769
  %v1771 = vpop.f32.mrb[0].mxu0
  %1772 = vmatprep.mubr.bf16.mxu0 0
  %1773 = vmatmul.mubr.bf16.gmra.mrb[0].mxu0 %v419
  %v1774 = vpop.f32.mrb[0].mxu0
  %v1775 = vadd.f32 %v1642, %v1774
  %v1776 = vpop.f32.mrb[0].mxu0
  %v1777 = vpop.f32.mrb[0].mxu0
  %v1778 = vadd.f32 %v1642, %v1777
  %v1779 = vpop.f32.mrb[0].mxu0
  %1780 = vmatprep.mubr.bf16.mxu0 0
  %1781 = vmatmul.mubr.bf16.gmra.mrb[0].mxu0 %v420
  %v1782 = vpop.f32.mrb[0].mxu0
  %v1783 = vadd.f32 %v1642, %v1782
  %v1784 = vpop.f32.mrb[0].mxu0
  %v1785 = vpop.f32.mrb[0].mxu0
  %v1786 = vadd.f32 %v1642, %v1785
  %v1787 = vpop.f32.mrb[0].mxu0
  %1788 = vmatprep.mubr.bf16.mxu0 0
  %1789 = vmatmul.mubr.bf16.gmra.mrb[0].mxu0 %v421
  %v1790 = vpop.f32.mrb[0].mxu0
  %v1791 = vadd.f32 %v1642, %v1790
  %v1792 = vpop.f32.mrb[0].mxu0
  %v1793 = vpop.f32.mrb[0].mxu0
  %v1794 = vadd.f32 %v1642, %v1793
  %v1795 = vpop.f32.mrb[0].mxu0
  %1796 = vmatprep.mubr.bf16.mxu0 0
  %1797 = vmatmul.mubr.bf16.gmra.mrb[0].mxu0 %v422
  %v1798 = vpop.f32.mrb[0].mxu0
  %v1799 = vadd.f32 %v1642, %v1798
  %v1800 = vpop.f32.mrb[0].mxu0
  %v1801 = vpop.f32.mrb[0].mxu0
  %v1802 = vadd.f32 %v1642, %v1801
  %v1803 = vpop.f32.mrb[0].mxu0
  %1804 = vdwg.mxu0
  %v1805 = vmax.f32 %v1679, 0.0
  %v1806 = vmax.f32 %v1682, 0.0
  %v1807 = vmax.f32 %v1687, 0.0
  %v1808 = vmax.f32 %v1690, 0.0
  %v1809 = vmax.f32 %v1695, 0.0
  %v1810 = vmax.f32 %v1698, 0.0
  %v1811 = vmax.f32 %v1703, 0.0
  %v1812 = vmax.f32 %v1706, 0.0
  %v1813 = vmax.f32 %v1711, 0.0
  %v1814 = vmax.f32 %v1714, 0.0
  %v1815 = vmax.f32 %v1719, 0.0
  %v1816 = vmax.f32 %v1722, 0.0
  %v1817 = vmax.f32 %v1727, 0.0
  %v1818 = vmax.f32 %v1730, 0.0
  %v1819 = vmax.f32 %v1735, 0.0
  %v1820 = vmax.f32 %v1738, 0.0
  %v1821 = vmax.f32 %v1743, 0.0
  %v1822 = vmax.f32 %v1746, 0.0
  %v1823 = vmax.f32 %v1751, 0.0
  %v1824 = vmax.f32 %v1754, 0.0
  %v1825 = vmax.f32 %v1759, 0.0
  %v1826 = vmax.f32 %v1762, 0.0
  %v1827 = vmax.f32 %v1767, 0.0
  %v1828 = vmax.f32 %v1770, 0.0
  %v1829 = vmax.f32 %v1775, 0.0
  %v1830 = vmax.f32 %v1778, 0.0
  %v1831 = vmax.f32 %v1783, 0.0
  %v1832 = vmax.f32 %v1786, 0.0
  %v1833 = vmax.f32 %v1791, 0.0
  %v1834 = vmax.f32 %v1794, 0.0
  %v1835 = vmax.f32 %v1799, 0.0
  %v1836 = vmax.f32 %v1802, 0.0
  %v1837 = vld [vmem:[%s1] sm:$0xff]
  %v1838 = vld [vmem:[%s1 + $0x8] sm:$0xff]
  %v1839 = vld [vmem:[%s1 + $0x10] sm:$0xff]
  %v1840 = vld [vmem:[%s1 + $0x18] sm:$0xff]
  %v1841 = vld [vmem:[%s1 + $0x20] sm:$0xff]
  %v1842 = vld [vmem:[%s1 + $0x28] sm:$0xff]
  %v1843 = vld [vmem:[%s1 + $0x30] sm:$0xff]
  %v1844 = vld [vmem:[%s1 + $0x38] sm:$0xff]
  %v1845 = vld [vmem:[%s1 + $0x40] sm:$0xff]
  %v1846 = vld [vmem:[%s1 + $0x48] sm:$0xff]
  %v1847 = vld [vmem:[%s1 + $0x50] sm:$0xff]
  %v1848 = vld [vmem:[%s1 + $0x58] sm:$0xff]
  %v1849 = vld [vmem:[%s1 + $0x60] sm:$0xff]
  %v1850 = vld [vmem:[%s1 + $0x68] sm:$0xff]
  %v1851 = vld [vmem:[%s1 + $0x70] sm:$0xff]
  %v1852 = vld [vmem:[%s1 + $0x78] sm:$0xff]
  %v1853 = vld [vmem:[%s2] sm:$0x3]
  %1855 = vset.pattern.permute.xlu0 0
  %1856 = vperm.xlu0 %1855, %v1837
  %v1857 = vpop.permute.xlu0 %1856
  %1860 = vset.pattern.permute.xlu0 0
  %1861 = vperm.xlu0 %1860, %v1838
  %v1862 = vpop.permute.xlu0 %1861
  %1865 = vset.pattern.permute.xlu0 0
  %1866 = vperm.xlu0 %1865, %v1839
  %v1867 = vpop.permute.xlu0 %1866
  %1870 = vset.pattern.permute.xlu0 0
  %1871 = vperm.xlu0 %1870, %v1840
  %v1872 = vpop.permute.xlu0 %1871
  %1875 = vset.pattern.permute.xlu0 0
  %1876 = vperm.xlu0 %1875, %v1841
  %v1877 = vpop.permute.xlu0 %1876
  %1880 = vset.pattern.permute.xlu0 0
  %1881 = vperm.xlu0 %1880, %v1842
  %v1882 = vpop.permute.xlu0 %1881
  %1885 = vset.pattern.permute.xlu0 0
  %1886 = vperm.xlu0 %1885, %v1843
  %v1887 = vpop.permute.xlu0 %1886
  %1890 = vset.pattern.permute.xlu0 0
  %1891 = vperm.xlu0 %1890, %v1844
  %v1892 = vpop.permute.xlu0 %1891
  %1895 = vset.pattern.permute.xlu0 0
  %1896 = vperm.xlu0 %1895, %v1845
  %v1897 = vpop.permute.xlu0 %1896
  %1900 = vset.pattern.permute.xlu0 0
  %1901 = vperm.xlu0 %1900, %v1846
  %v1902 = vpop.permute.xlu0 %1901
  %1905 = vset.pattern.permute.xlu0 0
  %1906 = vperm.xlu0 %1905, %v1847
  %v1907 = vpop.permute.xlu0 %1906
  %1910 = vset.pattern.permute.xlu0 0
  %1911 = vperm.xlu0 %1910, %v1848
  %v1912 = vpop.permute.xlu0 %1911
  %1915 = vset.pattern.permute.xlu0 0
  %1916 = vperm.xlu0 %1915, %v1849
  %v1917 = vpop.permute.xlu0 %1916
  %1920 = vset.pattern.permute.xlu0 0
  %1921 = vperm.xlu0 %1920, %v1850
  %v1922 = vpop.permute.xlu0 %1921
  %1925 = vset.pattern.permute.xlu0 0
  %1926 = vperm.xlu0 %1925, %v1851
  %v1927 = vpop.permute.xlu0 %1926
  %1930 = vset.pattern.permute.xlu0 0
  %1931 = vperm.xlu0 %1930, %v1852
  %v1932 = vpop.permute.xlu0 %1931
  %v1934 = vlaneseq
  %v1935 = vshrl.u32 %v1934, 7
  %v1936 = vsub.s32 0, %v1935
  %v1937 = vrot.slane %v1853, %v1936
  %v1938 = vsub.f32 %v1857, %v1937
  %v1939 = vsub.f32 %v1862, %v1937
  %v1940 = vsub.f32 %v1867, %v1937
  %v1941 = vsub.f32 %v1872, %v1937
  %v1942 = vsub.f32 %v1877, %v1937
  %v1943 = vsub.f32 %v1882, %v1937
  %v1944 = vsub.f32 %v1887, %v1937
  %v1945 = vsub.f32 %v1892, %v1937
  %v1946 = vsub.f32 %v1897, %v1937
  %v1947 = vsub.f32 %v1902, %v1937
  %v1948 = vsub.f32 %v1907, %v1937
  %v1949 = vsub.f32 %v1912, %v1937
  %v1950 = vsub.f32 %v1917, %v1937
  %v1951 = vsub.f32 %v1922, %v1937
  %v1952 = vsub.f32 %v1927, %v1937
  %v1953 = vsub.f32 %v1932, %v1937
  %v1954 = vmul.f32 %v1938, %v1938
  %v1955 = vmul.f32 %v1939, %v1939
  %v1956 = vmul.f32 %v1940, %v1940
  %v1957 = vmul.f32 %v1941, %v1941
  %v1958 = vmul.f32 %v1942, %v1942
  %v1959 = vmul.f32 %v1943, %v1943
  %v1960 = vmul.f32 %v1944, %v1944
  %v1961 = vmul.f32 %v1945, %v1945
  %v1962 = vmul.f32 %v1946, %v1946
  %v1963 = vmul.f32 %v1947, %v1947
  %v1964 = vmul.f32 %v1948, %v1948
  %v1965 = vmul.f32 %v1949, %v1949
  %v1966 = vmul.f32 %v1950, %v1950
  %v1967 = vmul.f32 %v1951, %v1951
  %v1968 = vmul.f32 %v1952, %v1952
  %v1969 = vmul.f32 %v1953, %v1953
  %1970 = vset.pattern.permute.xlu0 1
  %1971 = vperm.xlu0 %1970, %v1837
  %v1972 = vpop.permute.xlu0 %1971
  %1974 = vset.pattern.permute.xlu0 1
  %1975 = vperm.xlu0 %1974, %v1838
  %v1976 = vpop.permute.xlu0 %1975
  %1978 = vset.pattern.permute.xlu0 1
  %1979 = vperm.xlu0 %1978, %v1839
  %v1980 = vpop.permute.xlu0 %1979
  %1982 = vset.pattern.permute.xlu0 1
  %1983 = vperm.xlu0 %1982, %v1840
  %v1984 = vpop.permute.xlu0 %1983
  %1986 = vset.pattern.permute.xlu0 1
  %1987 = vperm.xlu0 %1986, %v1841
  %v1988 = vpop.permute.xlu0 %1987
  %1990 = vset.pattern.permute.xlu0 1
  %1991 = vperm.xlu0 %1990, %v1842
  %v1992 = vpop.permute.xlu0 %1991
  %1994 = vset.pattern.permute.xlu0 1
  %1995 = vperm.xlu0 %1994, %v1843
  %v1996 = vpop.permute.xlu0 %1995
  %1998 = vset.pattern.permute.xlu0 1
  %1999 = vperm.xlu0 %1998, %v1844
  %v2000 = vpop.permute.xlu0 %1999
  %2002 = vset.pattern.permute.xlu0 1
  %2003 = vperm.xlu0 %2002, %v1845
  %v2004 = vpop.permute.xlu0 %2003
  %2006 = vset.pattern.permute.xlu0 1
  %2007 = vperm.xlu0 %2006, %v1846
  %v2008 = vpop.permute.xlu0 %2007
  %2010 = vset.pattern.permute.xlu0 1
  %2011 = vperm.xlu0 %2010, %v1847
  %v2012 = vpop.permute.xlu0 %2011
  %2014 = vset.pattern.permute.xlu0 1
  %2015 = vperm.xlu0 %2014, %v1848
  %v2016 = vpop.permute.xlu0 %2015
  %2018 = vset.pattern.permute.xlu0 1
  %2019 = vperm.xlu0 %2018, %v1849
  %v2020 = vpop.permute.xlu0 %2019
  %2022 = vset.pattern.permute.xlu0 1
  %2023 = vperm.xlu0 %2022, %v1850
  %v2024 = vpop.permute.xlu0 %2023
  %2026 = vset.pattern.permute.xlu0 1
  %2027 = vperm.xlu0 %2026, %v1851
  %v2028 = vpop.permute.xlu0 %2027
  %2030 = vset.pattern.permute.xlu0 1
  %2031 = vperm.xlu0 %2030, %v1852
  %v2032 = vpop.permute.xlu0 %2031
  %v2034 = vlaneseq
  %v2035 = vshrl.u32 %v2034, 7
  %v2036 = vsub.s32 1, %v2035
  %v2037 = vrot.slane %v1853, %v2036
  %v2038 = vsub.f32 %v1972, %v2037
  %v2039 = vsub.f32 %v1976, %v2037
  %v2040 = vsub.f32 %v1980, %v2037
  %v2041 = vsub.f32 %v1984, %v2037
  %v2042 = vsub.f32 %v1988, %v2037
  %v2043 = vsub.f32 %v1992, %v2037
  %v2044 = vsub.f32 %v1996, %v2037
  %v2045 = vsub.f32 %v2000, %v2037
  %v2046 = vsub.f32 %v2004, %v2037
  %v2047 = vsub.f32 %v2008, %v2037
  %v2048 = vsub.f32 %v2012, %v2037
  %v2049 = vsub.f32 %v2016, %v2037
  %v2050 = vsub.f32 %v2020, %v2037
  %v2051 = vsub.f32 %v2024, %v2037
  %v2052 = vsub.f32 %v2028, %v2037
  %v2053 = vsub.f32 %v2032, %v2037
  %v2054 = vmul.f32 %v2038, %v2038
  %v2055 = vmul.f32 %v2039, %v2039
  %v2056 = vmul.f32 %v2040, %v2040
  %v2057 = vmul.f32 %v2041, %v2041
  %v2058 = vmul.f32 %v2042, %v2042
  %v2059 = vmul.f32 %v2043, %v2043
  %v2060 = vmul.f32 %v2044, %v2044
  %v2061 = vmul.f32 %v2045, %v2045
  %v2062 = vmul.f32 %v2046, %v2046
  %v2063 = vmul.f32 %v2047, %v2047
  %v2064 = vmul.f32 %v2048, %v2048
  %v2065 = vmul.f32 %v2049, %v2049
  %v2066 = vmul.f32 %v2050, %v2050
  %v2067 = vmul.f32 %v2051, %v2051
  %v2068 = vmul.f32 %v2052, %v2052
  %v2069 = vmul.f32 %v2053, %v2053
  %v2070 = vadd.f32 %v1954, %v2054
  %v2071 = vadd.f32 %v1955, %v2055
  %v2072 = vadd.f32 %v1956, %v2056
  %v2073 = vadd.f32 %v1957, %v2057
  %v2074 = vadd.f32 %v1958, %v2058
  %v2075 = vadd.f32 %v1959, %v2059
  %v2076 = vadd.f32 %v1960, %v2060
  %v2077 = vadd.f32 %v1961, %v2061
  %v2078 = vadd.f32 %v1962, %v2062
  %v2079 = vadd.f32 %v1963, %v2063
  %v2080 = vadd.f32 %v1964, %v2064
  %v2081 = vadd.f32 %v1965, %v2065
  %v2082 = vadd.f32 %v1966, %v2066
  %v2083 = vadd.f32 %v1967, %v2067
  %v2084 = vadd.f32 %v1968, %v2068
  %v2085 = vadd.f32 %v1969, %v2069
  %v2086 = vld [vmem:[%s4] sm:$0xff]
  %v2087 = vld [vmem:[%s4 + $0x8] sm:$0xff]
  %v2088 = vld [vmem:[%s4 + $0x10] sm:$0xff]
  %v2089 = vld [vmem:[%s4 + $0x18] sm:$0xff]
  %v2090 = vld [vmem:[%s4 + $0x20] sm:$0xff]
  %v2091 = vld [vmem:[%s4 + $0x28] sm:$0xff]
  %v2092 = vld [vmem:[%s4 + $0x30] sm:$0xff]
  %v2093 = vld [vmem:[%s4 + $0x38] sm:$0xff]
  %v2094 = vld [vmem:[%s4 + $0x40] sm:$0xff]
  %v2095 = vld [vmem:[%s4 + $0x48] sm:$0xff]
  %v2096 = vld [vmem:[%s4 + $0x50] sm:$0xff]
  %v2097 = vld [vmem:[%s4 + $0x58] sm:$0xff]
  %v2098 = vld [vmem:[%s4 + $0x60] sm:$0xff]
  %v2099 = vld [vmem:[%s4 + $0x68] sm:$0xff]
  %v2100 = vld [vmem:[%s4 + $0x70] sm:$0xff]
  %v2101 = vld [vmem:[%s4 + $0x78] sm:$0xff]
  %v2102 = vld [vmem:[%s5] sm:$0x1]
  %2103 = vset.pattern.permute.xlu0 0
  %2104 = vperm.xlu0 %2103, %v2086
  %v2105 = vpop.permute.xlu0 %2104
  %2106 = vset.pattern.permute.xlu0 0
  %2107 = vperm.xlu0 %2106, %v2087
  %v2108 = vpop.permute.xlu0 %2107
  %2109 = vset.pattern.permute.xlu0 0
  %2110 = vperm.xlu0 %2109, %v2088
  %v2111 = vpop.permute.xlu0 %2110
  %2112 = vset.pattern.permute.xlu0 0
  %2113 = vperm.xlu0 %2112, %v2089
  %v2114 = vpop.permute.xlu0 %2113
  %2115 = vset.pattern.permute.xlu0 0
  %2116 = vperm.xlu0 %2115, %v2090
  %v2117 = vpop.permute.xlu0 %2116
  %2118 = vset.pattern.permute.xlu0 0
  %2119 = vperm.xlu0 %2118, %v2091
  %v2120 = vpop.permute.xlu0 %2119
  %2121 = vset.pattern.permute.xlu0 0
  %2122 = vperm.xlu0 %2121, %v2092
  %v2123 = vpop.permute.xlu0 %2122
  %2124 = vset.pattern.permute.xlu0 0
  %2125 = vperm.xlu0 %2124, %v2093
  %v2126 = vpop.permute.xlu0 %2125
  %2127 = vset.pattern.permute.xlu0 0
  %2128 = vperm.xlu0 %2127, %v2094
  %v2129 = vpop.permute.xlu0 %2128
  %2130 = vset.pattern.permute.xlu0 0
  %2131 = vperm.xlu0 %2130, %v2095
  %v2132 = vpop.permute.xlu0 %2131
  %2133 = vset.pattern.permute.xlu0 0
  %2134 = vperm.xlu0 %2133, %v2096
  %v2135 = vpop.permute.xlu0 %2134
  %2136 = vset.pattern.permute.xlu0 0
  %2137 = vperm.xlu0 %2136, %v2097
  %v2138 = vpop.permute.xlu0 %2137
  %2139 = vset.pattern.permute.xlu0 0
  %2140 = vperm.xlu0 %2139, %v2098
  %v2141 = vpop.permute.xlu0 %2140
  %2142 = vset.pattern.permute.xlu0 0
  %2143 = vperm.xlu0 %2142, %v2099
  %v2144 = vpop.permute.xlu0 %2143
  %2145 = vset.pattern.permute.xlu0 0
  %2146 = vperm.xlu0 %2145, %v2100
  %v2147 = vpop.permute.xlu0 %2146
  %2148 = vset.pattern.permute.xlu0 0
  %2149 = vperm.xlu0 %2148, %v2101
  %v2150 = vpop.permute.xlu0 %2149
  %v2151 = vlaneseq
  %v2152 = vshrl.u32 %v2151, 7
  %v2153 = vsub.s32 0, %v2152
  %v2154 = vrot.slane %v2102, %v2153
  %vm2155 = vcmp.eq.s32.totalorder %v2105, %v2154
  %vm2156 = vcmp.eq.s32.totalorder %v2108, %v2154
  %vm2157 = vcmp.eq.s32.totalorder %v2111, %v2154
  %vm2158 = vcmp.eq.s32.totalorder %v2114, %v2154
  %vm2159 = vcmp.eq.s32.totalorder %v2117, %v2154
  %vm2160 = vcmp.eq.s32.totalorder %v2120, %v2154
  %vm2161 = vcmp.eq.s32.totalorder %v2123, %v2154
  %vm2162 = vcmp.eq.s32.totalorder %v2126, %v2154
  %vm2163 = vcmp.eq.s32.totalorder %v2129, %v2154
  %vm2164 = vcmp.eq.s32.totalorder %v2132, %v2154
  %vm2165 = vcmp.eq.s32.totalorder %v2135, %v2154
  %vm2166 = vcmp.eq.s32.totalorder %v2138, %v2154
  %vm2167 = vcmp.eq.s32.totalorder %v2141, %v2154
  %vm2168 = vcmp.eq.s32.totalorder %v2144, %v2154
  %vm2169 = vcmp.eq.s32.totalorder %v2147, %v2154
  %vm2170 = vcmp.eq.s32.totalorder %v2150, %v2154
  %v2171 = vsel %vm2155, %v2070, 1e+30
  %v2172 = vsel %vm2156, %v2071, 1e+30
  %v2173 = vsel %vm2157, %v2072, 1e+30
  %v2174 = vsel %vm2158, %v2073, 1e+30
  %v2175 = vsel %vm2159, %v2074, 1e+30
  %v2176 = vsel %vm2160, %v2075, 1e+30
  %v2177 = vsel %vm2161, %v2076, 1e+30
  %v2178 = vsel %vm2162, %v2077, 1e+30
  %v2179 = vsel %vm2163, %v2078, 1e+30
  %v2180 = vsel %vm2164, %v2079, 1e+30
  %v2181 = vsel %vm2165, %v2080, 1e+30
  %v2182 = vsel %vm2166, %v2081, 1e+30
  %v2183 = vsel %vm2167, %v2082, 1e+30
  %v2184 = vsel %vm2168, %v2083, 1e+30
  %v2185 = vsel %vm2169, %v2084, 1e+30
  %v2186 = vsel %vm2170, %v2085, 1e+30
  %v2187 = vlaneseq
  %v2188 = vand.u32 %v2187, 127
  %vm2189 = vcmask 130048
  %v2190 = vsel %vm2189, %v2171, inf
  %2191 = vmin.xlane.f32.xlu0 %v2190
  %v2192 = vpop.xlane.xlu0 %2191
  %v2193 = vsel %vm2189, %v2172, inf
  %2194 = vmin.xlane.f32.xlu0 %v2193
  %v2195 = vpop.xlane.xlu0 %2194
  %v2196 = vsel %vm2189, %v2173, inf
  %2197 = vmin.xlane.f32.xlu0 %v2196
  %v2198 = vpop.xlane.xlu0 %2197
  %v2199 = vsel %vm2189, %v2174, inf
  %2200 = vmin.xlane.f32.xlu0 %v2199
  %v2201 = vpop.xlane.xlu0 %2200
  %v2202 = vsel %vm2189, %v2175, inf
  %2203 = vmin.xlane.f32.xlu0 %v2202
  %v2204 = vpop.xlane.xlu0 %2203
  %v2205 = vsel %vm2189, %v2176, inf
  %2206 = vmin.xlane.f32.xlu0 %v2205
  %v2207 = vpop.xlane.xlu0 %2206
  %v2208 = vsel %vm2189, %v2177, inf
  %2209 = vmin.xlane.f32.xlu0 %v2208
  %v2210 = vpop.xlane.xlu0 %2209
  %v2211 = vsel %vm2189, %v2178, inf
  %2212 = vmin.xlane.f32.xlu0 %v2211
  %v2213 = vpop.xlane.xlu0 %2212
  %v2214 = vsel %vm2189, %v2179, inf
  %2215 = vmin.xlane.f32.xlu0 %v2214
  %v2216 = vpop.xlane.xlu0 %2215
  %v2217 = vsel %vm2189, %v2180, inf
  %2218 = vmin.xlane.f32.xlu0 %v2217
  %v2219 = vpop.xlane.xlu0 %2218
  %v2220 = vsel %vm2189, %v2181, inf
  %2221 = vmin.xlane.f32.xlu0 %v2220
  %v2222 = vpop.xlane.xlu0 %2221
  %v2223 = vsel %vm2189, %v2182, inf
  %2224 = vmin.xlane.f32.xlu0 %v2223
  %v2225 = vpop.xlane.xlu0 %2224
  %v2226 = vsel %vm2189, %v2183, inf
  %2227 = vmin.xlane.f32.xlu0 %v2226
  %v2228 = vpop.xlane.xlu0 %2227
  %v2229 = vsel %vm2189, %v2184, inf
  %2230 = vmin.xlane.f32.xlu0 %v2229
  %v2231 = vpop.xlane.xlu0 %2230
  %v2232 = vsel %vm2189, %v2185, inf
  %2233 = vmin.xlane.f32.xlu0 %v2232
  %v2234 = vpop.xlane.xlu0 %2233
  %v2235 = vsel %vm2189, %v2186, inf
  %2236 = vmin.xlane.f32.xlu0 %v2235
  %v2237 = vpop.xlane.xlu0 %2236
  %vm2238 = vcmp.eq.f32.partialorder %v2171, %v2192
  %vm2239 = vcmp.eq.f32.partialorder %v2172, %v2195
  %vm2240 = vcmp.eq.f32.partialorder %v2173, %v2198
  %vm2241 = vcmp.eq.f32.partialorder %v2174, %v2201
  %vm2242 = vcmp.eq.f32.partialorder %v2175, %v2204
  %vm2243 = vcmp.eq.f32.partialorder %v2176, %v2207
  %vm2244 = vcmp.eq.f32.partialorder %v2177, %v2210
  %vm2245 = vcmp.eq.f32.partialorder %v2178, %v2213
  %vm2246 = vcmp.eq.f32.partialorder %v2179, %v2216
  %vm2247 = vcmp.eq.f32.partialorder %v2180, %v2219
  %vm2248 = vcmp.eq.f32.partialorder %v2181, %v2222
  %vm2249 = vcmp.eq.f32.partialorder %v2182, %v2225
  %vm2250 = vcmp.eq.f32.partialorder %v2183, %v2228
  %vm2251 = vcmp.eq.f32.partialorder %v2184, %v2231
  %vm2252 = vcmp.eq.f32.partialorder %v2185, %v2234
  %vm2253 = vcmp.eq.f32.partialorder %v2186, %v2237
  %v2254 = vsel %vm2238, %v2188, 16
  %v2255 = vsel %vm2239, %v2188, 16
  %v2256 = vsel %vm2240, %v2188, 16
  %v2257 = vsel %vm2241, %v2188, 16
  %v2258 = vsel %vm2242, %v2188, 16
  %v2259 = vsel %vm2243, %v2188, 16
  %v2260 = vsel %vm2244, %v2188, 16
  %v2261 = vsel %vm2245, %v2188, 16
  %v2262 = vsel %vm2246, %v2188, 16
  %v2263 = vsel %vm2247, %v2188, 16
  %v2264 = vsel %vm2248, %v2188, 16
  %v2265 = vsel %vm2249, %v2188, 16
  %v2266 = vsel %vm2250, %v2188, 16
  %v2267 = vsel %vm2251, %v2188, 16
  %v2268 = vsel %vm2252, %v2188, 16
  %v2269 = vsel %vm2253, %v2188, 16
  %v2270 = vsel %vm2189, %v2254, 2147483647
  %v2271 = vand.u32 %v2270, 65535
  %v2272 = vshra.s32 %v2270, 16
  %v2273 = vcvt.s32.f32 %v2271
  %v2274 = vcvt.s32.f32 %v2272
  %2275 = vmin.xlane.f32.xlu0 %v2274
  %v2276 = vpop.xlane.xlu0 %2275
  %vm2277 = vcmp.eq.f32.partialorder %v2274, %v2276
  %v2278 = vsel %vm2277, %v2273, inf
  %2279 = vmin.xlane.f32.xlu0 %v2278
  %v2280 = vpop.xlane.xlu0 %2279
  %v2281 = vcvt.f32.s32 %v2280
  %v2282 = vcvt.f32.s32 %v2276
  %v2283 = vshll.u32 %v2282, 16
  %v2284 = vadd.s32 %v2283, %v2281
  %v2285 = vsel %vm2189, %v2255, 2147483647
  %v2286 = vand.u32 %v2285, 65535
  %v2287 = vshra.s32 %v2285, 16
  %v2288 = vcvt.s32.f32 %v2286
  %v2289 = vcvt.s32.f32 %v2287
  %2290 = vmin.xlane.f32.xlu0 %v2289
  %v2291 = vpop.xlane.xlu0 %2290
  %vm2292 = vcmp.eq.f32.partialorder %v2289, %v2291
  %v2293 = vsel %vm2292, %v2288, inf
  %2294 = vmin.xlane.f32.xlu0 %v2293
  %v2295 = vpop.xlane.xlu0 %2294
  %v2296 = vcvt.f32.s32 %v2295
  %v2297 = vcvt.f32.s32 %v2291
  %v2298 = vshll.u32 %v2297, 16
  %v2299 = vadd.s32 %v2298, %v2296
  %v2300 = vsel %vm2189, %v2256, 2147483647
  %v2301 = vand.u32 %v2300, 65535
  %v2302 = vshra.s32 %v2300, 16
  %v2303 = vcvt.s32.f32 %v2301
  %v2304 = vcvt.s32.f32 %v2302
  %2305 = vmin.xlane.f32.xlu0 %v2304
  %v2306 = vpop.xlane.xlu0 %2305
  %vm2307 = vcmp.eq.f32.partialorder %v2304, %v2306
  %v2308 = vsel %vm2307, %v2303, inf
  %2309 = vmin.xlane.f32.xlu0 %v2308
  %v2310 = vpop.xlane.xlu0 %2309
  %v2311 = vcvt.f32.s32 %v2310
  %v2312 = vcvt.f32.s32 %v2306
  %v2313 = vshll.u32 %v2312, 16
  %v2314 = vadd.s32 %v2313, %v2311
  %v2315 = vsel %vm2189, %v2257, 2147483647
  %v2316 = vand.u32 %v2315, 65535
  %v2317 = vshra.s32 %v2315, 16
  %v2318 = vcvt.s32.f32 %v2316
  %v2319 = vcvt.s32.f32 %v2317
  %2320 = vmin.xlane.f32.xlu0 %v2319
  %v2321 = vpop.xlane.xlu0 %2320
  %vm2322 = vcmp.eq.f32.partialorder %v2319, %v2321
  %v2323 = vsel %vm2322, %v2318, inf
  %2324 = vmin.xlane.f32.xlu0 %v2323
  %v2325 = vpop.xlane.xlu0 %2324
  %v2326 = vcvt.f32.s32 %v2325
  %v2327 = vcvt.f32.s32 %v2321
  %v2328 = vshll.u32 %v2327, 16
  %v2329 = vadd.s32 %v2328, %v2326
  %v2330 = vsel %vm2189, %v2258, 2147483647
  %v2331 = vand.u32 %v2330, 65535
  %v2332 = vshra.s32 %v2330, 16
  %v2333 = vcvt.s32.f32 %v2331
  %v2334 = vcvt.s32.f32 %v2332
  %2335 = vmin.xlane.f32.xlu0 %v2334
  %v2336 = vpop.xlane.xlu0 %2335
  %vm2337 = vcmp.eq.f32.partialorder %v2334, %v2336
  %v2338 = vsel %vm2337, %v2333, inf
  %2339 = vmin.xlane.f32.xlu0 %v2338
  %v2340 = vpop.xlane.xlu0 %2339
  %v2341 = vcvt.f32.s32 %v2340
  %v2342 = vcvt.f32.s32 %v2336
  %v2343 = vshll.u32 %v2342, 16
  %v2344 = vadd.s32 %v2343, %v2341
  %v2345 = vsel %vm2189, %v2259, 2147483647
  %v2346 = vand.u32 %v2345, 65535
  %v2347 = vshra.s32 %v2345, 16
  %v2348 = vcvt.s32.f32 %v2346
  %v2349 = vcvt.s32.f32 %v2347
  %2350 = vmin.xlane.f32.xlu0 %v2349
  %v2351 = vpop.xlane.xlu0 %2350
  %vm2352 = vcmp.eq.f32.partialorder %v2349, %v2351
  %v2353 = vsel %vm2352, %v2348, inf
  %2354 = vmin.xlane.f32.xlu0 %v2353
  %v2355 = vpop.xlane.xlu0 %2354
  %v2356 = vcvt.f32.s32 %v2355
  %v2357 = vcvt.f32.s32 %v2351
  %v2358 = vshll.u32 %v2357, 16
  %v2359 = vadd.s32 %v2358, %v2356
  %v2360 = vsel %vm2189, %v2260, 2147483647
  %v2361 = vand.u32 %v2360, 65535
  %v2362 = vshra.s32 %v2360, 16
  %v2363 = vcvt.s32.f32 %v2361
  %v2364 = vcvt.s32.f32 %v2362
  %2365 = vmin.xlane.f32.xlu0 %v2364
  %v2366 = vpop.xlane.xlu0 %2365
  %vm2367 = vcmp.eq.f32.partialorder %v2364, %v2366
  %v2368 = vsel %vm2367, %v2363, inf
  %2369 = vmin.xlane.f32.xlu0 %v2368
  %v2370 = vpop.xlane.xlu0 %2369
  %v2371 = vcvt.f32.s32 %v2370
  %v2372 = vcvt.f32.s32 %v2366
  %v2373 = vshll.u32 %v2372, 16
  %v2374 = vadd.s32 %v2373, %v2371
  %v2375 = vsel %vm2189, %v2261, 2147483647
  %v2376 = vand.u32 %v2375, 65535
  %v2377 = vshra.s32 %v2375, 16
  %v2378 = vcvt.s32.f32 %v2376
  %v2379 = vcvt.s32.f32 %v2377
  %2380 = vmin.xlane.f32.xlu0 %v2379
  %v2381 = vpop.xlane.xlu0 %2380
  %vm2382 = vcmp.eq.f32.partialorder %v2379, %v2381
  %v2383 = vsel %vm2382, %v2378, inf
  %2384 = vmin.xlane.f32.xlu0 %v2383
  %v2385 = vpop.xlane.xlu0 %2384
  %v2386 = vcvt.f32.s32 %v2385
  %v2387 = vcvt.f32.s32 %v2381
  %v2388 = vshll.u32 %v2387, 16
  %v2389 = vadd.s32 %v2388, %v2386
  %v2390 = vsel %vm2189, %v2262, 2147483647
  %v2391 = vand.u32 %v2390, 65535
  %v2392 = vshra.s32 %v2390, 16
  %v2393 = vcvt.s32.f32 %v2391
  %v2394 = vcvt.s32.f32 %v2392
  %2395 = vmin.xlane.f32.xlu0 %v2394
  %v2396 = vpop.xlane.xlu0 %2395
  %vm2397 = vcmp.eq.f32.partialorder %v2394, %v2396
  %v2398 = vsel %vm2397, %v2393, inf
  %2399 = vmin.xlane.f32.xlu0 %v2398
  %v2400 = vpop.xlane.xlu0 %2399
  %v2401 = vcvt.f32.s32 %v2400
  %v2402 = vcvt.f32.s32 %v2396
  %v2403 = vshll.u32 %v2402, 16
  %v2404 = vadd.s32 %v2403, %v2401
  %v2405 = vsel %vm2189, %v2263, 2147483647
  %v2406 = vand.u32 %v2405, 65535
  %v2407 = vshra.s32 %v2405, 16
  %v2408 = vcvt.s32.f32 %v2406
  %v2409 = vcvt.s32.f32 %v2407
  %2410 = vmin.xlane.f32.xlu0 %v2409
  %v2411 = vpop.xlane.xlu0 %2410
  %vm2412 = vcmp.eq.f32.partialorder %v2409, %v2411
  %v2413 = vsel %vm2412, %v2408, inf
  %2414 = vmin.xlane.f32.xlu0 %v2413
  %v2415 = vpop.xlane.xlu0 %2414
  %v2416 = vcvt.f32.s32 %v2415
  %v2417 = vcvt.f32.s32 %v2411
  %v2418 = vshll.u32 %v2417, 16
  %v2419 = vadd.s32 %v2418, %v2416
  %v2420 = vsel %vm2189, %v2264, 2147483647
  %v2421 = vand.u32 %v2420, 65535
  %v2422 = vshra.s32 %v2420, 16
  %v2423 = vcvt.s32.f32 %v2421
  %v2424 = vcvt.s32.f32 %v2422
  %2425 = vmin.xlane.f32.xlu0 %v2424
  %v2426 = vpop.xlane.xlu0 %2425
  %vm2427 = vcmp.eq.f32.partialorder %v2424, %v2426
  %v2428 = vsel %vm2427, %v2423, inf
  %2429 = vmin.xlane.f32.xlu0 %v2428
  %v2430 = vpop.xlane.xlu0 %2429
  %v2431 = vcvt.f32.s32 %v2430
  %v2432 = vcvt.f32.s32 %v2426
  %v2433 = vshll.u32 %v2432, 16
  %v2434 = vadd.s32 %v2433, %v2431
  %v2435 = vsel %vm2189, %v2265, 2147483647
  %v2436 = vand.u32 %v2435, 65535
  %v2437 = vshra.s32 %v2435, 16
  %v2438 = vcvt.s32.f32 %v2436
  %v2439 = vcvt.s32.f32 %v2437
  %2440 = vmin.xlane.f32.xlu0 %v2439
  %v2441 = vpop.xlane.xlu0 %2440
  %vm2442 = vcmp.eq.f32.partialorder %v2439, %v2441
  %v2443 = vsel %vm2442, %v2438, inf
  %2444 = vmin.xlane.f32.xlu0 %v2443
  %v2445 = vpop.xlane.xlu0 %2444
  %v2446 = vcvt.f32.s32 %v2445
  %v2447 = vcvt.f32.s32 %v2441
  %v2448 = vshll.u32 %v2447, 16
  %v2449 = vadd.s32 %v2448, %v2446
  %v2450 = vsel %vm2189, %v2266, 2147483647
  %v2451 = vand.u32 %v2450, 65535
  %v2452 = vshra.s32 %v2450, 16
  %v2453 = vcvt.s32.f32 %v2451
  %v2454 = vcvt.s32.f32 %v2452
  %2455 = vmin.xlane.f32.xlu0 %v2454
  %v2456 = vpop.xlane.xlu0 %2455
  %vm2457 = vcmp.eq.f32.partialorder %v2454, %v2456
  %v2458 = vsel %vm2457, %v2453, inf
  %2459 = vmin.xlane.f32.xlu0 %v2458
  %v2460 = vpop.xlane.xlu0 %2459
  %v2461 = vcvt.f32.s32 %v2460
  %v2462 = vcvt.f32.s32 %v2456
  %v2463 = vshll.u32 %v2462, 16
  %v2464 = vadd.s32 %v2463, %v2461
  %v2465 = vsel %vm2189, %v2267, 2147483647
  %v2466 = vand.u32 %v2465, 65535
  %v2467 = vshra.s32 %v2465, 16
  %v2468 = vcvt.s32.f32 %v2466
  %v2469 = vcvt.s32.f32 %v2467
  %2470 = vmin.xlane.f32.xlu0 %v2469
  %v2471 = vpop.xlane.xlu0 %2470
  %vm2472 = vcmp.eq.f32.partialorder %v2469, %v2471
  %v2473 = vsel %vm2472, %v2468, inf
  %2474 = vmin.xlane.f32.xlu0 %v2473
  %v2475 = vpop.xlane.xlu0 %2474
  %v2476 = vcvt.f32.s32 %v2475
  %v2477 = vcvt.f32.s32 %v2471
  %v2478 = vshll.u32 %v2477, 16
  %v2479 = vadd.s32 %v2478, %v2476
  %v2480 = vsel %vm2189, %v2268, 2147483647
  %v2481 = vand.u32 %v2480, 65535
  %v2482 = vshra.s32 %v2480, 16
  %v2483 = vcvt.s32.f32 %v2481
  %v2484 = vcvt.s32.f32 %v2482
  %2485 = vmin.xlane.f32.xlu0 %v2484
  %v2486 = vpop.xlane.xlu0 %2485
  %vm2487 = vcmp.eq.f32.partialorder %v2484, %v2486
  %v2488 = vsel %vm2487, %v2483, inf
  %2489 = vmin.xlane.f32.xlu0 %v2488
  %v2490 = vpop.xlane.xlu0 %2489
  %v2491 = vcvt.f32.s32 %v2490
  %v2492 = vcvt.f32.s32 %v2486
  %v2493 = vshll.u32 %v2492, 16
  %v2494 = vadd.s32 %v2493, %v2491
  %v2495 = vsel %vm2189, %v2269, 2147483647
  %v2496 = vand.u32 %v2495, 65535
  %v2497 = vshra.s32 %v2495, 16
  %v2498 = vcvt.s32.f32 %v2496
  %v2499 = vcvt.s32.f32 %v2497
  %2500 = vmin.xlane.f32.xlu0 %v2499
  %v2501 = vpop.xlane.xlu0 %2500
  %vm2502 = vcmp.eq.f32.partialorder %v2499, %v2501
  %v2503 = vsel %vm2502, %v2498, inf
  %2504 = vmin.xlane.f32.xlu0 %v2503
  %v2505 = vpop.xlane.xlu0 %2504
  %v2506 = vcvt.f32.s32 %v2505
  %v2507 = vcvt.f32.s32 %v2501
  %v2508 = vshll.u32 %v2507, 16
  %v2509 = vadd.s32 %v2508, %v2506
  %vm2510 = vcmp.eq.s32.totalorder %v2188, %v2284
  %vm2511 = vcmp.eq.s32.totalorder %v2188, %v2299
  %vm2512 = vcmp.eq.s32.totalorder %v2188, %v2314
  %vm2513 = vcmp.eq.s32.totalorder %v2188, %v2329
  %vm2514 = vcmp.eq.s32.totalorder %v2188, %v2344
  %vm2515 = vcmp.eq.s32.totalorder %v2188, %v2359
  %vm2516 = vcmp.eq.s32.totalorder %v2188, %v2374
  %vm2517 = vcmp.eq.s32.totalorder %v2188, %v2389
  %vm2518 = vcmp.eq.s32.totalorder %v2188, %v2404
  %vm2519 = vcmp.eq.s32.totalorder %v2188, %v2419
  %vm2520 = vcmp.eq.s32.totalorder %v2188, %v2434
  %vm2521 = vcmp.eq.s32.totalorder %v2188, %v2449
  %vm2522 = vcmp.eq.s32.totalorder %v2188, %v2464
  %vm2523 = vcmp.eq.s32.totalorder %v2188, %v2479
  %vm2524 = vcmp.eq.s32.totalorder %v2188, %v2494
  %vm2525 = vcmp.eq.s32.totalorder %v2188, %v2509
  %v2526 = vmax.f32 %v2192, 1e-16
  %v2527 = vmax.f32 %v2195, 1e-16
  %v2528 = vmax.f32 %v2198, 1e-16
  %v2529 = vmax.f32 %v2201, 1e-16
  %v2530 = vmax.f32 %v2204, 1e-16
  %v2531 = vmax.f32 %v2207, 1e-16
  %v2532 = vmax.f32 %v2210, 1e-16
  %v2533 = vmax.f32 %v2213, 1e-16
  %v2534 = vmax.f32 %v2216, 1e-16
  %v2535 = vmax.f32 %v2219, 1e-16
  %v2536 = vmax.f32 %v2222, 1e-16
  %v2537 = vmax.f32 %v2225, 1e-16
  %v2538 = vmax.f32 %v2228, 1e-16
  %v2539 = vmax.f32 %v2231, 1e-16
  %v2540 = vmax.f32 %v2234, 1e-16
  %v2541 = vmax.f32 %v2237, 1e-16
  %v2542 = vrcp.pop %v2526
  %v2543 = vmul.f32 1.0, %v2542
  %v2544 = vrcp.pop %v2527
  %v2545 = vmul.f32 1.0, %v2544
  %v2546 = vrcp.pop %v2528
  %v2547 = vmul.f32 1.0, %v2546
  %v2548 = vrcp.pop %v2529
  %v2549 = vmul.f32 1.0, %v2548
  %v2550 = vrcp.pop %v2530
  %v2551 = vmul.f32 1.0, %v2550
  %v2552 = vrcp.pop %v2531
  %v2553 = vmul.f32 1.0, %v2552
  %v2554 = vrcp.pop %v2532
  %v2555 = vmul.f32 1.0, %v2554
  %v2556 = vrcp.pop %v2533
  %v2557 = vmul.f32 1.0, %v2556
  %v2558 = vrcp.pop %v2534
  %v2559 = vmul.f32 1.0, %v2558
  %v2560 = vrcp.pop %v2535
  %v2561 = vmul.f32 1.0, %v2560
  %v2562 = vrcp.pop %v2536
  %v2563 = vmul.f32 1.0, %v2562
  %v2564 = vrcp.pop %v2537
  %v2565 = vmul.f32 1.0, %v2564
  %v2566 = vrcp.pop %v2538
  %v2567 = vmul.f32 1.0, %v2566
  %v2568 = vrcp.pop %v2539
  %v2569 = vmul.f32 1.0, %v2568
  %v2570 = vrcp.pop %v2540
  %v2571 = vmul.f32 1.0, %v2570
  %v2572 = vrcp.pop %v2541
  %v2573 = vmul.f32 1.0, %v2572
  %v2574 = vsel %vm2510, %v2543, 0.0
  %v2575 = vsel %vm2511, %v2545, 0.0
  %v2576 = vsel %vm2512, %v2547, 0.0
  %v2577 = vsel %vm2513, %v2549, 0.0
  %v2578 = vsel %vm2514, %v2551, 0.0
  %v2579 = vsel %vm2515, %v2553, 0.0
  %v2580 = vsel %vm2516, %v2555, 0.0
  %v2581 = vsel %vm2517, %v2557, 0.0
  %v2582 = vsel %vm2518, %v2559, 0.0
  %v2583 = vsel %vm2519, %v2561, 0.0
  %v2584 = vsel %vm2520, %v2563, 0.0
  %v2585 = vsel %vm2521, %v2565, 0.0
  %v2586 = vsel %vm2522, %v2567, 0.0
  %v2587 = vsel %vm2523, %v2569, 0.0
  %v2588 = vsel %vm2524, %v2571, 0.0
  %v2589 = vsel %vm2525, %v2573, 0.0
  %v2590 = vadd.f32 %v2574, 0.0
  %v2591 = vadd.f32 %v2575, 0.0
  %v2592 = vadd.f32 %v2576, 0.0
  %v2593 = vadd.f32 %v2577, 0.0
  %v2594 = vadd.f32 %v2578, 0.0
  %v2595 = vadd.f32 %v2579, 0.0
  %v2596 = vadd.f32 %v2580, 0.0
  %v2597 = vadd.f32 %v2581, 0.0
  %v2598 = vadd.f32 %v2582, 0.0
  %v2599 = vadd.f32 %v2583, 0.0
  %v2600 = vadd.f32 %v2584, 0.0
  %v2601 = vadd.f32 %v2585, 0.0
  %v2602 = vadd.f32 %v2586, 0.0
  %v2603 = vadd.f32 %v2587, 0.0
  %v2604 = vadd.f32 %v2588, 0.0
  %v2605 = vadd.f32 %v2589, 0.0
  %v2606 = vadd.f32 %v2543, 0.0
  %v2607 = vadd.f32 %v2545, 0.0
  %v2608 = vadd.f32 %v2547, 0.0
  %v2609 = vadd.f32 %v2549, 0.0
  %v2610 = vadd.f32 %v2551, 0.0
  %v2611 = vadd.f32 %v2553, 0.0
  %v2612 = vadd.f32 %v2555, 0.0
  %v2613 = vadd.f32 %v2557, 0.0
  %v2614 = vadd.f32 %v2559, 0.0
  %v2615 = vadd.f32 %v2561, 0.0
  %v2616 = vadd.f32 %v2563, 0.0
  %v2617 = vadd.f32 %v2565, 0.0
  %v2618 = vadd.f32 %v2567, 0.0
  %v2619 = vadd.f32 %v2569, 0.0
  %v2620 = vadd.f32 %v2571, 0.0
  %v2621 = vadd.f32 %v2573, 0.0
  %v2622 = vsel %vm2510, 1e+30, %v2171
  %v2623 = vsel %vm2511, 1e+30, %v2172
  %v2624 = vsel %vm2512, 1e+30, %v2173
  %v2625 = vsel %vm2513, 1e+30, %v2174
  %v2626 = vsel %vm2514, 1e+30, %v2175
  %v2627 = vsel %vm2515, 1e+30, %v2176
  %v2628 = vsel %vm2516, 1e+30, %v2177
  %v2629 = vsel %vm2517, 1e+30, %v2178
  %v2630 = vsel %vm2518, 1e+30, %v2179
  %v2631 = vsel %vm2519, 1e+30, %v2180
  %v2632 = vsel %vm2520, 1e+30, %v2181
  %v2633 = vsel %vm2521, 1e+30, %v2182
  %v2634 = vsel %vm2522, 1e+30, %v2183
  %v2635 = vsel %vm2523, 1e+30, %v2184
  %v2636 = vsel %vm2524, 1e+30, %v2185
  %v2637 = vsel %vm2525, 1e+30, %v2186
  %v2638 = vsel %vm2189, %v2622, inf
  %2639 = vmin.xlane.f32.xlu0 %v2638
  %v2640 = vpop.xlane.xlu0 %2639
  %v2641 = vsel %vm2189, %v2623, inf
  %2642 = vmin.xlane.f32.xlu0 %v2641
  %v2643 = vpop.xlane.xlu0 %2642
  %v2644 = vsel %vm2189, %v2624, inf
  %2645 = vmin.xlane.f32.xlu0 %v2644
  %v2646 = vpop.xlane.xlu0 %2645
  %v2647 = vsel %vm2189, %v2625, inf
  %2648 = vmin.xlane.f32.xlu0 %v2647
  %v2649 = vpop.xlane.xlu0 %2648
  %v2650 = vsel %vm2189, %v2626, inf
  %2651 = vmin.xlane.f32.xlu0 %v2650
  %v2652 = vpop.xlane.xlu0 %2651
  %v2653 = vsel %vm2189, %v2627, inf
  %2654 = vmin.xlane.f32.xlu0 %v2653
  %v2655 = vpop.xlane.xlu0 %2654
  %v2656 = vsel %vm2189, %v2628, inf
  %2657 = vmin.xlane.f32.xlu0 %v2656
  %v2658 = vpop.xlane.xlu0 %2657
  %v2659 = vsel %vm2189, %v2629, inf
  %2660 = vmin.xlane.f32.xlu0 %v2659
  %v2661 = vpop.xlane.xlu0 %2660
  %v2662 = vsel %vm2189, %v2630, inf
  %2663 = vmin.xlane.f32.xlu0 %v2662
  %v2664 = vpop.xlane.xlu0 %2663
  %v2665 = vsel %vm2189, %v2631, inf
  %2666 = vmin.xlane.f32.xlu0 %v2665
  %v2667 = vpop.xlane.xlu0 %2666
  %v2668 = vsel %vm2189, %v2632, inf
  %2669 = vmin.xlane.f32.xlu0 %v2668
  %v2670 = vpop.xlane.xlu0 %2669
  %v2671 = vsel %vm2189, %v2633, inf
  %2672 = vmin.xlane.f32.xlu0 %v2671
  %v2673 = vpop.xlane.xlu0 %2672
  %v2674 = vsel %vm2189, %v2634, inf
  %2675 = vmin.xlane.f32.xlu0 %v2674
  %v2676 = vpop.xlane.xlu0 %2675
  %v2677 = vsel %vm2189, %v2635, inf
  %2678 = vmin.xlane.f32.xlu0 %v2677
  %v2679 = vpop.xlane.xlu0 %2678
  %v2680 = vsel %vm2189, %v2636, inf
  %2681 = vmin.xlane.f32.xlu0 %v2680
  %v2682 = vpop.xlane.xlu0 %2681
  %v2683 = vsel %vm2189, %v2637, inf
  %2684 = vmin.xlane.f32.xlu0 %v2683
  %v2685 = vpop.xlane.xlu0 %2684
  %vm2686 = vcmp.eq.f32.partialorder %v2622, %v2640
  %vm2687 = vcmp.eq.f32.partialorder %v2623, %v2643
  %vm2688 = vcmp.eq.f32.partialorder %v2624, %v2646
  %vm2689 = vcmp.eq.f32.partialorder %v2625, %v2649
  %vm2690 = vcmp.eq.f32.partialorder %v2626, %v2652
  %vm2691 = vcmp.eq.f32.partialorder %v2627, %v2655
  %vm2692 = vcmp.eq.f32.partialorder %v2628, %v2658
  %vm2693 = vcmp.eq.f32.partialorder %v2629, %v2661
  %vm2694 = vcmp.eq.f32.partialorder %v2630, %v2664
  %vm2695 = vcmp.eq.f32.partialorder %v2631, %v2667
  %vm2696 = vcmp.eq.f32.partialorder %v2632, %v2670
  %vm2697 = vcmp.eq.f32.partialorder %v2633, %v2673
  %vm2698 = vcmp.eq.f32.partialorder %v2634, %v2676
  %vm2699 = vcmp.eq.f32.partialorder %v2635, %v2679
  %vm2700 = vcmp.eq.f32.partialorder %v2636, %v2682
  %vm2701 = vcmp.eq.f32.partialorder %v2637, %v2685
  %v2702 = vsel %vm2686, %v2188, 16
  %v2703 = vsel %vm2687, %v2188, 16
  %v2704 = vsel %vm2688, %v2188, 16
  %v2705 = vsel %vm2689, %v2188, 16
  %v2706 = vsel %vm2690, %v2188, 16
  %v2707 = vsel %vm2691, %v2188, 16
  %v2708 = vsel %vm2692, %v2188, 16
  %v2709 = vsel %vm2693, %v2188, 16
  %v2710 = vsel %vm2694, %v2188, 16
  %v2711 = vsel %vm2695, %v2188, 16
  %v2712 = vsel %vm2696, %v2188, 16
  %v2713 = vsel %vm2697, %v2188, 16
  %v2714 = vsel %vm2698, %v2188, 16
  %v2715 = vsel %vm2699, %v2188, 16
  %v2716 = vsel %vm2700, %v2188, 16
  %v2717 = vsel %vm2701, %v2188, 16
  %v2718 = vsel %vm2189, %v2702, 2147483647
  %v2719 = vand.u32 %v2718, 65535
  %v2720 = vshra.s32 %v2718, 16
  %v2721 = vcvt.s32.f32 %v2719
  %v2722 = vcvt.s32.f32 %v2720
  %2723 = vmin.xlane.f32.xlu0 %v2722
  %v2724 = vpop.xlane.xlu0 %2723
  %vm2725 = vcmp.eq.f32.partialorder %v2722, %v2724
  %v2726 = vsel %vm2725, %v2721, inf
  %2727 = vmin.xlane.f32.xlu0 %v2726
  %v2728 = vpop.xlane.xlu0 %2727
  %v2729 = vcvt.f32.s32 %v2728
  %v2730 = vcvt.f32.s32 %v2724
  %v2731 = vshll.u32 %v2730, 16
  %v2732 = vadd.s32 %v2731, %v2729
  %v2733 = vsel %vm2189, %v2703, 2147483647
  %v2734 = vand.u32 %v2733, 65535
  %v2735 = vshra.s32 %v2733, 16
  %v2736 = vcvt.s32.f32 %v2734
  %v2737 = vcvt.s32.f32 %v2735
  %2738 = vmin.xlane.f32.xlu0 %v2737
  %v2739 = vpop.xlane.xlu0 %2738
  %vm2740 = vcmp.eq.f32.partialorder %v2737, %v2739
  %v2741 = vsel %vm2740, %v2736, inf
  %2742 = vmin.xlane.f32.xlu0 %v2741
  %v2743 = vpop.xlane.xlu0 %2742
  %v2744 = vcvt.f32.s32 %v2743
  %v2745 = vcvt.f32.s32 %v2739
  %v2746 = vshll.u32 %v2745, 16
  %v2747 = vadd.s32 %v2746, %v2744
  %v2748 = vsel %vm2189, %v2704, 2147483647
  %v2749 = vand.u32 %v2748, 65535
  %v2750 = vshra.s32 %v2748, 16
  %v2751 = vcvt.s32.f32 %v2749
  %v2752 = vcvt.s32.f32 %v2750
  %2753 = vmin.xlane.f32.xlu0 %v2752
  %v2754 = vpop.xlane.xlu0 %2753
  %vm2755 = vcmp.eq.f32.partialorder %v2752, %v2754
  %v2756 = vsel %vm2755, %v2751, inf
  %2757 = vmin.xlane.f32.xlu0 %v2756
  %v2758 = vpop.xlane.xlu0 %2757
  %v2759 = vcvt.f32.s32 %v2758
  %v2760 = vcvt.f32.s32 %v2754
  %v2761 = vshll.u32 %v2760, 16
  %v2762 = vadd.s32 %v2761, %v2759
  %v2763 = vsel %vm2189, %v2705, 2147483647
  %v2764 = vand.u32 %v2763, 65535
  %v2765 = vshra.s32 %v2763, 16
  %v2766 = vcvt.s32.f32 %v2764
  %v2767 = vcvt.s32.f32 %v2765
  %2768 = vmin.xlane.f32.xlu0 %v2767
  %v2769 = vpop.xlane.xlu0 %2768
  %vm2770 = vcmp.eq.f32.partialorder %v2767, %v2769
  %v2771 = vsel %vm2770, %v2766, inf
  %2772 = vmin.xlane.f32.xlu0 %v2771
  %v2773 = vpop.xlane.xlu0 %2772
  %v2774 = vcvt.f32.s32 %v2773
  %v2775 = vcvt.f32.s32 %v2769
  %v2776 = vshll.u32 %v2775, 16
  %v2777 = vadd.s32 %v2776, %v2774
  %v2778 = vsel %vm2189, %v2706, 2147483647
  %v2779 = vand.u32 %v2778, 65535
  %v2780 = vshra.s32 %v2778, 16
  %v2781 = vcvt.s32.f32 %v2779
  %v2782 = vcvt.s32.f32 %v2780
  %2783 = vmin.xlane.f32.xlu0 %v2782
  %v2784 = vpop.xlane.xlu0 %2783
  %vm2785 = vcmp.eq.f32.partialorder %v2782, %v2784
  %v2786 = vsel %vm2785, %v2781, inf
  %2787 = vmin.xlane.f32.xlu0 %v2786
  %v2788 = vpop.xlane.xlu0 %2787
  %v2789 = vcvt.f32.s32 %v2788
  %v2790 = vcvt.f32.s32 %v2784
  %v2791 = vshll.u32 %v2790, 16
  %v2792 = vadd.s32 %v2791, %v2789
  %v2793 = vsel %vm2189, %v2707, 2147483647
  %v2794 = vand.u32 %v2793, 65535
  %v2795 = vshra.s32 %v2793, 16
  %v2796 = vcvt.s32.f32 %v2794
  %v2797 = vcvt.s32.f32 %v2795
  %2798 = vmin.xlane.f32.xlu0 %v2797
  %v2799 = vpop.xlane.xlu0 %2798
  %vm2800 = vcmp.eq.f32.partialorder %v2797, %v2799
  %v2801 = vsel %vm2800, %v2796, inf
  %2802 = vmin.xlane.f32.xlu0 %v2801
  %v2803 = vpop.xlane.xlu0 %2802
  %v2804 = vcvt.f32.s32 %v2803
  %v2805 = vcvt.f32.s32 %v2799
  %v2806 = vshll.u32 %v2805, 16
  %v2807 = vadd.s32 %v2806, %v2804
  %v2808 = vsel %vm2189, %v2708, 2147483647
  %v2809 = vand.u32 %v2808, 65535
  %v2810 = vshra.s32 %v2808, 16
  %v2811 = vcvt.s32.f32 %v2809
  %v2812 = vcvt.s32.f32 %v2810
  %2813 = vmin.xlane.f32.xlu0 %v2812
  %v2814 = vpop.xlane.xlu0 %2813
  %vm2815 = vcmp.eq.f32.partialorder %v2812, %v2814
  %v2816 = vsel %vm2815, %v2811, inf
  %2817 = vmin.xlane.f32.xlu0 %v2816
  %v2818 = vpop.xlane.xlu0 %2817
  %v2819 = vcvt.f32.s32 %v2818
  %v2820 = vcvt.f32.s32 %v2814
  %v2821 = vshll.u32 %v2820, 16
  %v2822 = vadd.s32 %v2821, %v2819
  %v2823 = vsel %vm2189, %v2709, 2147483647
  %v2824 = vand.u32 %v2823, 65535
  %v2825 = vshra.s32 %v2823, 16
  %v2826 = vcvt.s32.f32 %v2824
  %v2827 = vcvt.s32.f32 %v2825
  %2828 = vmin.xlane.f32.xlu0 %v2827
  %v2829 = vpop.xlane.xlu0 %2828
  %vm2830 = vcmp.eq.f32.partialorder %v2827, %v2829
  %v2831 = vsel %vm2830, %v2826, inf
  %2832 = vmin.xlane.f32.xlu0 %v2831
  %v2833 = vpop.xlane.xlu0 %2832
  %v2834 = vcvt.f32.s32 %v2833
  %v2835 = vcvt.f32.s32 %v2829
  %v2836 = vshll.u32 %v2835, 16
  %v2837 = vadd.s32 %v2836, %v2834
  %v2838 = vsel %vm2189, %v2710, 2147483647
  %v2839 = vand.u32 %v2838, 65535
  %v2840 = vshra.s32 %v2838, 16
  %v2841 = vcvt.s32.f32 %v2839
  %v2842 = vcvt.s32.f32 %v2840
  %2843 = vmin.xlane.f32.xlu0 %v2842
  %v2844 = vpop.xlane.xlu0 %2843
  %vm2845 = vcmp.eq.f32.partialorder %v2842, %v2844
  %v2846 = vsel %vm2845, %v2841, inf
  %2847 = vmin.xlane.f32.xlu0 %v2846
  %v2848 = vpop.xlane.xlu0 %2847
  %v2849 = vcvt.f32.s32 %v2848
  %v2850 = vcvt.f32.s32 %v2844
  %v2851 = vshll.u32 %v2850, 16
  %v2852 = vadd.s32 %v2851, %v2849
  %v2853 = vsel %vm2189, %v2711, 2147483647
  %v2854 = vand.u32 %v2853, 65535
  %v2855 = vshra.s32 %v2853, 16
  %v2856 = vcvt.s32.f32 %v2854
  %v2857 = vcvt.s32.f32 %v2855
  %2858 = vmin.xlane.f32.xlu0 %v2857
  %v2859 = vpop.xlane.xlu0 %2858
  %vm2860 = vcmp.eq.f32.partialorder %v2857, %v2859
  %v2861 = vsel %vm2860, %v2856, inf
  %2862 = vmin.xlane.f32.xlu0 %v2861
  %v2863 = vpop.xlane.xlu0 %2862
  %v2864 = vcvt.f32.s32 %v2863
  %v2865 = vcvt.f32.s32 %v2859
  %v2866 = vshll.u32 %v2865, 16
  %v2867 = vadd.s32 %v2866, %v2864
  %v2868 = vsel %vm2189, %v2712, 2147483647
  %v2869 = vand.u32 %v2868, 65535
  %v2870 = vshra.s32 %v2868, 16
  %v2871 = vcvt.s32.f32 %v2869
  %v2872 = vcvt.s32.f32 %v2870
  %2873 = vmin.xlane.f32.xlu0 %v2872
  %v2874 = vpop.xlane.xlu0 %2873
  %vm2875 = vcmp.eq.f32.partialorder %v2872, %v2874
  %v2876 = vsel %vm2875, %v2871, inf
  %2877 = vmin.xlane.f32.xlu0 %v2876
  %v2878 = vpop.xlane.xlu0 %2877
  %v2879 = vcvt.f32.s32 %v2878
  %v2880 = vcvt.f32.s32 %v2874
  %v2881 = vshll.u32 %v2880, 16
  %v2882 = vadd.s32 %v2881, %v2879
  %v2883 = vsel %vm2189, %v2713, 2147483647
  %v2884 = vand.u32 %v2883, 65535
  %v2885 = vshra.s32 %v2883, 16
  %v2886 = vcvt.s32.f32 %v2884
  %v2887 = vcvt.s32.f32 %v2885
  %2888 = vmin.xlane.f32.xlu0 %v2887
  %v2889 = vpop.xlane.xlu0 %2888
  %vm2890 = vcmp.eq.f32.partialorder %v2887, %v2889
  %v2891 = vsel %vm2890, %v2886, inf
  %2892 = vmin.xlane.f32.xlu0 %v2891
  %v2893 = vpop.xlane.xlu0 %2892
  %v2894 = vcvt.f32.s32 %v2893
  %v2895 = vcvt.f32.s32 %v2889
  %v2896 = vshll.u32 %v2895, 16
  %v2897 = vadd.s32 %v2896, %v2894
  %v2898 = vsel %vm2189, %v2714, 2147483647
  %v2899 = vand.u32 %v2898, 65535
  %v2900 = vshra.s32 %v2898, 16
  %v2901 = vcvt.s32.f32 %v2899
  %v2902 = vcvt.s32.f32 %v2900
  %2903 = vmin.xlane.f32.xlu0 %v2902
  %v2904 = vpop.xlane.xlu0 %2903
  %vm2905 = vcmp.eq.f32.partialorder %v2902, %v2904
  %v2906 = vsel %vm2905, %v2901, inf
  %2907 = vmin.xlane.f32.xlu0 %v2906
  %v2908 = vpop.xlane.xlu0 %2907
  %v2909 = vcvt.f32.s32 %v2908
  %v2910 = vcvt.f32.s32 %v2904
  %v2911 = vshll.u32 %v2910, 16
  %v2912 = vadd.s32 %v2911, %v2909
  %v2913 = vsel %vm2189, %v2715, 2147483647
  %v2914 = vand.u32 %v2913, 65535
  %v2915 = vshra.s32 %v2913, 16
  %v2916 = vcvt.s32.f32 %v2914
  %v2917 = vcvt.s32.f32 %v2915
  %2918 = vmin.xlane.f32.xlu0 %v2917
  %v2919 = vpop.xlane.xlu0 %2918
  %vm2920 = vcmp.eq.f32.partialorder %v2917, %v2919
  %v2921 = vsel %vm2920, %v2916, inf
  %2922 = vmin.xlane.f32.xlu0 %v2921
  %v2923 = vpop.xlane.xlu0 %2922
  %v2924 = vcvt.f32.s32 %v2923
  %v2925 = vcvt.f32.s32 %v2919
  %v2926 = vshll.u32 %v2925, 16
  %v2927 = vadd.s32 %v2926, %v2924
  %v2928 = vsel %vm2189, %v2716, 2147483647
  %v2929 = vand.u32 %v2928, 65535
  %v2930 = vshra.s32 %v2928, 16
  %v2931 = vcvt.s32.f32 %v2929
  %v2932 = vcvt.s32.f32 %v2930
  %2933 = vmin.xlane.f32.xlu0 %v2932
  %v2934 = vpop.xlane.xlu0 %2933
  %vm2935 = vcmp.eq.f32.partialorder %v2932, %v2934
  %v2936 = vsel %vm2935, %v2931, inf
  %2937 = vmin.xlane.f32.xlu0 %v2936
  %v2938 = vpop.xlane.xlu0 %2937
  %v2939 = vcvt.f32.s32 %v2938
  %v2940 = vcvt.f32.s32 %v2934
  %v2941 = vshll.u32 %v2940, 16
  %v2942 = vadd.s32 %v2941, %v2939
  %v2943 = vsel %vm2189, %v2717, 2147483647
  %v2944 = vand.u32 %v2943, 65535
  %v2945 = vshra.s32 %v2943, 16
  %v2946 = vcvt.s32.f32 %v2944
  %v2947 = vcvt.s32.f32 %v2945
  %2948 = vmin.xlane.f32.xlu0 %v2947
  %v2949 = vpop.xlane.xlu0 %2948
  %vm2950 = vcmp.eq.f32.partialorder %v2947, %v2949
  %v2951 = vsel %vm2950, %v2946, inf
  %2952 = vmin.xlane.f32.xlu0 %v2951
  %v2953 = vpop.xlane.xlu0 %2952
  %v2954 = vcvt.f32.s32 %v2953
  %v2955 = vcvt.f32.s32 %v2949
  %v2956 = vshll.u32 %v2955, 16
  %v2957 = vadd.s32 %v2956, %v2954
  %vm2958 = vcmp.eq.s32.totalorder %v2188, %v2732
  %vm2959 = vcmp.eq.s32.totalorder %v2188, %v2747
  %vm2960 = vcmp.eq.s32.totalorder %v2188, %v2762
  %vm2961 = vcmp.eq.s32.totalorder %v2188, %v2777
  %vm2962 = vcmp.eq.s32.totalorder %v2188, %v2792
  %vm2963 = vcmp.eq.s32.totalorder %v2188, %v2807
  %vm2964 = vcmp.eq.s32.totalorder %v2188, %v2822
  %vm2965 = vcmp.eq.s32.totalorder %v2188, %v2837
  %vm2966 = vcmp.eq.s32.totalorder %v2188, %v2852
  %vm2967 = vcmp.eq.s32.totalorder %v2188, %v2867
  %vm2968 = vcmp.eq.s32.totalorder %v2188, %v2882
  %vm2969 = vcmp.eq.s32.totalorder %v2188, %v2897
  %vm2970 = vcmp.eq.s32.totalorder %v2188, %v2912
  %vm2971 = vcmp.eq.s32.totalorder %v2188, %v2927
  %vm2972 = vcmp.eq.s32.totalorder %v2188, %v2942
  %vm2973 = vcmp.eq.s32.totalorder %v2188, %v2957
  %v2974 = vmax.f32 %v2640, 1e-16
  %v2975 = vmax.f32 %v2643, 1e-16
  %v2976 = vmax.f32 %v2646, 1e-16
  %v2977 = vmax.f32 %v2649, 1e-16
  %v2978 = vmax.f32 %v2652, 1e-16
  %v2979 = vmax.f32 %v2655, 1e-16
  %v2980 = vmax.f32 %v2658, 1e-16
  %v2981 = vmax.f32 %v2661, 1e-16
  %v2982 = vmax.f32 %v2664, 1e-16
  %v2983 = vmax.f32 %v2667, 1e-16
  %v2984 = vmax.f32 %v2670, 1e-16
  %v2985 = vmax.f32 %v2673, 1e-16
  %v2986 = vmax.f32 %v2676, 1e-16
  %v2987 = vmax.f32 %v2679, 1e-16
  %v2988 = vmax.f32 %v2682, 1e-16
  %v2989 = vmax.f32 %v2685, 1e-16
  %v2990 = vrcp.pop %v2974
  %v2991 = vmul.f32 1.0, %v2990
  %v2992 = vrcp.pop %v2975
  %v2993 = vmul.f32 1.0, %v2992
  %v2994 = vrcp.pop %v2976
  %v2995 = vmul.f32 1.0, %v2994
  %v2996 = vrcp.pop %v2977
  %v2997 = vmul.f32 1.0, %v2996
  %v2998 = vrcp.pop %v2978
  %v2999 = vmul.f32 1.0, %v2998
  %v3000 = vrcp.pop %v2979
  %v3001 = vmul.f32 1.0, %v3000
  %v3002 = vrcp.pop %v2980
  %v3003 = vmul.f32 1.0, %v3002
  %v3004 = vrcp.pop %v2981
  %v3005 = vmul.f32 1.0, %v3004
  %v3006 = vrcp.pop %v2982
  %v3007 = vmul.f32 1.0, %v3006
  %v3008 = vrcp.pop %v2983
  %v3009 = vmul.f32 1.0, %v3008
  %v3010 = vrcp.pop %v2984
  %v3011 = vmul.f32 1.0, %v3010
  %v3012 = vrcp.pop %v2985
  %v3013 = vmul.f32 1.0, %v3012
  %v3014 = vrcp.pop %v2986
  %v3015 = vmul.f32 1.0, %v3014
  %v3016 = vrcp.pop %v2987
  %v3017 = vmul.f32 1.0, %v3016
  %v3018 = vrcp.pop %v2988
  %v3019 = vmul.f32 1.0, %v3018
  %v3020 = vrcp.pop %v2989
  %v3021 = vmul.f32 1.0, %v3020
  %v3022 = vsel %vm2958, %v2991, 0.0
  %v3023 = vsel %vm2959, %v2993, 0.0
  %v3024 = vsel %vm2960, %v2995, 0.0
  %v3025 = vsel %vm2961, %v2997, 0.0
  %v3026 = vsel %vm2962, %v2999, 0.0
  %v3027 = vsel %vm2963, %v3001, 0.0
  %v3028 = vsel %vm2964, %v3003, 0.0
  %v3029 = vsel %vm2965, %v3005, 0.0
  %v3030 = vsel %vm2966, %v3007, 0.0
  %v3031 = vsel %vm2967, %v3009, 0.0
  %v3032 = vsel %vm2968, %v3011, 0.0
  %v3033 = vsel %vm2969, %v3013, 0.0
  %v3034 = vsel %vm2970, %v3015, 0.0
  %v3035 = vsel %vm2971, %v3017, 0.0
  %v3036 = vsel %vm2972, %v3019, 0.0
  %v3037 = vsel %vm2973, %v3021, 0.0
  %v3038 = vadd.f32 %v2590, %v3022
  %v3039 = vadd.f32 %v2591, %v3023
  %v3040 = vadd.f32 %v2592, %v3024
  %v3041 = vadd.f32 %v2593, %v3025
  %v3042 = vadd.f32 %v2594, %v3026
  %v3043 = vadd.f32 %v2595, %v3027
  %v3044 = vadd.f32 %v2596, %v3028
  %v3045 = vadd.f32 %v2597, %v3029
  %v3046 = vadd.f32 %v2598, %v3030
  %v3047 = vadd.f32 %v2599, %v3031
  %v3048 = vadd.f32 %v2600, %v3032
  %v3049 = vadd.f32 %v2601, %v3033
  %v3050 = vadd.f32 %v2602, %v3034
  %v3051 = vadd.f32 %v2603, %v3035
  %v3052 = vadd.f32 %v2604, %v3036
  %v3053 = vadd.f32 %v2605, %v3037
  %v3054 = vadd.f32 %v2606, %v2991
  %v3055 = vadd.f32 %v2607, %v2993
  %v3056 = vadd.f32 %v2608, %v2995
  %v3057 = vadd.f32 %v2609, %v2997
  %v3058 = vadd.f32 %v2610, %v2999
  %v3059 = vadd.f32 %v2611, %v3001
  %v3060 = vadd.f32 %v2612, %v3003
  %v3061 = vadd.f32 %v2613, %v3005
  %v3062 = vadd.f32 %v2614, %v3007
  %v3063 = vadd.f32 %v2615, %v3009
  %v3064 = vadd.f32 %v2616, %v3011
  %v3065 = vadd.f32 %v2617, %v3013
  %v3066 = vadd.f32 %v2618, %v3015
  %v3067 = vadd.f32 %v2619, %v3017
  %v3068 = vadd.f32 %v2620, %v3019
  %v3069 = vadd.f32 %v2621, %v3021
  %v3070 = vsel %vm2958, 1e+30, %v2622
  %v3071 = vsel %vm2959, 1e+30, %v2623
  %v3072 = vsel %vm2960, 1e+30, %v2624
  %v3073 = vsel %vm2961, 1e+30, %v2625
  %v3074 = vsel %vm2962, 1e+30, %v2626
  %v3075 = vsel %vm2963, 1e+30, %v2627
  %v3076 = vsel %vm2964, 1e+30, %v2628
  %v3077 = vsel %vm2965, 1e+30, %v2629
  %v3078 = vsel %vm2966, 1e+30, %v2630
  %v3079 = vsel %vm2967, 1e+30, %v2631
  %v3080 = vsel %vm2968, 1e+30, %v2632
  %v3081 = vsel %vm2969, 1e+30, %v2633
  %v3082 = vsel %vm2970, 1e+30, %v2634
  %v3083 = vsel %vm2971, 1e+30, %v2635
  %v3084 = vsel %vm2972, 1e+30, %v2636
  %v3085 = vsel %vm2973, 1e+30, %v2637
  %v3086 = vsel %vm2189, %v3070, inf
  %3087 = vmin.xlane.f32.xlu0 %v3086
  %v3088 = vpop.xlane.xlu0 %3087
  %v3089 = vsel %vm2189, %v3071, inf
  %3090 = vmin.xlane.f32.xlu0 %v3089
  %v3091 = vpop.xlane.xlu0 %3090
  %v3092 = vsel %vm2189, %v3072, inf
  %3093 = vmin.xlane.f32.xlu0 %v3092
  %v3094 = vpop.xlane.xlu0 %3093
  %v3095 = vsel %vm2189, %v3073, inf
  %3096 = vmin.xlane.f32.xlu0 %v3095
  %v3097 = vpop.xlane.xlu0 %3096
  %v3098 = vsel %vm2189, %v3074, inf
  %3099 = vmin.xlane.f32.xlu0 %v3098
  %v3100 = vpop.xlane.xlu0 %3099
  %v3101 = vsel %vm2189, %v3075, inf
  %3102 = vmin.xlane.f32.xlu0 %v3101
  %v3103 = vpop.xlane.xlu0 %3102
  %v3104 = vsel %vm2189, %v3076, inf
  %3105 = vmin.xlane.f32.xlu0 %v3104
  %v3106 = vpop.xlane.xlu0 %3105
  %v3107 = vsel %vm2189, %v3077, inf
  %3108 = vmin.xlane.f32.xlu0 %v3107
  %v3109 = vpop.xlane.xlu0 %3108
  %v3110 = vsel %vm2189, %v3078, inf
  %3111 = vmin.xlane.f32.xlu0 %v3110
  %v3112 = vpop.xlane.xlu0 %3111
  %v3113 = vsel %vm2189, %v3079, inf
  %3114 = vmin.xlane.f32.xlu0 %v3113
  %v3115 = vpop.xlane.xlu0 %3114
  %v3116 = vsel %vm2189, %v3080, inf
  %3117 = vmin.xlane.f32.xlu0 %v3116
  %v3118 = vpop.xlane.xlu0 %3117
  %v3119 = vsel %vm2189, %v3081, inf
  %3120 = vmin.xlane.f32.xlu0 %v3119
  %v3121 = vpop.xlane.xlu0 %3120
  %v3122 = vsel %vm2189, %v3082, inf
  %3123 = vmin.xlane.f32.xlu0 %v3122
  %v3124 = vpop.xlane.xlu0 %3123
  %v3125 = vsel %vm2189, %v3083, inf
  %3126 = vmin.xlane.f32.xlu0 %v3125
  %v3127 = vpop.xlane.xlu0 %3126
  %v3128 = vsel %vm2189, %v3084, inf
  %3129 = vmin.xlane.f32.xlu0 %v3128
  %v3130 = vpop.xlane.xlu0 %3129
  %v3131 = vsel %vm2189, %v3085, inf
  %3132 = vmin.xlane.f32.xlu0 %v3131
  %v3133 = vpop.xlane.xlu0 %3132
  %vm3134 = vcmp.eq.f32.partialorder %v3070, %v3088
  %vm3135 = vcmp.eq.f32.partialorder %v3071, %v3091
  %vm3136 = vcmp.eq.f32.partialorder %v3072, %v3094
  %vm3137 = vcmp.eq.f32.partialorder %v3073, %v3097
  %vm3138 = vcmp.eq.f32.partialorder %v3074, %v3100
  %vm3139 = vcmp.eq.f32.partialorder %v3075, %v3103
  %vm3140 = vcmp.eq.f32.partialorder %v3076, %v3106
  %vm3141 = vcmp.eq.f32.partialorder %v3077, %v3109
  %vm3142 = vcmp.eq.f32.partialorder %v3078, %v3112
  %vm3143 = vcmp.eq.f32.partialorder %v3079, %v3115
  %vm3144 = vcmp.eq.f32.partialorder %v3080, %v3118
  %vm3145 = vcmp.eq.f32.partialorder %v3081, %v3121
  %vm3146 = vcmp.eq.f32.partialorder %v3082, %v3124
  %vm3147 = vcmp.eq.f32.partialorder %v3083, %v3127
  %vm3148 = vcmp.eq.f32.partialorder %v3084, %v3130
  %vm3149 = vcmp.eq.f32.partialorder %v3085, %v3133
  %v3150 = vsel %vm3134, %v2188, 16
  %v3151 = vsel %vm3135, %v2188, 16
  %v3152 = vsel %vm3136, %v2188, 16
  %v3153 = vsel %vm3137, %v2188, 16
  %v3154 = vsel %vm3138, %v2188, 16
  %v3155 = vsel %vm3139, %v2188, 16
  %v3156 = vsel %vm3140, %v2188, 16
  %v3157 = vsel %vm3141, %v2188, 16
  %v3158 = vsel %vm3142, %v2188, 16
  %v3159 = vsel %vm3143, %v2188, 16
  %v3160 = vsel %vm3144, %v2188, 16
  %v3161 = vsel %vm3145, %v2188, 16
  %v3162 = vsel %vm3146, %v2188, 16
  %v3163 = vsel %vm3147, %v2188, 16
  %v3164 = vsel %vm3148, %v2188, 16
  %v3165 = vsel %vm3149, %v2188, 16
  %v3166 = vsel %vm2189, %v3150, 2147483647
  %v3167 = vand.u32 %v3166, 65535
  %v3168 = vshra.s32 %v3166, 16
  %v3169 = vcvt.s32.f32 %v3167
  %v3170 = vcvt.s32.f32 %v3168
  %3171 = vmin.xlane.f32.xlu0 %v3170
  %v3172 = vpop.xlane.xlu0 %3171
  %vm3173 = vcmp.eq.f32.partialorder %v3170, %v3172
  %v3174 = vsel %vm3173, %v3169, inf
  %3175 = vmin.xlane.f32.xlu0 %v3174
  %v3176 = vpop.xlane.xlu0 %3175
  %v3177 = vcvt.f32.s32 %v3176
  %v3178 = vcvt.f32.s32 %v3172
  %v3179 = vshll.u32 %v3178, 16
  %v3180 = vadd.s32 %v3179, %v3177
  %v3181 = vsel %vm2189, %v3151, 2147483647
  %v3182 = vand.u32 %v3181, 65535
  %v3183 = vshra.s32 %v3181, 16
  %v3184 = vcvt.s32.f32 %v3182
  %v3185 = vcvt.s32.f32 %v3183
  %3186 = vmin.xlane.f32.xlu0 %v3185
  %v3187 = vpop.xlane.xlu0 %3186
  %vm3188 = vcmp.eq.f32.partialorder %v3185, %v3187
  %v3189 = vsel %vm3188, %v3184, inf
  %3190 = vmin.xlane.f32.xlu0 %v3189
  %v3191 = vpop.xlane.xlu0 %3190
  %v3192 = vcvt.f32.s32 %v3191
  %v3193 = vcvt.f32.s32 %v3187
  %v3194 = vshll.u32 %v3193, 16
  %v3195 = vadd.s32 %v3194, %v3192
  %v3196 = vsel %vm2189, %v3152, 2147483647
  %v3197 = vand.u32 %v3196, 65535
  %v3198 = vshra.s32 %v3196, 16
  %v3199 = vcvt.s32.f32 %v3197
  %v3200 = vcvt.s32.f32 %v3198
  %3201 = vmin.xlane.f32.xlu0 %v3200
  %v3202 = vpop.xlane.xlu0 %3201
  %vm3203 = vcmp.eq.f32.partialorder %v3200, %v3202
  %v3204 = vsel %vm3203, %v3199, inf
  %3205 = vmin.xlane.f32.xlu0 %v3204
  %v3206 = vpop.xlane.xlu0 %3205
  %v3207 = vcvt.f32.s32 %v3206
  %v3208 = vcvt.f32.s32 %v3202
  %v3209 = vshll.u32 %v3208, 16
  %v3210 = vadd.s32 %v3209, %v3207
  %v3211 = vsel %vm2189, %v3153, 2147483647
  %v3212 = vand.u32 %v3211, 65535
  %v3213 = vshra.s32 %v3211, 16
  %v3214 = vcvt.s32.f32 %v3212
  %v3215 = vcvt.s32.f32 %v3213
  %3216 = vmin.xlane.f32.xlu0 %v3215
  %v3217 = vpop.xlane.xlu0 %3216
  %vm3218 = vcmp.eq.f32.partialorder %v3215, %v3217
  %v3219 = vsel %vm3218, %v3214, inf
  %3220 = vmin.xlane.f32.xlu0 %v3219
  %v3221 = vpop.xlane.xlu0 %3220
  %v3222 = vcvt.f32.s32 %v3221
  %v3223 = vcvt.f32.s32 %v3217
  %v3224 = vshll.u32 %v3223, 16
  %v3225 = vadd.s32 %v3224, %v3222
  %v3226 = vsel %vm2189, %v3154, 2147483647
  %v3227 = vand.u32 %v3226, 65535
  %v3228 = vshra.s32 %v3226, 16
  %v3229 = vcvt.s32.f32 %v3227
  %v3230 = vcvt.s32.f32 %v3228
  %3231 = vmin.xlane.f32.xlu0 %v3230
  %v3232 = vpop.xlane.xlu0 %3231
  %vm3233 = vcmp.eq.f32.partialorder %v3230, %v3232
  %v3234 = vsel %vm3233, %v3229, inf
  %3235 = vmin.xlane.f32.xlu0 %v3234
  %v3236 = vpop.xlane.xlu0 %3235
  %v3237 = vcvt.f32.s32 %v3236
  %v3238 = vcvt.f32.s32 %v3232
  %v3239 = vshll.u32 %v3238, 16
  %v3240 = vadd.s32 %v3239, %v3237
  %v3241 = vsel %vm2189, %v3155, 2147483647
  %v3242 = vand.u32 %v3241, 65535
  %v3243 = vshra.s32 %v3241, 16
  %v3244 = vcvt.s32.f32 %v3242
  %v3245 = vcvt.s32.f32 %v3243
  %3246 = vmin.xlane.f32.xlu0 %v3245
  %v3247 = vpop.xlane.xlu0 %3246
  %vm3248 = vcmp.eq.f32.partialorder %v3245, %v3247
  %v3249 = vsel %vm3248, %v3244, inf
  %3250 = vmin.xlane.f32.xlu0 %v3249
  %v3251 = vpop.xlane.xlu0 %3250
  %v3252 = vcvt.f32.s32 %v3251
  %v3253 = vcvt.f32.s32 %v3247
  %v3254 = vshll.u32 %v3253, 16
  %v3255 = vadd.s32 %v3254, %v3252
  %v3256 = vsel %vm2189, %v3156, 2147483647
  %v3257 = vand.u32 %v3256, 65535
  %v3258 = vshra.s32 %v3256, 16
  %v3259 = vcvt.s32.f32 %v3257
  %v3260 = vcvt.s32.f32 %v3258
  %3261 = vmin.xlane.f32.xlu0 %v3260
  %v3262 = vpop.xlane.xlu0 %3261
  %vm3263 = vcmp.eq.f32.partialorder %v3260, %v3262
  %v3264 = vsel %vm3263, %v3259, inf
  %3265 = vmin.xlane.f32.xlu0 %v3264
  %v3266 = vpop.xlane.xlu0 %3265
  %v3267 = vcvt.f32.s32 %v3266
  %v3268 = vcvt.f32.s32 %v3262
  %v3269 = vshll.u32 %v3268, 16
  %v3270 = vadd.s32 %v3269, %v3267
  %v3271 = vsel %vm2189, %v3157, 2147483647
  %v3272 = vand.u32 %v3271, 65535
  %v3273 = vshra.s32 %v3271, 16
  %v3274 = vcvt.s32.f32 %v3272
  %v3275 = vcvt.s32.f32 %v3273
  %3276 = vmin.xlane.f32.xlu0 %v3275
  %v3277 = vpop.xlane.xlu0 %3276
  %vm3278 = vcmp.eq.f32.partialorder %v3275, %v3277
  %v3279 = vsel %vm3278, %v3274, inf
  %3280 = vmin.xlane.f32.xlu0 %v3279
  %v3281 = vpop.xlane.xlu0 %3280
  %v3282 = vcvt.f32.s32 %v3281
  %v3283 = vcvt.f32.s32 %v3277
  %v3284 = vshll.u32 %v3283, 16
  %v3285 = vadd.s32 %v3284, %v3282
  %v3286 = vsel %vm2189, %v3158, 2147483647
  %v3287 = vand.u32 %v3286, 65535
  %v3288 = vshra.s32 %v3286, 16
  %v3289 = vcvt.s32.f32 %v3287
  %v3290 = vcvt.s32.f32 %v3288
  %3291 = vmin.xlane.f32.xlu0 %v3290
  %v3292 = vpop.xlane.xlu0 %3291
  %vm3293 = vcmp.eq.f32.partialorder %v3290, %v3292
  %v3294 = vsel %vm3293, %v3289, inf
  %3295 = vmin.xlane.f32.xlu0 %v3294
  %v3296 = vpop.xlane.xlu0 %3295
  %v3297 = vcvt.f32.s32 %v3296
  %v3298 = vcvt.f32.s32 %v3292
  %v3299 = vshll.u32 %v3298, 16
  %v3300 = vadd.s32 %v3299, %v3297
  %v3301 = vsel %vm2189, %v3159, 2147483647
  %v3302 = vand.u32 %v3301, 65535
  %v3303 = vshra.s32 %v3301, 16
  %v3304 = vcvt.s32.f32 %v3302
  %v3305 = vcvt.s32.f32 %v3303
  %3306 = vmin.xlane.f32.xlu0 %v3305
  %v3307 = vpop.xlane.xlu0 %3306
  %vm3308 = vcmp.eq.f32.partialorder %v3305, %v3307
  %v3309 = vsel %vm3308, %v3304, inf
  %3310 = vmin.xlane.f32.xlu0 %v3309
  %v3311 = vpop.xlane.xlu0 %3310
  %v3312 = vcvt.f32.s32 %v3311
  %v3313 = vcvt.f32.s32 %v3307
  %v3314 = vshll.u32 %v3313, 16
  %v3315 = vadd.s32 %v3314, %v3312
  %v3316 = vsel %vm2189, %v3160, 2147483647
  %v3317 = vand.u32 %v3316, 65535
  %v3318 = vshra.s32 %v3316, 16
  %v3319 = vcvt.s32.f32 %v3317
  %v3320 = vcvt.s32.f32 %v3318
  %3321 = vmin.xlane.f32.xlu0 %v3320
  %v3322 = vpop.xlane.xlu0 %3321
  %vm3323 = vcmp.eq.f32.partialorder %v3320, %v3322
  %v3324 = vsel %vm3323, %v3319, inf
  %3325 = vmin.xlane.f32.xlu0 %v3324
  %v3326 = vpop.xlane.xlu0 %3325
  %v3327 = vcvt.f32.s32 %v3326
  %v3328 = vcvt.f32.s32 %v3322
  %v3329 = vshll.u32 %v3328, 16
  %v3330 = vadd.s32 %v3329, %v3327
  %v3331 = vsel %vm2189, %v3161, 2147483647
  %v3332 = vand.u32 %v3331, 65535
  %v3333 = vshra.s32 %v3331, 16
  %v3334 = vcvt.s32.f32 %v3332
  %v3335 = vcvt.s32.f32 %v3333
  %3336 = vmin.xlane.f32.xlu0 %v3335
  %v3337 = vpop.xlane.xlu0 %3336
  %vm3338 = vcmp.eq.f32.partialorder %v3335, %v3337
  %v3339 = vsel %vm3338, %v3334, inf
  %3340 = vmin.xlane.f32.xlu0 %v3339
  %v3341 = vpop.xlane.xlu0 %3340
  %v3342 = vcvt.f32.s32 %v3341
  %v3343 = vcvt.f32.s32 %v3337
  %v3344 = vshll.u32 %v3343, 16
  %v3345 = vadd.s32 %v3344, %v3342
  %v3346 = vsel %vm2189, %v3162, 2147483647
  %v3347 = vand.u32 %v3346, 65535
  %v3348 = vshra.s32 %v3346, 16
  %v3349 = vcvt.s32.f32 %v3347
  %v3350 = vcvt.s32.f32 %v3348
  %3351 = vmin.xlane.f32.xlu0 %v3350
  %v3352 = vpop.xlane.xlu0 %3351
  %vm3353 = vcmp.eq.f32.partialorder %v3350, %v3352
  %v3354 = vsel %vm3353, %v3349, inf
  %3355 = vmin.xlane.f32.xlu0 %v3354
  %v3356 = vpop.xlane.xlu0 %3355
  %v3357 = vcvt.f32.s32 %v3356
  %v3358 = vcvt.f32.s32 %v3352
  %v3359 = vshll.u32 %v3358, 16
  %v3360 = vadd.s32 %v3359, %v3357
  %v3361 = vsel %vm2189, %v3163, 2147483647
  %v3362 = vand.u32 %v3361, 65535
  %v3363 = vshra.s32 %v3361, 16
  %v3364 = vcvt.s32.f32 %v3362
  %v3365 = vcvt.s32.f32 %v3363
  %3366 = vmin.xlane.f32.xlu0 %v3365
  %v3367 = vpop.xlane.xlu0 %3366
  %vm3368 = vcmp.eq.f32.partialorder %v3365, %v3367
  %v3369 = vsel %vm3368, %v3364, inf
  %3370 = vmin.xlane.f32.xlu0 %v3369
  %v3371 = vpop.xlane.xlu0 %3370
  %v3372 = vcvt.f32.s32 %v3371
  %v3373 = vcvt.f32.s32 %v3367
  %v3374 = vshll.u32 %v3373, 16
  %v3375 = vadd.s32 %v3374, %v3372
  %v3376 = vsel %vm2189, %v3164, 2147483647
  %v3377 = vand.u32 %v3376, 65535
  %v3378 = vshra.s32 %v3376, 16
  %v3379 = vcvt.s32.f32 %v3377
  %v3380 = vcvt.s32.f32 %v3378
  %3381 = vmin.xlane.f32.xlu0 %v3380
  %v3382 = vpop.xlane.xlu0 %3381
  %vm3383 = vcmp.eq.f32.partialorder %v3380, %v3382
  %v3384 = vsel %vm3383, %v3379, inf
  %3385 = vmin.xlane.f32.xlu0 %v3384
  %v3386 = vpop.xlane.xlu0 %3385
  %v3387 = vcvt.f32.s32 %v3386
  %v3388 = vcvt.f32.s32 %v3382
  %v3389 = vshll.u32 %v3388, 16
  %v3390 = vadd.s32 %v3389, %v3387
  %v3391 = vsel %vm2189, %v3165, 2147483647
  %v3392 = vand.u32 %v3391, 65535
  %v3393 = vshra.s32 %v3391, 16
  %v3394 = vcvt.s32.f32 %v3392
  %v3395 = vcvt.s32.f32 %v3393
  %3396 = vmin.xlane.f32.xlu0 %v3395
  %v3397 = vpop.xlane.xlu0 %3396
  %vm3398 = vcmp.eq.f32.partialorder %v3395, %v3397
  %v3399 = vsel %vm3398, %v3394, inf
  %3400 = vmin.xlane.f32.xlu0 %v3399
  %v3401 = vpop.xlane.xlu0 %3400
  %v3402 = vcvt.f32.s32 %v3401
  %v3403 = vcvt.f32.s32 %v3397
  %v3404 = vshll.u32 %v3403, 16
  %v3405 = vadd.s32 %v3404, %v3402
  %vm3406 = vcmp.eq.s32.totalorder %v2188, %v3180
  %vm3407 = vcmp.eq.s32.totalorder %v2188, %v3195
  %vm3408 = vcmp.eq.s32.totalorder %v2188, %v3210
  %vm3409 = vcmp.eq.s32.totalorder %v2188, %v3225
  %vm3410 = vcmp.eq.s32.totalorder %v2188, %v3240
  %vm3411 = vcmp.eq.s32.totalorder %v2188, %v3255
  %vm3412 = vcmp.eq.s32.totalorder %v2188, %v3270
  %vm3413 = vcmp.eq.s32.totalorder %v2188, %v3285
  %vm3414 = vcmp.eq.s32.totalorder %v2188, %v3300
  %vm3415 = vcmp.eq.s32.totalorder %v2188, %v3315
  %vm3416 = vcmp.eq.s32.totalorder %v2188, %v3330
  %vm3417 = vcmp.eq.s32.totalorder %v2188, %v3345
  %vm3418 = vcmp.eq.s32.totalorder %v2188, %v3360
  %vm3419 = vcmp.eq.s32.totalorder %v2188, %v3375
  %vm3420 = vcmp.eq.s32.totalorder %v2188, %v3390
  %vm3421 = vcmp.eq.s32.totalorder %v2188, %v3405
  %v3422 = vmax.f32 %v3088, 1e-16
  %v3423 = vmax.f32 %v3091, 1e-16
  %v3424 = vmax.f32 %v3094, 1e-16
  %v3425 = vmax.f32 %v3097, 1e-16
  %v3426 = vmax.f32 %v3100, 1e-16
  %v3427 = vmax.f32 %v3103, 1e-16
  %v3428 = vmax.f32 %v3106, 1e-16
  %v3429 = vmax.f32 %v3109, 1e-16
  %v3430 = vmax.f32 %v3112, 1e-16
  %v3431 = vmax.f32 %v3115, 1e-16
  %v3432 = vmax.f32 %v3118, 1e-16
  %v3433 = vmax.f32 %v3121, 1e-16
  %v3434 = vmax.f32 %v3124, 1e-16
  %v3435 = vmax.f32 %v3127, 1e-16
  %v3436 = vmax.f32 %v3130, 1e-16
  %v3437 = vmax.f32 %v3133, 1e-16
  %v3438 = vrcp.pop %v3422
  %v3439 = vmul.f32 1.0, %v3438
  %v3440 = vrcp.pop %v3423
  %v3441 = vmul.f32 1.0, %v3440
  %v3442 = vrcp.pop %v3424
  %v3443 = vmul.f32 1.0, %v3442
  %v3444 = vrcp.pop %v3425
  %v3445 = vmul.f32 1.0, %v3444
  %v3446 = vrcp.pop %v3426
  %v3447 = vmul.f32 1.0, %v3446
  %v3448 = vrcp.pop %v3427
  %v3449 = vmul.f32 1.0, %v3448
  %v3450 = vrcp.pop %v3428
  %v3451 = vmul.f32 1.0, %v3450
  %v3452 = vrcp.pop %v3429
  %v3453 = vmul.f32 1.0, %v3452
  %v3454 = vrcp.pop %v3430
  %v3455 = vmul.f32 1.0, %v3454
  %v3456 = vrcp.pop %v3431
  %v3457 = vmul.f32 1.0, %v3456
  %v3458 = vrcp.pop %v3432
  %v3459 = vmul.f32 1.0, %v3458
  %v3460 = vrcp.pop %v3433
  %v3461 = vmul.f32 1.0, %v3460
  %v3462 = vrcp.pop %v3434
  %v3463 = vmul.f32 1.0, %v3462
  %v3464 = vrcp.pop %v3435
  %v3465 = vmul.f32 1.0, %v3464
  %v3466 = vrcp.pop %v3436
  %v3467 = vmul.f32 1.0, %v3466
  %v3468 = vrcp.pop %v3437
  %v3469 = vmul.f32 1.0, %v3468
  %v3470 = vsel %vm3406, %v3439, 0.0
  %v3471 = vsel %vm3407, %v3441, 0.0
  %v3472 = vsel %vm3408, %v3443, 0.0
  %v3473 = vsel %vm3409, %v3445, 0.0
  %v3474 = vsel %vm3410, %v3447, 0.0
  %v3475 = vsel %vm3411, %v3449, 0.0
  %v3476 = vsel %vm3412, %v3451, 0.0
  %v3477 = vsel %vm3413, %v3453, 0.0
  %v3478 = vsel %vm3414, %v3455, 0.0
  %v3479 = vsel %vm3415, %v3457, 0.0
  %v3480 = vsel %vm3416, %v3459, 0.0
  %v3481 = vsel %vm3417, %v3461, 0.0
  %v3482 = vsel %vm3418, %v3463, 0.0
  %v3483 = vsel %vm3419, %v3465, 0.0
  %v3484 = vsel %vm3420, %v3467, 0.0
  %v3485 = vsel %vm3421, %v3469, 0.0
  %v3486 = vadd.f32 %v3038, %v3470
  %v3487 = vadd.f32 %v3039, %v3471
  %v3488 = vadd.f32 %v3040, %v3472
  %v3489 = vadd.f32 %v3041, %v3473
  %v3490 = vadd.f32 %v3042, %v3474
  %v3491 = vadd.f32 %v3043, %v3475
  %v3492 = vadd.f32 %v3044, %v3476
  %v3493 = vadd.f32 %v3045, %v3477
  %v3494 = vadd.f32 %v3046, %v3478
  %v3495 = vadd.f32 %v3047, %v3479
  %v3496 = vadd.f32 %v3048, %v3480
  %v3497 = vadd.f32 %v3049, %v3481
  %v3498 = vadd.f32 %v3050, %v3482
  %v3499 = vadd.f32 %v3051, %v3483
  %v3500 = vadd.f32 %v3052, %v3484
  %v3501 = vadd.f32 %v3053, %v3485
  %v3502 = vadd.f32 %v3054, %v3439
  %v3503 = vadd.f32 %v3055, %v3441
  %v3504 = vadd.f32 %v3056, %v3443
  %v3505 = vadd.f32 %v3057, %v3445
  %v3506 = vadd.f32 %v3058, %v3447
  %v3507 = vadd.f32 %v3059, %v3449
  %v3508 = vadd.f32 %v3060, %v3451
  %v3509 = vadd.f32 %v3061, %v3453
  %v3510 = vadd.f32 %v3062, %v3455
  %v3511 = vadd.f32 %v3063, %v3457
  %v3512 = vadd.f32 %v3064, %v3459
  %v3513 = vadd.f32 %v3065, %v3461
  %v3514 = vadd.f32 %v3066, %v3463
  %v3515 = vadd.f32 %v3067, %v3465
  %v3516 = vadd.f32 %v3068, %v3467
  %v3517 = vadd.f32 %v3069, %v3469
  %v3518 = vld [vmem:[%s3] sm:$0xff]
  %v3519 = vld [vmem:[%s3 + $0x8] sm:$0xff]
  %v3521 = vsel %vm2189, %v3486, 0
  %v3524 = vsel %vm2189, %v3487, 0
  %v3527 = vsel %vm2189, %v3488, 0
  %v3530 = vsel %vm2189, %v3489, 0
  %v3533 = vsel %vm2189, %v3490, 0
  %v3536 = vsel %vm2189, %v3491, 0
  %v3539 = vsel %vm2189, %v3492, 0
  %v3542 = vsel %vm2189, %v3493, 0
  %v3545 = vsel %vm2189, %v3494, 0
  %v3548 = vsel %vm2189, %v3495, 0
  %v3551 = vsel %vm2189, %v3496, 0
  %v3554 = vsel %vm2189, %v3497, 0
  %v3557 = vsel %vm2189, %v3498, 0
  %v3560 = vsel %vm2189, %v3499, 0
  %v3563 = vsel %vm2189, %v3500, 0
  %v3566 = vsel %vm2189, %v3501, 0
  %3568 = vmatprep.subr.mxu0 0.0
  %3569 = vmatpush1.msra.mxu0 %v3518
  %3570 = vmatprep.subr.mxu0 0.0
  %3571 = vmatpush1.msra.mxu0 %v3519
  %3572 = vmatprep.subr.mxu0 0.0
  %3573 = vmatpush1.msra.mxu0 0.0
  %3574 = vmatprep.subr.mxu0 0.0
  %3575 = vmatpush1.msra.mxu0 0.0
  %3576 = vmatprep.subr.mxu0 0.0
  %3577 = vmatpush1.msra.mxu0 0.0
  %3578 = vmatprep.subr.mxu0 0.0
  %3579 = vmatpush1.msra.mxu0 0.0
  %3580 = vmatprep.subr.mxu0 0.0
  %3581 = vmatpush1.msra.mxu0 0.0
  %3582 = vmatprep.subr.mxu0 0.0
  %3583 = vmatpush1.msra.mxu0 0.0
  %3584 = vmatprep.subr.mxu0 0.0
  %3585 = vmatpush1.msra.mxu0 0.0
  %3586 = vmatprep.subr.mxu0 0.0
  %3587 = vmatpush1.msra.mxu0 0.0
  %3588 = vmatprep.subr.mxu0 0.0
  %3589 = vmatpush1.msra.mxu0 0.0
  %3590 = vmatprep.subr.mxu0 0.0
  %3591 = vmatpush1.msra.mxu0 0.0
  %3592 = vmatprep.subr.mxu0 0.0
  %3593 = vmatpush1.msra.mxu0 0.0
  %3594 = vmatprep.subr.mxu0 0.0
  %3595 = vmatpush1.msra.mxu0 0.0
  %3596 = vmatprep.subr.mxu0 0.0
  %3597 = vmatpush1.msra.mxu0 0.0
  %3598 = vmatprep.subr.mxu0 0.0
  %3599 = vmatpush1.msra.mxu0 0.0
  %3600 = vmatprep.subr.mxu0 0.0
  %3601 = vmatpush1.msra.mxu0 0.0
  %3602 = vmatprep.subr.mxu0 0.0
  %3603 = vmatpush1.msra.mxu0 0.0
  %3604 = vmatprep.subr.mxu0 0.0
  %3605 = vmatpush1.msra.mxu0 0.0
  %3606 = vmatprep.subr.mxu0 0.0
  %3607 = vmatpush1.msra.mxu0 0.0
  %3608 = vmatprep.subr.mxu0 0.0
  %3609 = vmatpush1.msra.mxu0 0.0
  %3610 = vmatprep.subr.mxu0 0.0
  %3611 = vmatpush1.msra.mxu0 0.0
  %3612 = vmatprep.subr.mxu0 0.0
  %3613 = vmatpush1.msra.mxu0 0.0
  %3614 = vmatprep.subr.mxu0 0.0
  %3615 = vmatpush1.msra.mxu0 0.0
  %3616 = vmatprep.subr.mxu0 0.0
  %3617 = vmatpush1.msra.mxu0 0.0
  %3618 = vmatprep.subr.mxu0 0.0
  %3619 = vmatpush1.msra.mxu0 0.0
  %3620 = vmatprep.subr.mxu0 0.0
  %3621 = vmatpush1.msra.mxu0 0.0
  %3622 = vmatprep.subr.mxu0 0.0
  %3623 = vmatpush1.msra.mxu0 0.0
  %3624 = vmatprep.subr.mxu0 0.0
  %3625 = vmatpush1.msra.mxu0 0.0
  %3626 = vmatprep.subr.mxu0 0.0
  %3627 = vmatpush1.msra.mxu0 0.0
  %3628 = vmatprep.subr.mxu0 0.0
  %3629 = vmatpush1.msra.mxu0 0.0
  %3630 = vmatprep.subr.mxu0 0.0
  %3631 = vmatpush1.msra.mxu0 0.0
  %3632 = vmatprep.mubr.f32.mxu0 0.0
  %3633 = vmatmul.mubr.f32.gmra.mrb[0].mxu0 %v3521
  %v3634 = vpop.f32.mrb[0].mxu0
  %v3635 = vadd.f32 0.0, %v3634
  %v3636 = vpop.f32.mrb[0].mxu0
  %3637 = vmatprep.mubr.f32.mxu0 0.0
  %3638 = vmatmul.mubr.f32.gmra.mrb[0].mxu0 %v3524
  %v3639 = vpop.f32.mrb[0].mxu0
  %v3640 = vadd.f32 0.0, %v3639
  %v3641 = vpop.f32.mrb[0].mxu0
  %3642 = vmatprep.mubr.f32.mxu0 0.0
  %3643 = vmatmul.mubr.f32.gmra.mrb[0].mxu0 %v3527
  %v3644 = vpop.f32.mrb[0].mxu0
  %v3645 = vadd.f32 0.0, %v3644
  %v3646 = vpop.f32.mrb[0].mxu0
  %3647 = vmatprep.mubr.f32.mxu0 0.0
  %3648 = vmatmul.mubr.f32.gmra.mrb[0].mxu0 %v3530
  %v3649 = vpop.f32.mrb[0].mxu0
  %v3650 = vadd.f32 0.0, %v3649
  %v3651 = vpop.f32.mrb[0].mxu0
  %3652 = vmatprep.mubr.f32.mxu0 0.0
  %3653 = vmatmul.mubr.f32.gmra.mrb[0].mxu0 %v3533
  %v3654 = vpop.f32.mrb[0].mxu0
  %v3655 = vadd.f32 0.0, %v3654
  %v3656 = vpop.f32.mrb[0].mxu0
  %3657 = vmatprep.mubr.f32.mxu0 0.0
  %3658 = vmatmul.mubr.f32.gmra.mrb[0].mxu0 %v3536
  %v3659 = vpop.f32.mrb[0].mxu0
  %v3660 = vadd.f32 0.0, %v3659
  %v3661 = vpop.f32.mrb[0].mxu0
  %3662 = vmatprep.mubr.f32.mxu0 0.0
  %3663 = vmatmul.mubr.f32.gmra.mrb[0].mxu0 %v3539
  %v3664 = vpop.f32.mrb[0].mxu0
  %v3665 = vadd.f32 0.0, %v3664
  %v3666 = vpop.f32.mrb[0].mxu0
  %3667 = vmatprep.mubr.f32.mxu0 0.0
  %3668 = vmatmul.mubr.f32.gmra.mrb[0].mxu0 %v3542
  %v3669 = vpop.f32.mrb[0].mxu0
  %v3670 = vadd.f32 0.0, %v3669
  %v3671 = vpop.f32.mrb[0].mxu0
  %3672 = vmatprep.mubr.f32.mxu0 0.0
  %3673 = vmatmul.mubr.f32.gmra.mrb[0].mxu0 %v3545
  %v3674 = vpop.f32.mrb[0].mxu0
  %v3675 = vadd.f32 0.0, %v3674
  %v3676 = vpop.f32.mrb[0].mxu0
  %3677 = vmatprep.mubr.f32.mxu0 0.0
  %3678 = vmatmul.mubr.f32.gmra.mrb[0].mxu0 %v3548
  %v3679 = vpop.f32.mrb[0].mxu0
  %v3680 = vadd.f32 0.0, %v3679
  %v3681 = vpop.f32.mrb[0].mxu0
  %3682 = vmatprep.mubr.f32.mxu0 0.0
  %3683 = vmatmul.mubr.f32.gmra.mrb[0].mxu0 %v3551
  %v3684 = vpop.f32.mrb[0].mxu0
  %v3685 = vadd.f32 0.0, %v3684
  %v3686 = vpop.f32.mrb[0].mxu0
  %3687 = vmatprep.mubr.f32.mxu0 0.0
  %3688 = vmatmul.mubr.f32.gmra.mrb[0].mxu0 %v3554
  %v3689 = vpop.f32.mrb[0].mxu0
  %v3690 = vadd.f32 0.0, %v3689
  %v3691 = vpop.f32.mrb[0].mxu0
  %3692 = vmatprep.mubr.f32.mxu0 0.0
  %3693 = vmatmul.mubr.f32.gmra.mrb[0].mxu0 %v3557
  %v3694 = vpop.f32.mrb[0].mxu0
  %v3695 = vadd.f32 0.0, %v3694
  %v3696 = vpop.f32.mrb[0].mxu0
  %3697 = vmatprep.mubr.f32.mxu0 0.0
  %3698 = vmatmul.mubr.f32.gmra.mrb[0].mxu0 %v3560
  %v3699 = vpop.f32.mrb[0].mxu0
  %v3700 = vadd.f32 0.0, %v3699
  %v3701 = vpop.f32.mrb[0].mxu0
  %3702 = vmatprep.mubr.f32.mxu0 0.0
  %3703 = vmatmul.mubr.f32.gmra.mrb[0].mxu0 %v3563
  %v3704 = vpop.f32.mrb[0].mxu0
  %v3705 = vadd.f32 0.0, %v3704
  %v3706 = vpop.f32.mrb[0].mxu0
  %3707 = vmatprep.mubr.f32.mxu0 0.0
  %3708 = vmatmul.mubr.f32.gmra.mrb[0].mxu0 %v3566
  %v3709 = vpop.f32.mrb[0].mxu0
  %v3710 = vadd.f32 0.0, %v3709
  %v3711 = vpop.f32.mrb[0].mxu0
  %3712 = vdwg.mxu0
  %v3713 = vrcp.pop %v3502
  %v3714 = vmul.f32 %v3635, %v3713
  %v3715 = vrcp.pop %v3503
  %v3716 = vmul.f32 %v3640, %v3715
  %v3717 = vrcp.pop %v3504
  %v3718 = vmul.f32 %v3645, %v3717
  %v3719 = vrcp.pop %v3505
  %v3720 = vmul.f32 %v3650, %v3719
  %v3721 = vrcp.pop %v3506
  %v3722 = vmul.f32 %v3655, %v3721
  %v3723 = vrcp.pop %v3507
  %v3724 = vmul.f32 %v3660, %v3723
  %v3725 = vrcp.pop %v3508
  %v3726 = vmul.f32 %v3665, %v3725
  %v3727 = vrcp.pop %v3509
  %v3728 = vmul.f32 %v3670, %v3727
  %v3729 = vrcp.pop %v3510
  %v3730 = vmul.f32 %v3675, %v3729
  %v3731 = vrcp.pop %v3511
  %v3732 = vmul.f32 %v3680, %v3731
  %v3733 = vrcp.pop %v3512
  %v3734 = vmul.f32 %v3685, %v3733
  %v3735 = vrcp.pop %v3513
  %v3736 = vmul.f32 %v3690, %v3735
  %v3737 = vrcp.pop %v3514
  %v3738 = vmul.f32 %v3695, %v3737
  %v3739 = vrcp.pop %v3515
  %v3740 = vmul.f32 %v3700, %v3739
  %v3741 = vrcp.pop %v3516
  %v3742 = vmul.f32 %v3705, %v3741
  %v3743 = vrcp.pop %v3517
  %v3744 = vmul.f32 %v3710, %v3743
  %v3745 = vld [vmem:[%s15] sm:$0x7]
  %v3746 = vld [vmem:[%s16] sm:$0xff]
  %v3747 = vld [vmem:[%s16 + $0x8] sm:$0xff]
  %v3748 = vld [vmem:[%s16 + $0x10] sm:$0xff]
  %v3749 = vld [vmem:[%s16 + $0x18] sm:$0xff]
  %v3751 = vsel %vm640, %v1805, 0
  %v3754 = vsel %vm640, %v1806, 0
  %v3757 = vsel %vm640, %v1807, 0
  %v3760 = vsel %vm640, %v1808, 0
  %v3763 = vsel %vm640, %v1809, 0
  %v3766 = vsel %vm640, %v1810, 0
  %v3769 = vsel %vm640, %v1811, 0
  %v3772 = vsel %vm640, %v1812, 0
  %v3775 = vsel %vm640, %v1813, 0
  %v3778 = vsel %vm640, %v1814, 0
  %v3781 = vsel %vm640, %v1815, 0
  %v3784 = vsel %vm640, %v1816, 0
  %v3787 = vsel %vm640, %v1817, 0
  %v3790 = vsel %vm640, %v1818, 0
  %v3793 = vsel %vm640, %v1819, 0
  %v3796 = vsel %vm640, %v1820, 0
  %3798 = vmatprep.subr.mxu0 0.0
  %3799 = vmatpush1.msra.mxu0 %v3746
  %3800 = vmatprep.subr.mxu0 0.0
  %3801 = vmatpush1.msra.mxu0 %v3747
  %3802 = vmatprep.subr.mxu0 0.0
  %3803 = vmatpush1.msra.mxu0 %v3748
  %3804 = vmatprep.subr.mxu0 0.0
  %3805 = vmatpush1.msra.mxu0 %v3749
  %3806 = vmatprep.subr.mxu0 0.0
  %3807 = vmatpush1.msra.mxu0 0.0
  %3808 = vmatprep.subr.mxu0 0.0
  %3809 = vmatpush1.msra.mxu0 0.0
  %3810 = vmatprep.subr.mxu0 0.0
  %3811 = vmatpush1.msra.mxu0 0.0
  %3812 = vmatprep.subr.mxu0 0.0
  %3813 = vmatpush1.msra.mxu0 0.0
  %3814 = vmatprep.subr.mxu0 0.0
  %3815 = vmatpush1.msra.mxu0 0.0
  %3816 = vmatprep.subr.mxu0 0.0
  %3817 = vmatpush1.msra.mxu0 0.0
  %3818 = vmatprep.subr.mxu0 0.0
  %3819 = vmatpush1.msra.mxu0 0.0
  %3820 = vmatprep.subr.mxu0 0.0
  %3821 = vmatpush1.msra.mxu0 0.0
  %3822 = vmatprep.subr.mxu0 0.0
  %3823 = vmatpush1.msra.mxu0 0.0
  %3824 = vmatprep.subr.mxu0 0.0
  %3825 = vmatpush1.msra.mxu0 0.0
  %3826 = vmatprep.subr.mxu0 0.0
  %3827 = vmatpush1.msra.mxu0 0.0
  %3828 = vmatprep.subr.mxu0 0.0
  %3829 = vmatpush1.msra.mxu0 0.0
  %3830 = vmatprep.subr.mxu0 0.0
  %3831 = vmatpush1.msra.mxu0 0.0
  %3832 = vmatprep.subr.mxu0 0.0
  %3833 = vmatpush1.msra.mxu0 0.0
  %3834 = vmatprep.subr.mxu0 0.0
  %3835 = vmatpush1.msra.mxu0 0.0
  %3836 = vmatprep.subr.mxu0 0.0
  %3837 = vmatpush1.msra.mxu0 0.0
  %3838 = vmatprep.subr.mxu0 0.0
  %3839 = vmatpush1.msra.mxu0 0.0
  %3840 = vmatprep.subr.mxu0 0.0
  %3841 = vmatpush1.msra.mxu0 0.0
  %3842 = vmatprep.subr.mxu0 0.0
  %3843 = vmatpush1.msra.mxu0 0.0
  %3844 = vmatprep.subr.mxu0 0.0
  %3845 = vmatpush1.msra.mxu0 0.0
  %3846 = vmatprep.subr.mxu0 0.0
  %3847 = vmatpush1.msra.mxu0 0.0
  %3848 = vmatprep.subr.mxu0 0.0
  %3849 = vmatpush1.msra.mxu0 0.0
  %3850 = vmatprep.subr.mxu0 0.0
  %3851 = vmatpush1.msra.mxu0 0.0
  %3852 = vmatprep.subr.mxu0 0.0
  %3853 = vmatpush1.msra.mxu0 0.0
  %3854 = vmatprep.subr.mxu0 0.0
  %3855 = vmatpush1.msra.mxu0 0.0
  %3856 = vmatprep.subr.mxu0 0.0
  %3857 = vmatpush1.msra.mxu0 0.0
  %3858 = vmatprep.subr.mxu0 0.0
  %3859 = vmatpush1.msra.mxu0 0.0
  %3860 = vmatprep.subr.mxu0 0.0
  %3861 = vmatpush1.msra.mxu0 0.0
  %3862 = vmatprep.mubr.f32.mxu0 0.0
  %3863 = vmatmul.mubr.f32.gmra.mrb[0].mxu0 %v3751
  %v3864 = vpop.f32.mrb[0].mxu0
  %v3865 = vadd.f32 0.0, %v3864
  %v3866 = vpop.f32.mrb[0].mxu0
  %3867 = vmatprep.mubr.f32.mxu0 0.0
  %3868 = vmatmul.mubr.f32.gmra.mrb[0].mxu0 %v3754
  %v3869 = vpop.f32.mrb[0].mxu0
  %v3870 = vadd.f32 0.0, %v3869
  %v3871 = vpop.f32.mrb[0].mxu0
  %3872 = vmatprep.mubr.f32.mxu0 0.0
  %3873 = vmatmul.mubr.f32.gmra.mrb[0].mxu0 %v3757
  %v3874 = vpop.f32.mrb[0].mxu0
  %v3875 = vadd.f32 0.0, %v3874
  %v3876 = vpop.f32.mrb[0].mxu0
  %3877 = vmatprep.mubr.f32.mxu0 0.0
  %3878 = vmatmul.mubr.f32.gmra.mrb[0].mxu0 %v3760
  %v3879 = vpop.f32.mrb[0].mxu0
  %v3880 = vadd.f32 0.0, %v3879
  %v3881 = vpop.f32.mrb[0].mxu0
  %3882 = vmatprep.mubr.f32.mxu0 0.0
  %3883 = vmatmul.mubr.f32.gmra.mrb[0].mxu0 %v3763
  %v3884 = vpop.f32.mrb[0].mxu0
  %v3885 = vadd.f32 0.0, %v3884
  %v3886 = vpop.f32.mrb[0].mxu0
  %3887 = vmatprep.mubr.f32.mxu0 0.0
  %3888 = vmatmul.mubr.f32.gmra.mrb[0].mxu0 %v3766
  %v3889 = vpop.f32.mrb[0].mxu0
  %v3890 = vadd.f32 0.0, %v3889
  %v3891 = vpop.f32.mrb[0].mxu0
  %3892 = vmatprep.mubr.f32.mxu0 0.0
  %3893 = vmatmul.mubr.f32.gmra.mrb[0].mxu0 %v3769
  %v3894 = vpop.f32.mrb[0].mxu0
  %v3895 = vadd.f32 0.0, %v3894
  %v3896 = vpop.f32.mrb[0].mxu0
  %3897 = vmatprep.mubr.f32.mxu0 0.0
  %3898 = vmatmul.mubr.f32.gmra.mrb[0].mxu0 %v3772
  %v3899 = vpop.f32.mrb[0].mxu0
  %v3900 = vadd.f32 0.0, %v3899
  %v3901 = vpop.f32.mrb[0].mxu0
  %3902 = vmatprep.mubr.f32.mxu0 0.0
  %3903 = vmatmul.mubr.f32.gmra.mrb[0].mxu0 %v3775
  %v3904 = vpop.f32.mrb[0].mxu0
  %v3905 = vadd.f32 0.0, %v3904
  %v3906 = vpop.f32.mrb[0].mxu0
  %3907 = vmatprep.mubr.f32.mxu0 0.0
  %3908 = vmatmul.mubr.f32.gmra.mrb[0].mxu0 %v3778
  %v3909 = vpop.f32.mrb[0].mxu0
  %v3910 = vadd.f32 0.0, %v3909
  %v3911 = vpop.f32.mrb[0].mxu0
  %3912 = vmatprep.mubr.f32.mxu0 0.0
  %3913 = vmatmul.mubr.f32.gmra.mrb[0].mxu0 %v3781
  %v3914 = vpop.f32.mrb[0].mxu0
  %v3915 = vadd.f32 0.0, %v3914
  %v3916 = vpop.f32.mrb[0].mxu0
  %3917 = vmatprep.mubr.f32.mxu0 0.0
  %3918 = vmatmul.mubr.f32.gmra.mrb[0].mxu0 %v3784
  %v3919 = vpop.f32.mrb[0].mxu0
  %v3920 = vadd.f32 0.0, %v3919
  %v3921 = vpop.f32.mrb[0].mxu0
  %3922 = vmatprep.mubr.f32.mxu0 0.0
  %3923 = vmatmul.mubr.f32.gmra.mrb[0].mxu0 %v3787
  %v3924 = vpop.f32.mrb[0].mxu0
  %v3925 = vadd.f32 0.0, %v3924
  %v3926 = vpop.f32.mrb[0].mxu0
  %3927 = vmatprep.mubr.f32.mxu0 0.0
  %3928 = vmatmul.mubr.f32.gmra.mrb[0].mxu0 %v3790
  %v3929 = vpop.f32.mrb[0].mxu0
  %v3930 = vadd.f32 0.0, %v3929
  %v3931 = vpop.f32.mrb[0].mxu0
  %3932 = vmatprep.mubr.f32.mxu0 0.0
  %3933 = vmatmul.mubr.f32.gmra.mrb[0].mxu0 %v3793
  %v3934 = vpop.f32.mrb[0].mxu0
  %v3935 = vadd.f32 0.0, %v3934
  %v3936 = vpop.f32.mrb[0].mxu0
  %3937 = vmatprep.mubr.f32.mxu0 0.0
  %3938 = vmatmul.mubr.f32.gmra.mrb[0].mxu0 %v3796
  %v3939 = vpop.f32.mrb[0].mxu0
  %v3940 = vadd.f32 0.0, %v3939
  %v3941 = vpop.f32.mrb[0].mxu0
  %3942 = vdwg.mxu0
  %vm3943 = vcmask 23552
  %v3945 = vsel %vm3943, %v3714, 0
  %v3948 = vsel %vm3943, %v3716, 0
  %v3951 = vsel %vm3943, %v3718, 0
  %v3954 = vsel %vm3943, %v3720, 0
  %v3957 = vsel %vm3943, %v3722, 0
  %v3960 = vsel %vm3943, %v3724, 0
  %v3963 = vsel %vm3943, %v3726, 0
  %v3966 = vsel %vm3943, %v3728, 0
  %v3969 = vsel %vm3943, %v3730, 0
  %v3972 = vsel %vm3943, %v3732, 0
  %v3975 = vsel %vm3943, %v3734, 0
  %v3978 = vsel %vm3943, %v3736, 0
  %v3981 = vsel %vm3943, %v3738, 0
  %v3984 = vsel %vm3943, %v3740, 0
  %v3987 = vsel %vm3943, %v3742, 0
  %v3990 = vsel %vm3943, %v3744, 0
  %vm3992 = vcmask 1042432
  %v3994 = vsel %vm3992, %v3745, 0
  %3996 = vmatprep.subr.mxu0 0.0
  %3997 = vmatpush1.msra.mxu0 %v3994
  %3998 = vmatprep.subr.mxu0 0.0
  %3999 = vmatpush1.msra.mxu0 0.0
  %4000 = vmatprep.subr.mxu0 0.0
  %4001 = vmatpush1.msra.mxu0 0.0
  %4002 = vmatprep.subr.mxu0 0.0
  %4003 = vmatpush1.msra.mxu0 0.0
  %4004 = vmatprep.subr.mxu0 0.0
  %4005 = vmatpush1.msra.mxu0 0.0
  %4006 = vmatprep.subr.mxu0 0.0
  %4007 = vmatpush1.msra.mxu0 0.0
  %4008 = vmatprep.subr.mxu0 0.0
  %4009 = vmatpush1.msra.mxu0 0.0
  %4010 = vmatprep.subr.mxu0 0.0
  %4011 = vmatpush1.msra.mxu0 0.0
  %4012 = vmatprep.subr.mxu0 0.0
  %4013 = vmatpush1.msra.mxu0 0.0
  %4014 = vmatprep.subr.mxu0 0.0
  %4015 = vmatpush1.msra.mxu0 0.0
  %4016 = vmatprep.subr.mxu0 0.0
  %4017 = vmatpush1.msra.mxu0 0.0
  %4018 = vmatprep.subr.mxu0 0.0
  %4019 = vmatpush1.msra.mxu0 0.0
  %4020 = vmatprep.subr.mxu0 0.0
  %4021 = vmatpush1.msra.mxu0 0.0
  %4022 = vmatprep.subr.mxu0 0.0
  %4023 = vmatpush1.msra.mxu0 0.0
  %4024 = vmatprep.subr.mxu0 0.0
  %4025 = vmatpush1.msra.mxu0 0.0
  %4026 = vmatprep.subr.mxu0 0.0
  %4027 = vmatpush1.msra.mxu0 0.0
  %4028 = vmatprep.subr.mxu0 0.0
  %4029 = vmatpush1.msra.mxu0 0.0
  %4030 = vmatprep.subr.mxu0 0.0
  %4031 = vmatpush1.msra.mxu0 0.0
  %4032 = vmatprep.subr.mxu0 0.0
  %4033 = vmatpush1.msra.mxu0 0.0
  %4034 = vmatprep.subr.mxu0 0.0
  %4035 = vmatpush1.msra.mxu0 0.0
  %4036 = vmatprep.subr.mxu0 0.0
  %4037 = vmatpush1.msra.mxu0 0.0
  %4038 = vmatprep.subr.mxu0 0.0
  %4039 = vmatpush1.msra.mxu0 0.0
  %4040 = vmatprep.subr.mxu0 0.0
  %4041 = vmatpush1.msra.mxu0 0.0
  %4042 = vmatprep.subr.mxu0 0.0
  %4043 = vmatpush1.msra.mxu0 0.0
  %4044 = vmatprep.subr.mxu0 0.0
  %4045 = vmatpush1.msra.mxu0 0.0
  %4046 = vmatprep.subr.mxu0 0.0
  %4047 = vmatpush1.msra.mxu0 0.0
  %4048 = vmatprep.subr.mxu0 0.0
  %4049 = vmatpush1.msra.mxu0 0.0
  %4050 = vmatprep.subr.mxu0 0.0
  %4051 = vmatpush1.msra.mxu0 0.0
  %4052 = vmatprep.subr.mxu0 0.0
  %4053 = vmatpush1.msra.mxu0 0.0
  %4054 = vmatprep.subr.mxu0 0.0
  %4055 = vmatpush1.msra.mxu0 0.0
  %4056 = vmatprep.subr.mxu0 0.0
  %4057 = vmatpush1.msra.mxu0 0.0
  %4058 = vmatprep.subr.mxu0 0.0
  %4059 = vmatpush1.msra.mxu0 0.0
  %4060 = vmatprep.mubr.f32.mxu0 0.0
  %4061 = vmatmul.mubr.f32.gmra.mrb[0].mxu0 %v3945
  %v4062 = vpop.f32.mrb[0].mxu0
  %v4063 = vadd.f32 %v3865, %v4062
  %v4064 = vpop.f32.mrb[0].mxu0
  %4065 = vmatprep.mubr.f32.mxu0 0.0
  %4066 = vmatmul.mubr.f32.gmra.mrb[0].mxu0 %v3948
  %v4067 = vpop.f32.mrb[0].mxu0
  %v4068 = vadd.f32 %v3870, %v4067
  %v4069 = vpop.f32.mrb[0].mxu0
  %4070 = vmatprep.mubr.f32.mxu0 0.0
  %4071 = vmatmul.mubr.f32.gmra.mrb[0].mxu0 %v3951
  %v4072 = vpop.f32.mrb[0].mxu0
  %v4073 = vadd.f32 %v3875, %v4072
  %v4074 = vpop.f32.mrb[0].mxu0
  %4075 = vmatprep.mubr.f32.mxu0 0.0
  %4076 = vmatmul.mubr.f32.gmra.mrb[0].mxu0 %v3954
  %v4077 = vpop.f32.mrb[0].mxu0
  %v4078 = vadd.f32 %v3880, %v4077
  %v4079 = vpop.f32.mrb[0].mxu0
  %4080 = vmatprep.mubr.f32.mxu0 0.0
  %4081 = vmatmul.mubr.f32.gmra.mrb[0].mxu0 %v3957
  %v4082 = vpop.f32.mrb[0].mxu0
  %v4083 = vadd.f32 %v3885, %v4082
  %v4084 = vpop.f32.mrb[0].mxu0
  %4085 = vmatprep.mubr.f32.mxu0 0.0
  %4086 = vmatmul.mubr.f32.gmra.mrb[0].mxu0 %v3960
  %v4087 = vpop.f32.mrb[0].mxu0
  %v4088 = vadd.f32 %v3890, %v4087
  %v4089 = vpop.f32.mrb[0].mxu0
  %4090 = vmatprep.mubr.f32.mxu0 0.0
  %4091 = vmatmul.mubr.f32.gmra.mrb[0].mxu0 %v3963
  %v4092 = vpop.f32.mrb[0].mxu0
  %v4093 = vadd.f32 %v3895, %v4092
  %v4094 = vpop.f32.mrb[0].mxu0
  %4095 = vmatprep.mubr.f32.mxu0 0.0
  %4096 = vmatmul.mubr.f32.gmra.mrb[0].mxu0 %v3966
  %v4097 = vpop.f32.mrb[0].mxu0
  %v4098 = vadd.f32 %v3900, %v4097
  %v4099 = vpop.f32.mrb[0].mxu0
  %4100 = vmatprep.mubr.f32.mxu0 0.0
  %4101 = vmatmul.mubr.f32.gmra.mrb[0].mxu0 %v3969
  %v4102 = vpop.f32.mrb[0].mxu0
  %v4103 = vadd.f32 %v3905, %v4102
  %v4104 = vpop.f32.mrb[0].mxu0
  %4105 = vmatprep.mubr.f32.mxu0 0.0
  %4106 = vmatmul.mubr.f32.gmra.mrb[0].mxu0 %v3972
  %v4107 = vpop.f32.mrb[0].mxu0
  %v4108 = vadd.f32 %v3910, %v4107
  %v4109 = vpop.f32.mrb[0].mxu0
  %4110 = vmatprep.mubr.f32.mxu0 0.0
  %4111 = vmatmul.mubr.f32.gmra.mrb[0].mxu0 %v3975
  %v4112 = vpop.f32.mrb[0].mxu0
  %v4113 = vadd.f32 %v3915, %v4112
  %v4114 = vpop.f32.mrb[0].mxu0
  %4115 = vmatprep.mubr.f32.mxu0 0.0
  %4116 = vmatmul.mubr.f32.gmra.mrb[0].mxu0 %v3978
  %v4117 = vpop.f32.mrb[0].mxu0
  %v4118 = vadd.f32 %v3920, %v4117
  %v4119 = vpop.f32.mrb[0].mxu0
  %4120 = vmatprep.mubr.f32.mxu0 0.0
  %4121 = vmatmul.mubr.f32.gmra.mrb[0].mxu0 %v3981
  %v4122 = vpop.f32.mrb[0].mxu0
  %v4123 = vadd.f32 %v3925, %v4122
  %v4124 = vpop.f32.mrb[0].mxu0
  %4125 = vmatprep.mubr.f32.mxu0 0.0
  %4126 = vmatmul.mubr.f32.gmra.mrb[0].mxu0 %v3984
  %v4127 = vpop.f32.mrb[0].mxu0
  %v4128 = vadd.f32 %v3930, %v4127
  %v4129 = vpop.f32.mrb[0].mxu0
  %4130 = vmatprep.mubr.f32.mxu0 0.0
  %4131 = vmatmul.mubr.f32.gmra.mrb[0].mxu0 %v3987
  %v4132 = vpop.f32.mrb[0].mxu0
  %v4133 = vadd.f32 %v3935, %v4132
  %v4134 = vpop.f32.mrb[0].mxu0
  %4135 = vmatprep.mubr.f32.mxu0 0.0
  %4136 = vmatmul.mubr.f32.gmra.mrb[0].mxu0 %v3990
  %v4137 = vpop.f32.mrb[0].mxu0
  %v4138 = vadd.f32 %v3940, %v4137
  %v4139 = vpop.f32.mrb[0].mxu0
  %4140 = vdwg.mxu0
  %v4141 = vld [vmem:[%s17] sm:$0xff]
  %v4142 = vld [vmem:[%s17 + $0x8] sm:$0xff]
  %v4143 = vld [vmem:[%s17 + $0x10] sm:$0xff]
  %v4144 = vld [vmem:[%s17 + $0x18] sm:$0xff]
  %v4146 = vsel %vm640, %v1821, 0
  %v4149 = vsel %vm640, %v1822, 0
  %v4152 = vsel %vm640, %v1823, 0
  %v4155 = vsel %vm640, %v1824, 0
  %v4158 = vsel %vm640, %v1825, 0
  %v4161 = vsel %vm640, %v1826, 0
  %v4164 = vsel %vm640, %v1827, 0
  %v4167 = vsel %vm640, %v1828, 0
  %v4170 = vsel %vm640, %v1829, 0
  %v4173 = vsel %vm640, %v1830, 0
  %v4176 = vsel %vm640, %v1831, 0
  %v4179 = vsel %vm640, %v1832, 0
  %v4182 = vsel %vm640, %v1833, 0
  %v4185 = vsel %vm640, %v1834, 0
  %v4188 = vsel %vm640, %v1835, 0
  %v4191 = vsel %vm640, %v1836, 0
  %4193 = vmatprep.subr.mxu0 0.0
  %4194 = vmatpush1.msra.mxu0 %v4141
  %4195 = vmatprep.subr.mxu0 0.0
  %4196 = vmatpush1.msra.mxu0 %v4142
  %4197 = vmatprep.subr.mxu0 0.0
  %4198 = vmatpush1.msra.mxu0 %v4143
  %4199 = vmatprep.subr.mxu0 0.0
  %4200 = vmatpush1.msra.mxu0 %v4144
  %4201 = vmatprep.subr.mxu0 0.0
  %4202 = vmatpush1.msra.mxu0 0.0
  %4203 = vmatprep.subr.mxu0 0.0
  %4204 = vmatpush1.msra.mxu0 0.0
  %4205 = vmatprep.subr.mxu0 0.0
  %4206 = vmatpush1.msra.mxu0 0.0
  %4207 = vmatprep.subr.mxu0 0.0
  %4208 = vmatpush1.msra.mxu0 0.0
  %4209 = vmatprep.subr.mxu0 0.0
  %4210 = vmatpush1.msra.mxu0 0.0
  %4211 = vmatprep.subr.mxu0 0.0
  %4212 = vmatpush1.msra.mxu0 0.0
  %4213 = vmatprep.subr.mxu0 0.0
  %4214 = vmatpush1.msra.mxu0 0.0
  %4215 = vmatprep.subr.mxu0 0.0
  %4216 = vmatpush1.msra.mxu0 0.0
  %4217 = vmatprep.subr.mxu0 0.0
  %4218 = vmatpush1.msra.mxu0 0.0
  %4219 = vmatprep.subr.mxu0 0.0
  %4220 = vmatpush1.msra.mxu0 0.0
  %4221 = vmatprep.subr.mxu0 0.0
  %4222 = vmatpush1.msra.mxu0 0.0
  %4223 = vmatprep.subr.mxu0 0.0
  %4224 = vmatpush1.msra.mxu0 0.0
  %4225 = vmatprep.subr.mxu0 0.0
  %4226 = vmatpush1.msra.mxu0 0.0
  %4227 = vmatprep.subr.mxu0 0.0
  %4228 = vmatpush1.msra.mxu0 0.0
  %4229 = vmatprep.subr.mxu0 0.0
  %4230 = vmatpush1.msra.mxu0 0.0
  %4231 = vmatprep.subr.mxu0 0.0
  %4232 = vmatpush1.msra.mxu0 0.0
  %4233 = vmatprep.subr.mxu0 0.0
  %4234 = vmatpush1.msra.mxu0 0.0
  %4235 = vmatprep.subr.mxu0 0.0
  %4236 = vmatpush1.msra.mxu0 0.0
  %4237 = vmatprep.subr.mxu0 0.0
  %4238 = vmatpush1.msra.mxu0 0.0
  %4239 = vmatprep.subr.mxu0 0.0
  %4240 = vmatpush1.msra.mxu0 0.0
  %4241 = vmatprep.subr.mxu0 0.0
  %4242 = vmatpush1.msra.mxu0 0.0
  %4243 = vmatprep.subr.mxu0 0.0
  %4244 = vmatpush1.msra.mxu0 0.0
  %4245 = vmatprep.subr.mxu0 0.0
  %4246 = vmatpush1.msra.mxu0 0.0
  %4247 = vmatprep.subr.mxu0 0.0
  %4248 = vmatpush1.msra.mxu0 0.0
  %4249 = vmatprep.subr.mxu0 0.0
  %4250 = vmatpush1.msra.mxu0 0.0
  %4251 = vmatprep.subr.mxu0 0.0
  %4252 = vmatpush1.msra.mxu0 0.0
  %4253 = vmatprep.subr.mxu0 0.0
  %4254 = vmatpush1.msra.mxu0 0.0
  %4255 = vmatprep.subr.mxu0 0.0
  %4256 = vmatpush1.msra.mxu0 0.0
  %4257 = vmatprep.mubr.f32.mxu0 0.0
  %4258 = vmatmul.mubr.f32.gmra.mrb[0].mxu0 %v4146
  %v4259 = vpop.f32.mrb[0].mxu0
  %v4260 = vadd.f32 0.0, %v4259
  %v4261 = vpop.f32.mrb[0].mxu0
  %4262 = vmatprep.mubr.f32.mxu0 0.0
  %4263 = vmatmul.mubr.f32.gmra.mrb[0].mxu0 %v4149
  %v4264 = vpop.f32.mrb[0].mxu0
  %v4265 = vadd.f32 0.0, %v4264
  %v4266 = vpop.f32.mrb[0].mxu0
  %4267 = vmatprep.mubr.f32.mxu0 0.0
  %4268 = vmatmul.mubr.f32.gmra.mrb[0].mxu0 %v4152
  %v4269 = vpop.f32.mrb[0].mxu0
  %v4270 = vadd.f32 0.0, %v4269
  %v4271 = vpop.f32.mrb[0].mxu0
  %4272 = vmatprep.mubr.f32.mxu0 0.0
  %4273 = vmatmul.mubr.f32.gmra.mrb[0].mxu0 %v4155
  %v4274 = vpop.f32.mrb[0].mxu0
  %v4275 = vadd.f32 0.0, %v4274
  %v4276 = vpop.f32.mrb[0].mxu0
  %4277 = vmatprep.mubr.f32.mxu0 0.0
  %4278 = vmatmul.mubr.f32.gmra.mrb[0].mxu0 %v4158
  %v4279 = vpop.f32.mrb[0].mxu0
  %v4280 = vadd.f32 0.0, %v4279
  %v4281 = vpop.f32.mrb[0].mxu0
  %4282 = vmatprep.mubr.f32.mxu0 0.0
  %4283 = vmatmul.mubr.f32.gmra.mrb[0].mxu0 %v4161
  %v4284 = vpop.f32.mrb[0].mxu0
  %v4285 = vadd.f32 0.0, %v4284
  %v4286 = vpop.f32.mrb[0].mxu0
  %4287 = vmatprep.mubr.f32.mxu0 0.0
  %4288 = vmatmul.mubr.f32.gmra.mrb[0].mxu0 %v4164
  %v4289 = vpop.f32.mrb[0].mxu0
  %v4290 = vadd.f32 0.0, %v4289
  %v4291 = vpop.f32.mrb[0].mxu0
  %4292 = vmatprep.mubr.f32.mxu0 0.0
  %4293 = vmatmul.mubr.f32.gmra.mrb[0].mxu0 %v4167
  %v4294 = vpop.f32.mrb[0].mxu0
  %v4295 = vadd.f32 0.0, %v4294
  %v4296 = vpop.f32.mrb[0].mxu0
  %4297 = vmatprep.mubr.f32.mxu0 0.0
  %4298 = vmatmul.mubr.f32.gmra.mrb[0].mxu0 %v4170
  %v4299 = vpop.f32.mrb[0].mxu0
  %v4300 = vadd.f32 0.0, %v4299
  %v4301 = vpop.f32.mrb[0].mxu0
  %4302 = vmatprep.mubr.f32.mxu0 0.0
  %4303 = vmatmul.mubr.f32.gmra.mrb[0].mxu0 %v4173
  %v4304 = vpop.f32.mrb[0].mxu0
  %v4305 = vadd.f32 0.0, %v4304
  %v4306 = vpop.f32.mrb[0].mxu0
  %4307 = vmatprep.mubr.f32.mxu0 0.0
  %4308 = vmatmul.mubr.f32.gmra.mrb[0].mxu0 %v4176
  %v4309 = vpop.f32.mrb[0].mxu0
  %v4310 = vadd.f32 0.0, %v4309
  %v4311 = vpop.f32.mrb[0].mxu0
  %4312 = vmatprep.mubr.f32.mxu0 0.0
  %4313 = vmatmul.mubr.f32.gmra.mrb[0].mxu0 %v4179
  %v4314 = vpop.f32.mrb[0].mxu0
  %v4315 = vadd.f32 0.0, %v4314
  %v4316 = vpop.f32.mrb[0].mxu0
  %4317 = vmatprep.mubr.f32.mxu0 0.0
  %4318 = vmatmul.mubr.f32.gmra.mrb[0].mxu0 %v4182
  %v4319 = vpop.f32.mrb[0].mxu0
  %v4320 = vadd.f32 0.0, %v4319
  %v4321 = vpop.f32.mrb[0].mxu0
  %4322 = vmatprep.mubr.f32.mxu0 0.0
  %4323 = vmatmul.mubr.f32.gmra.mrb[0].mxu0 %v4185
  %v4324 = vpop.f32.mrb[0].mxu0
  %v4325 = vadd.f32 0.0, %v4324
  %v4326 = vpop.f32.mrb[0].mxu0
  %4327 = vmatprep.mubr.f32.mxu0 0.0
  %4328 = vmatmul.mubr.f32.gmra.mrb[0].mxu0 %v4188
  %v4329 = vpop.f32.mrb[0].mxu0
  %v4330 = vadd.f32 0.0, %v4329
  %v4331 = vpop.f32.mrb[0].mxu0
  %4332 = vmatprep.mubr.f32.mxu0 0.0
  %4333 = vmatmul.mubr.f32.gmra.mrb[0].mxu0 %v4191
  %v4334 = vpop.f32.mrb[0].mxu0
  %v4335 = vadd.f32 0.0, %v4334
  %v4336 = vpop.f32.mrb[0].mxu0
  %4337 = vdwg.mxu0
  %v4338 = vadd.f32 %v4063, %v4260
  %v4339 = vadd.f32 %v4068, %v4265
  %v4340 = vadd.f32 %v4073, %v4270
  %v4341 = vadd.f32 %v4078, %v4275
  %v4342 = vadd.f32 %v4083, %v4280
  %v4343 = vadd.f32 %v4088, %v4285
  %v4344 = vadd.f32 %v4093, %v4290
  %v4345 = vadd.f32 %v4098, %v4295
  %v4346 = vadd.f32 %v4103, %v4300
  %v4347 = vadd.f32 %v4108, %v4305
  %v4348 = vadd.f32 %v4113, %v4310
  %v4349 = vadd.f32 %v4118, %v4315
  %v4350 = vadd.f32 %v4123, %v4320
  %v4351 = vadd.f32 %v4128, %v4325
  %v4352 = vadd.f32 %v4133, %v4330
  %v4353 = vadd.f32 %v4138, %v4335
  %v4354 = vpack.c.bf16 %v4339, %v4338
  %v4355 = vpack.c.bf16 %v4341, %v4340
  %v4356 = vpack.c.bf16 %v4343, %v4342
  %v4357 = vpack.c.bf16 %v4345, %v4344
  %v4358 = vpack.c.bf16 %v4347, %v4346
  %v4359 = vpack.c.bf16 %v4349, %v4348
  %v4360 = vpack.c.bf16 %v4351, %v4350
  %v4361 = vpack.c.bf16 %v4353, %v4352
  %v4362 = vld [vmem:[%s18] sm:$0x1]
  %v4364 = vlaneseq
  %v4365 = vshrl.u32 %v4364, 7
  %v4366 = vsub.s32 0, %v4365
  %v4367 = vrot.slane %v4362, %v4366
  %4369 = vmatprep.subr.bf16.mxu0 0
  %4370 = vmatpush1.bf16.msra.mxu0 %v4354
  %4371 = vmatprep.subr.bf16.mxu0 0
  %4372 = vmatpush1.bf16.msra.mxu0 %v4355
  %4373 = vmatprep.subr.bf16.mxu0 0
  %4374 = vmatpush1.bf16.msra.mxu0 %v4356
  %4375 = vmatprep.subr.bf16.mxu0 0
  %4376 = vmatpush1.bf16.msra.mxu0 %v4357
  %4377 = vmatprep.subr.bf16.mxu0 0
  %4378 = vmatpush1.bf16.msra.mxu0 %v4358
  %4379 = vmatprep.subr.bf16.mxu0 0
  %4380 = vmatpush1.bf16.msra.mxu0 %v4359
  %4381 = vmatprep.subr.bf16.mxu0 0
  %4382 = vmatpush1.bf16.msra.mxu0 %v4360
  %4383 = vmatprep.subr.bf16.mxu0 0
  %4384 = vmatpush1.bf16.msra.mxu0 %v4361
  %4385 = vmatprep.subr.bf16.mxu0 0
  %4386 = vmatpush1.bf16.msra.mxu0 0
  %4387 = vmatprep.subr.bf16.mxu0 0
  %4388 = vmatpush1.bf16.msra.mxu0 0
  %4389 = vmatprep.subr.bf16.mxu0 0
  %4390 = vmatpush1.bf16.msra.mxu0 0
  %4391 = vmatprep.subr.bf16.mxu0 0
  %4392 = vmatpush1.bf16.msra.mxu0 0
  %4393 = vmatprep.subr.bf16.mxu0 0
  %4394 = vmatpush1.bf16.msra.mxu0 0
  %4395 = vmatprep.subr.bf16.mxu0 0
  %4396 = vmatpush1.bf16.msra.mxu0 0
  %4397 = vmatprep.subr.bf16.mxu0 0
  %4398 = vmatpush1.bf16.msra.mxu0 0
  %4399 = vmatprep.subr.bf16.mxu0 0
  %4400 = vmatpush1.bf16.msra.mxu0 0
  %4401 = vmatprep.mubr.bf16.mxu0 0
  %4402 = vmatmul.mubr.bf16.gmra.mrb[0].mxu0 %v407
  %v4403 = vpop.f32.mrb[0].mxu0
  %v4404 = vadd.f32 %v4367, %v4403
  %v4405 = vpop.f32.mrb[0].mxu0
  %v4406 = vpop.f32.mrb[0].mxu0
  %v4407 = vadd.f32 %v4367, %v4406
  %v4408 = vpop.f32.mrb[0].mxu0
  %4409 = vmatprep.mubr.bf16.mxu0 0
  %4410 = vmatmul.mubr.bf16.gmra.mrb[0].mxu0 %v408
  %v4411 = vpop.f32.mrb[0].mxu0
  %v4412 = vadd.f32 %v4367, %v4411
  %v4413 = vpop.f32.mrb[0].mxu0
  %v4414 = vpop.f32.mrb[0].mxu0
  %v4415 = vadd.f32 %v4367, %v4414
  %v4416 = vpop.f32.mrb[0].mxu0
  %4417 = vmatprep.mubr.bf16.mxu0 0
  %4418 = vmatmul.mubr.bf16.gmra.mrb[0].mxu0 %v409
  %v4419 = vpop.f32.mrb[0].mxu0
  %v4420 = vadd.f32 %v4367, %v4419
  %v4421 = vpop.f32.mrb[0].mxu0
  %v4422 = vpop.f32.mrb[0].mxu0
  %v4423 = vadd.f32 %v4367, %v4422
  %v4424 = vpop.f32.mrb[0].mxu0
  %4425 = vmatprep.mubr.bf16.mxu0 0
  %4426 = vmatmul.mubr.bf16.gmra.mrb[0].mxu0 %v410
  %v4427 = vpop.f32.mrb[0].mxu0
  %v4428 = vadd.f32 %v4367, %v4427
  %v4429 = vpop.f32.mrb[0].mxu0
  %v4430 = vpop.f32.mrb[0].mxu0
  %v4431 = vadd.f32 %v4367, %v4430
  %v4432 = vpop.f32.mrb[0].mxu0
  %4433 = vmatprep.mubr.bf16.mxu0 0
  %4434 = vmatmul.mubr.bf16.gmra.mrb[0].mxu0 %v411
  %v4435 = vpop.f32.mrb[0].mxu0
  %v4436 = vadd.f32 %v4367, %v4435
  %v4437 = vpop.f32.mrb[0].mxu0
  %v4438 = vpop.f32.mrb[0].mxu0
  %v4439 = vadd.f32 %v4367, %v4438
  %v4440 = vpop.f32.mrb[0].mxu0
  %4441 = vmatprep.mubr.bf16.mxu0 0
  %4442 = vmatmul.mubr.bf16.gmra.mrb[0].mxu0 %v412
  %v4443 = vpop.f32.mrb[0].mxu0
  %v4444 = vadd.f32 %v4367, %v4443
  %v4445 = vpop.f32.mrb[0].mxu0
  %v4446 = vpop.f32.mrb[0].mxu0
  %v4447 = vadd.f32 %v4367, %v4446
  %v4448 = vpop.f32.mrb[0].mxu0
  %4449 = vmatprep.mubr.bf16.mxu0 0
  %4450 = vmatmul.mubr.bf16.gmra.mrb[0].mxu0 %v413
  %v4451 = vpop.f32.mrb[0].mxu0
  %v4452 = vadd.f32 %v4367, %v4451
  %v4453 = vpop.f32.mrb[0].mxu0
  %v4454 = vpop.f32.mrb[0].mxu0
  %v4455 = vadd.f32 %v4367, %v4454
  %v4456 = vpop.f32.mrb[0].mxu0
  %4457 = vmatprep.mubr.bf16.mxu0 0
  %4458 = vmatmul.mubr.bf16.gmra.mrb[0].mxu0 %v414
  %v4459 = vpop.f32.mrb[0].mxu0
  %v4460 = vadd.f32 %v4367, %v4459
  %v4461 = vpop.f32.mrb[0].mxu0
  %v4462 = vpop.f32.mrb[0].mxu0
  %v4463 = vadd.f32 %v4367, %v4462
  %v4464 = vpop.f32.mrb[0].mxu0
  %4465 = vmatprep.mubr.bf16.mxu0 0
  %4466 = vmatmul.mubr.bf16.gmra.mrb[0].mxu0 %v415
  %v4467 = vpop.f32.mrb[0].mxu0
  %v4468 = vadd.f32 %v4367, %v4467
  %v4469 = vpop.f32.mrb[0].mxu0
  %v4470 = vpop.f32.mrb[0].mxu0
  %v4471 = vadd.f32 %v4367, %v4470
  %v4472 = vpop.f32.mrb[0].mxu0
  %4473 = vmatprep.mubr.bf16.mxu0 0
  %4474 = vmatmul.mubr.bf16.gmra.mrb[0].mxu0 %v416
  %v4475 = vpop.f32.mrb[0].mxu0
  %v4476 = vadd.f32 %v4367, %v4475
  %v4477 = vpop.f32.mrb[0].mxu0
  %v4478 = vpop.f32.mrb[0].mxu0
  %v4479 = vadd.f32 %v4367, %v4478
  %v4480 = vpop.f32.mrb[0].mxu0
  %4481 = vmatprep.mubr.bf16.mxu0 0
  %4482 = vmatmul.mubr.bf16.gmra.mrb[0].mxu0 %v417
  %v4483 = vpop.f32.mrb[0].mxu0
  %v4484 = vadd.f32 %v4367, %v4483
  %v4485 = vpop.f32.mrb[0].mxu0
  %v4486 = vpop.f32.mrb[0].mxu0
  %v4487 = vadd.f32 %v4367, %v4486
  %v4488 = vpop.f32.mrb[0].mxu0
  %4489 = vmatprep.mubr.bf16.mxu0 0
  %4490 = vmatmul.mubr.bf16.gmra.mrb[0].mxu0 %v418
  %v4491 = vpop.f32.mrb[0].mxu0
  %v4492 = vadd.f32 %v4367, %v4491
  %v4493 = vpop.f32.mrb[0].mxu0
  %v4494 = vpop.f32.mrb[0].mxu0
  %v4495 = vadd.f32 %v4367, %v4494
  %v4496 = vpop.f32.mrb[0].mxu0
  %4497 = vmatprep.mubr.bf16.mxu0 0
  %4498 = vmatmul.mubr.bf16.gmra.mrb[0].mxu0 %v419
  %v4499 = vpop.f32.mrb[0].mxu0
  %v4500 = vadd.f32 %v4367, %v4499
  %v4501 = vpop.f32.mrb[0].mxu0
  %v4502 = vpop.f32.mrb[0].mxu0
  %v4503 = vadd.f32 %v4367, %v4502
  %v4504 = vpop.f32.mrb[0].mxu0
  %4505 = vmatprep.mubr.bf16.mxu0 0
  %4506 = vmatmul.mubr.bf16.gmra.mrb[0].mxu0 %v420
  %v4507 = vpop.f32.mrb[0].mxu0
  %v4508 = vadd.f32 %v4367, %v4507
  %v4509 = vpop.f32.mrb[0].mxu0
  %v4510 = vpop.f32.mrb[0].mxu0
  %v4511 = vadd.f32 %v4367, %v4510
  %v4512 = vpop.f32.mrb[0].mxu0
  %4513 = vmatprep.mubr.bf16.mxu0 0
  %4514 = vmatmul.mubr.bf16.gmra.mrb[0].mxu0 %v421
  %v4515 = vpop.f32.mrb[0].mxu0
  %v4516 = vadd.f32 %v4367, %v4515
  %v4517 = vpop.f32.mrb[0].mxu0
  %v4518 = vpop.f32.mrb[0].mxu0
  %v4519 = vadd.f32 %v4367, %v4518
  %v4520 = vpop.f32.mrb[0].mxu0
  %4521 = vmatprep.mubr.bf16.mxu0 0
  %4522 = vmatmul.mubr.bf16.gmra.mrb[0].mxu0 %v422
  %v4523 = vpop.f32.mrb[0].mxu0
  %v4524 = vadd.f32 %v4367, %v4523
  %v4525 = vpop.f32.mrb[0].mxu0
  %v4526 = vpop.f32.mrb[0].mxu0
  %v4527 = vadd.f32 %v4367, %v4526
  %v4528 = vpop.f32.mrb[0].mxu0
  %4529 = vdwg.mxu0
  %v4530 = vmax.f32 %v4404, 0.0
  %v4531 = vmax.f32 %v4407, 0.0
  %v4532 = vmax.f32 %v4412, 0.0
  %v4533 = vmax.f32 %v4415, 0.0
  %v4534 = vmax.f32 %v4420, 0.0
  %v4535 = vmax.f32 %v4423, 0.0
  %v4536 = vmax.f32 %v4428, 0.0
  %v4537 = vmax.f32 %v4431, 0.0
  %v4538 = vmax.f32 %v4436, 0.0
  %v4539 = vmax.f32 %v4439, 0.0
  %v4540 = vmax.f32 %v4444, 0.0
  %v4541 = vmax.f32 %v4447, 0.0
  %v4542 = vmax.f32 %v4452, 0.0
  %v4543 = vmax.f32 %v4455, 0.0
  %v4544 = vmax.f32 %v4460, 0.0
  %v4545 = vmax.f32 %v4463, 0.0
  %v4546 = vmax.f32 %v4468, 0.0
  %v4547 = vmax.f32 %v4471, 0.0
  %v4548 = vmax.f32 %v4476, 0.0
  %v4549 = vmax.f32 %v4479, 0.0
  %v4550 = vmax.f32 %v4484, 0.0
  %v4551 = vmax.f32 %v4487, 0.0
  %v4552 = vmax.f32 %v4492, 0.0
  %v4553 = vmax.f32 %v4495, 0.0
  %v4554 = vmax.f32 %v4500, 0.0
  %v4555 = vmax.f32 %v4503, 0.0
  %v4556 = vmax.f32 %v4508, 0.0
  %v4557 = vmax.f32 %v4511, 0.0
  %v4558 = vmax.f32 %v4516, 0.0
  %v4559 = vmax.f32 %v4519, 0.0
  %v4560 = vmax.f32 %v4524, 0.0
  %v4561 = vmax.f32 %v4527, 0.0
  %v4562 = vld [vmem:[%s19] sm:$0xff]
  %v4563 = vld [vmem:[%s19 + $0x8] sm:$0xff]
  %v4564 = vld [vmem:[%s19 + $0x10] sm:$0xff]
  %v4565 = vld [vmem:[%s19 + $0x18] sm:$0xff]
  %v4566 = vld [vmem:[%s20] sm:$0xff]
  %v4567 = vld [vmem:[%s20 + $0x8] sm:$0xff]
  %v4568 = vld [vmem:[%s20 + $0x10] sm:$0xff]
  %v4569 = vld [vmem:[%s20 + $0x18] sm:$0xff]
  %v4571 = vsel %vm640, %v4546, 0
  %v4574 = vsel %vm640, %v4547, 0
  %v4577 = vsel %vm640, %v4548, 0
  %v4580 = vsel %vm640, %v4549, 0
  %v4583 = vsel %vm640, %v4550, 0
  %v4586 = vsel %vm640, %v4551, 0
  %v4589 = vsel %vm640, %v4552, 0
  %v4592 = vsel %vm640, %v4553, 0
  %v4595 = vsel %vm640, %v4554, 0
  %v4598 = vsel %vm640, %v4555, 0
  %v4601 = vsel %vm640, %v4556, 0
  %v4604 = vsel %vm640, %v4557, 0
  %v4607 = vsel %vm640, %v4558, 0
  %v4610 = vsel %vm640, %v4559, 0
  %v4613 = vsel %vm640, %v4560, 0
  %v4616 = vsel %vm640, %v4561, 0
  %4618 = vmatprep.subr.mxu0 0.0
  %4619 = vmatpush1.msra.mxu0 %v4566
  %4620 = vmatprep.subr.mxu0 0.0
  %4621 = vmatpush1.msra.mxu0 %v4567
  %4622 = vmatprep.subr.mxu0 0.0
  %4623 = vmatpush1.msra.mxu0 %v4568
  %4624 = vmatprep.subr.mxu0 0.0
  %4625 = vmatpush1.msra.mxu0 %v4569
  %4626 = vmatprep.subr.mxu0 0.0
  %4627 = vmatpush1.msra.mxu0 0.0
  %4628 = vmatprep.subr.mxu0 0.0
  %4629 = vmatpush1.msra.mxu0 0.0
  %4630 = vmatprep.subr.mxu0 0.0
  %4631 = vmatpush1.msra.mxu0 0.0
  %4632 = vmatprep.subr.mxu0 0.0
  %4633 = vmatpush1.msra.mxu0 0.0
  %4634 = vmatprep.subr.mxu0 0.0
  %4635 = vmatpush1.msra.mxu0 0.0
  %4636 = vmatprep.subr.mxu0 0.0
  %4637 = vmatpush1.msra.mxu0 0.0
  %4638 = vmatprep.subr.mxu0 0.0
  %4639 = vmatpush1.msra.mxu0 0.0
  %4640 = vmatprep.subr.mxu0 0.0
  %4641 = vmatpush1.msra.mxu0 0.0
  %4642 = vmatprep.subr.mxu0 0.0
  %4643 = vmatpush1.msra.mxu0 0.0
  %4644 = vmatprep.subr.mxu0 0.0
  %4645 = vmatpush1.msra.mxu0 0.0
  %4646 = vmatprep.subr.mxu0 0.0
  %4647 = vmatpush1.msra.mxu0 0.0
  %4648 = vmatprep.subr.mxu0 0.0
  %4649 = vmatpush1.msra.mxu0 0.0
  %4650 = vmatprep.subr.mxu0 0.0
  %4651 = vmatpush1.msra.mxu0 0.0
  %4652 = vmatprep.subr.mxu0 0.0
  %4653 = vmatpush1.msra.mxu0 0.0
  %4654 = vmatprep.subr.mxu0 0.0
  %4655 = vmatpush1.msra.mxu0 0.0
  %4656 = vmatprep.subr.mxu0 0.0
  %4657 = vmatpush1.msra.mxu0 0.0
  %4658 = vmatprep.subr.mxu0 0.0
  %4659 = vmatpush1.msra.mxu0 0.0
  %4660 = vmatprep.subr.mxu0 0.0
  %4661 = vmatpush1.msra.mxu0 0.0
  %4662 = vmatprep.subr.mxu0 0.0
  %4663 = vmatpush1.msra.mxu0 0.0
  %4664 = vmatprep.subr.mxu0 0.0
  %4665 = vmatpush1.msra.mxu0 0.0
  %4666 = vmatprep.subr.mxu0 0.0
  %4667 = vmatpush1.msra.mxu0 0.0
  %4668 = vmatprep.subr.mxu0 0.0
  %4669 = vmatpush1.msra.mxu0 0.0
  %4670 = vmatprep.subr.mxu0 0.0
  %4671 = vmatpush1.msra.mxu0 0.0
  %4672 = vmatprep.subr.mxu0 0.0
  %4673 = vmatpush1.msra.mxu0 0.0
  %4674 = vmatprep.subr.mxu0 0.0
  %4675 = vmatpush1.msra.mxu0 0.0
  %4676 = vmatprep.subr.mxu0 0.0
  %4677 = vmatpush1.msra.mxu0 0.0
  %4678 = vmatprep.subr.mxu0 0.0
  %4679 = vmatpush1.msra.mxu0 0.0
  %4680 = vmatprep.subr.mxu0 0.0
  %4681 = vmatpush1.msra.mxu0 0.0
  %4682 = vmatprep.mubr.f32.mxu0 0.0
  %4683 = vmatmul.mubr.f32.gmra.mrb[0].mxu0 %v4571
  %v4684 = vpop.f32.mrb[0].mxu0
  %v4685 = vadd.f32 0.0, %v4684
  %v4686 = vpop.f32.mrb[0].mxu0
  %4687 = vmatprep.mubr.f32.mxu0 0.0
  %4688 = vmatmul.mubr.f32.gmra.mrb[0].mxu0 %v4574
  %v4689 = vpop.f32.mrb[0].mxu0
  %v4690 = vadd.f32 0.0, %v4689
  %v4691 = vpop.f32.mrb[0].mxu0
  %4692 = vmatprep.mubr.f32.mxu0 0.0
  %4693 = vmatmul.mubr.f32.gmra.mrb[0].mxu0 %v4577
  %v4694 = vpop.f32.mrb[0].mxu0
  %v4695 = vadd.f32 0.0, %v4694
  %v4696 = vpop.f32.mrb[0].mxu0
  %4697 = vmatprep.mubr.f32.mxu0 0.0
  %4698 = vmatmul.mubr.f32.gmra.mrb[0].mxu0 %v4580
  %v4699 = vpop.f32.mrb[0].mxu0
  %v4700 = vadd.f32 0.0, %v4699
  %v4701 = vpop.f32.mrb[0].mxu0
  %4702 = vmatprep.mubr.f32.mxu0 0.0
  %4703 = vmatmul.mubr.f32.gmra.mrb[0].mxu0 %v4583
  %v4704 = vpop.f32.mrb[0].mxu0
  %v4705 = vadd.f32 0.0, %v4704
  %v4706 = vpop.f32.mrb[0].mxu0
  %4707 = vmatprep.mubr.f32.mxu0 0.0
  %4708 = vmatmul.mubr.f32.gmra.mrb[0].mxu0 %v4586
  %v4709 = vpop.f32.mrb[0].mxu0
  %v4710 = vadd.f32 0.0, %v4709
  %v4711 = vpop.f32.mrb[0].mxu0
  %4712 = vmatprep.mubr.f32.mxu0 0.0
  %4713 = vmatmul.mubr.f32.gmra.mrb[0].mxu0 %v4589
  %v4714 = vpop.f32.mrb[0].mxu0
  %v4715 = vadd.f32 0.0, %v4714
  %v4716 = vpop.f32.mrb[0].mxu0
  %4717 = vmatprep.mubr.f32.mxu0 0.0
  %4718 = vmatmul.mubr.f32.gmra.mrb[0].mxu0 %v4592
  %v4719 = vpop.f32.mrb[0].mxu0
  %v4720 = vadd.f32 0.0, %v4719
  %v4721 = vpop.f32.mrb[0].mxu0
  %4722 = vmatprep.mubr.f32.mxu0 0.0
  %4723 = vmatmul.mubr.f32.gmra.mrb[0].mxu0 %v4595
  %v4724 = vpop.f32.mrb[0].mxu0
  %v4725 = vadd.f32 0.0, %v4724
  %v4726 = vpop.f32.mrb[0].mxu0
  %4727 = vmatprep.mubr.f32.mxu0 0.0
  %4728 = vmatmul.mubr.f32.gmra.mrb[0].mxu0 %v4598
  %v4729 = vpop.f32.mrb[0].mxu0
  %v4730 = vadd.f32 0.0, %v4729
  %v4731 = vpop.f32.mrb[0].mxu0
  %4732 = vmatprep.mubr.f32.mxu0 0.0
  %4733 = vmatmul.mubr.f32.gmra.mrb[0].mxu0 %v4601
  %v4734 = vpop.f32.mrb[0].mxu0
  %v4735 = vadd.f32 0.0, %v4734
  %v4736 = vpop.f32.mrb[0].mxu0
  %4737 = vmatprep.mubr.f32.mxu0 0.0
  %4738 = vmatmul.mubr.f32.gmra.mrb[0].mxu0 %v4604
  %v4739 = vpop.f32.mrb[0].mxu0
  %v4740 = vadd.f32 0.0, %v4739
  %v4741 = vpop.f32.mrb[0].mxu0
  %4742 = vmatprep.mubr.f32.mxu0 0.0
  %4743 = vmatmul.mubr.f32.gmra.mrb[0].mxu0 %v4607
  %v4744 = vpop.f32.mrb[0].mxu0
  %v4745 = vadd.f32 0.0, %v4744
  %v4746 = vpop.f32.mrb[0].mxu0
  %4747 = vmatprep.mubr.f32.mxu0 0.0
  %4748 = vmatmul.mubr.f32.gmra.mrb[0].mxu0 %v4610
  %v4749 = vpop.f32.mrb[0].mxu0
  %v4750 = vadd.f32 0.0, %v4749
  %v4751 = vpop.f32.mrb[0].mxu0
  %4752 = vmatprep.mubr.f32.mxu0 0.0
  %4753 = vmatmul.mubr.f32.gmra.mrb[0].mxu0 %v4613
  %v4754 = vpop.f32.mrb[0].mxu0
  %v4755 = vadd.f32 0.0, %v4754
  %v4756 = vpop.f32.mrb[0].mxu0
  %4757 = vmatprep.mubr.f32.mxu0 0.0
  %4758 = vmatmul.mubr.f32.gmra.mrb[0].mxu0 %v4616
  %v4759 = vpop.f32.mrb[0].mxu0
  %v4760 = vadd.f32 0.0, %v4759
  %v4761 = vpop.f32.mrb[0].mxu0
  %4762 = vdwg.mxu0
  %v4764 = vsel %vm640, %v4530, 0
  %v4767 = vsel %vm640, %v4531, 0
  %v4770 = vsel %vm640, %v4532, 0
  %v4773 = vsel %vm640, %v4533, 0
  %v4776 = vsel %vm640, %v4534, 0
  %v4779 = vsel %vm640, %v4535, 0
  %v4782 = vsel %vm640, %v4536, 0
  %v4785 = vsel %vm640, %v4537, 0
  %v4788 = vsel %vm640, %v4538, 0
  %v4791 = vsel %vm640, %v4539, 0
  %v4794 = vsel %vm640, %v4540, 0
  %v4797 = vsel %vm640, %v4541, 0
  %v4800 = vsel %vm640, %v4542, 0
  %v4803 = vsel %vm640, %v4543, 0
  %v4806 = vsel %vm640, %v4544, 0
  %v4809 = vsel %vm640, %v4545, 0
  %4811 = vmatprep.subr.mxu0 0.0
  %4812 = vmatpush1.msra.mxu0 %v4562
  %4813 = vmatprep.subr.mxu0 0.0
  %4814 = vmatpush1.msra.mxu0 %v4563
  %4815 = vmatprep.subr.mxu0 0.0
  %4816 = vmatpush1.msra.mxu0 %v4564
  %4817 = vmatprep.subr.mxu0 0.0
  %4818 = vmatpush1.msra.mxu0 %v4565
  %4819 = vmatprep.subr.mxu0 0.0
  %4820 = vmatpush1.msra.mxu0 0.0
  %4821 = vmatprep.subr.mxu0 0.0
  %4822 = vmatpush1.msra.mxu0 0.0
  %4823 = vmatprep.subr.mxu0 0.0
  %4824 = vmatpush1.msra.mxu0 0.0
  %4825 = vmatprep.subr.mxu0 0.0
  %4826 = vmatpush1.msra.mxu0 0.0
  %4827 = vmatprep.subr.mxu0 0.0
  %4828 = vmatpush1.msra.mxu0 0.0
  %4829 = vmatprep.subr.mxu0 0.0
  %4830 = vmatpush1.msra.mxu0 0.0
  %4831 = vmatprep.subr.mxu0 0.0
  %4832 = vmatpush1.msra.mxu0 0.0
  %4833 = vmatprep.subr.mxu0 0.0
  %4834 = vmatpush1.msra.mxu0 0.0
  %4835 = vmatprep.subr.mxu0 0.0
  %4836 = vmatpush1.msra.mxu0 0.0
  %4837 = vmatprep.subr.mxu0 0.0
  %4838 = vmatpush1.msra.mxu0 0.0
  %4839 = vmatprep.subr.mxu0 0.0
  %4840 = vmatpush1.msra.mxu0 0.0
  %4841 = vmatprep.subr.mxu0 0.0
  %4842 = vmatpush1.msra.mxu0 0.0
  %4843 = vmatprep.subr.mxu0 0.0
  %4844 = vmatpush1.msra.mxu0 0.0
  %4845 = vmatprep.subr.mxu0 0.0
  %4846 = vmatpush1.msra.mxu0 0.0
  %4847 = vmatprep.subr.mxu0 0.0
  %4848 = vmatpush1.msra.mxu0 0.0
  %4849 = vmatprep.subr.mxu0 0.0
  %4850 = vmatpush1.msra.mxu0 0.0
  %4851 = vmatprep.subr.mxu0 0.0
  %4852 = vmatpush1.msra.mxu0 0.0
  %4853 = vmatprep.subr.mxu0 0.0
  %4854 = vmatpush1.msra.mxu0 0.0
  %4855 = vmatprep.subr.mxu0 0.0
  %4856 = vmatpush1.msra.mxu0 0.0
  %4857 = vmatprep.subr.mxu0 0.0
  %4858 = vmatpush1.msra.mxu0 0.0
  %4859 = vmatprep.subr.mxu0 0.0
  %4860 = vmatpush1.msra.mxu0 0.0
  %4861 = vmatprep.subr.mxu0 0.0
  %4862 = vmatpush1.msra.mxu0 0.0
  %4863 = vmatprep.subr.mxu0 0.0
  %4864 = vmatpush1.msra.mxu0 0.0
  %4865 = vmatprep.subr.mxu0 0.0
  %4866 = vmatpush1.msra.mxu0 0.0
  %4867 = vmatprep.subr.mxu0 0.0
  %4868 = vmatpush1.msra.mxu0 0.0
  %4869 = vmatprep.subr.mxu0 0.0
  %4870 = vmatpush1.msra.mxu0 0.0
  %4871 = vmatprep.subr.mxu0 0.0
  %4872 = vmatpush1.msra.mxu0 0.0
  %4873 = vmatprep.subr.mxu0 0.0
  %4874 = vmatpush1.msra.mxu0 0.0
  %4875 = vmatprep.mubr.f32.mxu0 0.0
  %4876 = vmatmul.mubr.f32.gmra.mrb[0].mxu0 %v4764
  %v4877 = vpop.f32.mrb[0].mxu0
  %v4878 = vadd.f32 %v4685, %v4877
  %v4879 = vpop.f32.mrb[0].mxu0
  %4880 = vmatprep.mubr.f32.mxu0 0.0
  %4881 = vmatmul.mubr.f32.gmra.mrb[0].mxu0 %v4767
  %v4882 = vpop.f32.mrb[0].mxu0
  %v4883 = vadd.f32 %v4690, %v4882
  %v4884 = vpop.f32.mrb[0].mxu0
  %4885 = vmatprep.mubr.f32.mxu0 0.0
  %4886 = vmatmul.mubr.f32.gmra.mrb[0].mxu0 %v4770
  %v4887 = vpop.f32.mrb[0].mxu0
  %v4888 = vadd.f32 %v4695, %v4887
  %v4889 = vpop.f32.mrb[0].mxu0
  %4890 = vmatprep.mubr.f32.mxu0 0.0
  %4891 = vmatmul.mubr.f32.gmra.mrb[0].mxu0 %v4773
  %v4892 = vpop.f32.mrb[0].mxu0
  %v4893 = vadd.f32 %v4700, %v4892
  %v4894 = vpop.f32.mrb[0].mxu0
  %4895 = vmatprep.mubr.f32.mxu0 0.0
  %4896 = vmatmul.mubr.f32.gmra.mrb[0].mxu0 %v4776
  %v4897 = vpop.f32.mrb[0].mxu0
  %v4898 = vadd.f32 %v4705, %v4897
  %v4899 = vpop.f32.mrb[0].mxu0
  %4900 = vmatprep.mubr.f32.mxu0 0.0
  %4901 = vmatmul.mubr.f32.gmra.mrb[0].mxu0 %v4779
  %v4902 = vpop.f32.mrb[0].mxu0
  %v4903 = vadd.f32 %v4710, %v4902
  %v4904 = vpop.f32.mrb[0].mxu0
  %4905 = vmatprep.mubr.f32.mxu0 0.0
  %4906 = vmatmul.mubr.f32.gmra.mrb[0].mxu0 %v4782
  %v4907 = vpop.f32.mrb[0].mxu0
  %v4908 = vadd.f32 %v4715, %v4907
  %v4909 = vpop.f32.mrb[0].mxu0
  %4910 = vmatprep.mubr.f32.mxu0 0.0
  %4911 = vmatmul.mubr.f32.gmra.mrb[0].mxu0 %v4785
  %v4912 = vpop.f32.mrb[0].mxu0
  %v4913 = vadd.f32 %v4720, %v4912
  %v4914 = vpop.f32.mrb[0].mxu0
  %4915 = vmatprep.mubr.f32.mxu0 0.0
  %4916 = vmatmul.mubr.f32.gmra.mrb[0].mxu0 %v4788
  %v4917 = vpop.f32.mrb[0].mxu0
  %v4918 = vadd.f32 %v4725, %v4917
  %v4919 = vpop.f32.mrb[0].mxu0
  %4920 = vmatprep.mubr.f32.mxu0 0.0
  %4921 = vmatmul.mubr.f32.gmra.mrb[0].mxu0 %v4791
  %v4922 = vpop.f32.mrb[0].mxu0
  %v4923 = vadd.f32 %v4730, %v4922
  %v4924 = vpop.f32.mrb[0].mxu0
  %4925 = vmatprep.mubr.f32.mxu0 0.0
  %4926 = vmatmul.mubr.f32.gmra.mrb[0].mxu0 %v4794
  %v4927 = vpop.f32.mrb[0].mxu0
  %v4928 = vadd.f32 %v4735, %v4927
  %v4929 = vpop.f32.mrb[0].mxu0
  %4930 = vmatprep.mubr.f32.mxu0 0.0
  %4931 = vmatmul.mubr.f32.gmra.mrb[0].mxu0 %v4797
  %v4932 = vpop.f32.mrb[0].mxu0
  %v4933 = vadd.f32 %v4740, %v4932
  %v4934 = vpop.f32.mrb[0].mxu0
  %4935 = vmatprep.mubr.f32.mxu0 0.0
  %4936 = vmatmul.mubr.f32.gmra.mrb[0].mxu0 %v4800
  %v4937 = vpop.f32.mrb[0].mxu0
  %v4938 = vadd.f32 %v4745, %v4937
  %v4939 = vpop.f32.mrb[0].mxu0
  %4940 = vmatprep.mubr.f32.mxu0 0.0
  %4941 = vmatmul.mubr.f32.gmra.mrb[0].mxu0 %v4803
  %v4942 = vpop.f32.mrb[0].mxu0
  %v4943 = vadd.f32 %v4750, %v4942
  %v4944 = vpop.f32.mrb[0].mxu0
  %4945 = vmatprep.mubr.f32.mxu0 0.0
  %4946 = vmatmul.mubr.f32.gmra.mrb[0].mxu0 %v4806
  %v4947 = vpop.f32.mrb[0].mxu0
  %v4948 = vadd.f32 %v4755, %v4947
  %v4949 = vpop.f32.mrb[0].mxu0
  %4950 = vmatprep.mubr.f32.mxu0 0.0
  %4951 = vmatmul.mubr.f32.gmra.mrb[0].mxu0 %v4809
  %v4952 = vpop.f32.mrb[0].mxu0
  %v4953 = vadd.f32 %v4760, %v4952
  %v4954 = vpop.f32.mrb[0].mxu0
  %4955 = vdwg.mxu0
  %v4956 = vpack.c.bf16 %v4883, %v4878
  %v4957 = vpack.c.bf16 %v4893, %v4888
  %v4958 = vpack.c.bf16 %v4903, %v4898
  %v4959 = vpack.c.bf16 %v4913, %v4908
  %v4960 = vpack.c.bf16 %v4923, %v4918
  %v4961 = vpack.c.bf16 %v4933, %v4928
  %v4962 = vpack.c.bf16 %v4943, %v4938
  %v4963 = vpack.c.bf16 %v4953, %v4948
  %v4964 = vld [vmem:[%s21] sm:$0x1]
  %v4966 = vlaneseq
  %v4967 = vshrl.u32 %v4966, 7
  %v4968 = vsub.s32 0, %v4967
  %v4969 = vrot.slane %v4964, %v4968
  %4971 = vmatprep.subr.bf16.mxu0 0
  %4972 = vmatpush1.bf16.msra.mxu0 %v4956
  %4973 = vmatprep.subr.bf16.mxu0 0
  %4974 = vmatpush1.bf16.msra.mxu0 %v4957
  %4975 = vmatprep.subr.bf16.mxu0 0
  %4976 = vmatpush1.bf16.msra.mxu0 %v4958
  %4977 = vmatprep.subr.bf16.mxu0 0
  %4978 = vmatpush1.bf16.msra.mxu0 %v4959
  %4979 = vmatprep.subr.bf16.mxu0 0
  %4980 = vmatpush1.bf16.msra.mxu0 %v4960
  %4981 = vmatprep.subr.bf16.mxu0 0
  %4982 = vmatpush1.bf16.msra.mxu0 %v4961
  %4983 = vmatprep.subr.bf16.mxu0 0
  %4984 = vmatpush1.bf16.msra.mxu0 %v4962
  %4985 = vmatprep.subr.bf16.mxu0 0
  %4986 = vmatpush1.bf16.msra.mxu0 %v4963
  %4987 = vmatprep.subr.bf16.mxu0 0
  %4988 = vmatpush1.bf16.msra.mxu0 0
  %4989 = vmatprep.subr.bf16.mxu0 0
  %4990 = vmatpush1.bf16.msra.mxu0 0
  %4991 = vmatprep.subr.bf16.mxu0 0
  %4992 = vmatpush1.bf16.msra.mxu0 0
  %4993 = vmatprep.subr.bf16.mxu0 0
  %4994 = vmatpush1.bf16.msra.mxu0 0
  %4995 = vmatprep.subr.bf16.mxu0 0
  %4996 = vmatpush1.bf16.msra.mxu0 0
  %4997 = vmatprep.subr.bf16.mxu0 0
  %4998 = vmatpush1.bf16.msra.mxu0 0
  %4999 = vmatprep.subr.bf16.mxu0 0
  %5000 = vmatpush1.bf16.msra.mxu0 0
  %5001 = vmatprep.subr.bf16.mxu0 0
  %5002 = vmatpush1.bf16.msra.mxu0 0
  %5003 = vmatprep.mubr.bf16.mxu0 0
  %5004 = vmatmul.mubr.bf16.gmra.mrb[0].mxu0 %v407
  %v5005 = vpop.f32.mrb[0].mxu0
  %v5006 = vadd.f32 %v4969, %v5005
  %v5007 = vpop.f32.mrb[0].mxu0
  %v5008 = vpop.f32.mrb[0].mxu0
  %v5009 = vadd.f32 %v4969, %v5008
  %v5010 = vpop.f32.mrb[0].mxu0
  %5011 = vmatprep.mubr.bf16.mxu0 0
  %5012 = vmatmul.mubr.bf16.gmra.mrb[0].mxu0 %v408
  %v5013 = vpop.f32.mrb[0].mxu0
  %v5014 = vadd.f32 %v4969, %v5013
  %v5015 = vpop.f32.mrb[0].mxu0
  %v5016 = vpop.f32.mrb[0].mxu0
  %v5017 = vadd.f32 %v4969, %v5016
  %v5018 = vpop.f32.mrb[0].mxu0
  %5019 = vmatprep.mubr.bf16.mxu0 0
  %5020 = vmatmul.mubr.bf16.gmra.mrb[0].mxu0 %v409
  %v5021 = vpop.f32.mrb[0].mxu0
  %v5022 = vadd.f32 %v4969, %v5021
  %v5023 = vpop.f32.mrb[0].mxu0
  %v5024 = vpop.f32.mrb[0].mxu0
  %v5025 = vadd.f32 %v4969, %v5024
  %v5026 = vpop.f32.mrb[0].mxu0
  %5027 = vmatprep.mubr.bf16.mxu0 0
  %5028 = vmatmul.mubr.bf16.gmra.mrb[0].mxu0 %v410
  %v5029 = vpop.f32.mrb[0].mxu0
  %v5030 = vadd.f32 %v4969, %v5029
  %v5031 = vpop.f32.mrb[0].mxu0
  %v5032 = vpop.f32.mrb[0].mxu0
  %v5033 = vadd.f32 %v4969, %v5032
  %v5034 = vpop.f32.mrb[0].mxu0
  %5035 = vmatprep.mubr.bf16.mxu0 0
  %5036 = vmatmul.mubr.bf16.gmra.mrb[0].mxu0 %v411
  %v5037 = vpop.f32.mrb[0].mxu0
  %v5038 = vadd.f32 %v4969, %v5037
  %v5039 = vpop.f32.mrb[0].mxu0
  %v5040 = vpop.f32.mrb[0].mxu0
  %v5041 = vadd.f32 %v4969, %v5040
  %v5042 = vpop.f32.mrb[0].mxu0
  %5043 = vmatprep.mubr.bf16.mxu0 0
  %5044 = vmatmul.mubr.bf16.gmra.mrb[0].mxu0 %v412
  %v5045 = vpop.f32.mrb[0].mxu0
  %v5046 = vadd.f32 %v4969, %v5045
  %v5047 = vpop.f32.mrb[0].mxu0
  %v5048 = vpop.f32.mrb[0].mxu0
  %v5049 = vadd.f32 %v4969, %v5048
  %v5050 = vpop.f32.mrb[0].mxu0
  %5051 = vmatprep.mubr.bf16.mxu0 0
  %5052 = vmatmul.mubr.bf16.gmra.mrb[0].mxu0 %v413
  %v5053 = vpop.f32.mrb[0].mxu0
  %v5054 = vadd.f32 %v4969, %v5053
  %v5055 = vpop.f32.mrb[0].mxu0
  %v5056 = vpop.f32.mrb[0].mxu0
  %v5057 = vadd.f32 %v4969, %v5056
  %v5058 = vpop.f32.mrb[0].mxu0
  %5059 = vmatprep.mubr.bf16.mxu0 0
  %5060 = vmatmul.mubr.bf16.gmra.mrb[0].mxu0 %v414
  %v5061 = vpop.f32.mrb[0].mxu0
  %v5062 = vadd.f32 %v4969, %v5061
  %v5063 = vpop.f32.mrb[0].mxu0
  %v5064 = vpop.f32.mrb[0].mxu0
  %v5065 = vadd.f32 %v4969, %v5064
  %v5066 = vpop.f32.mrb[0].mxu0
  %5067 = vmatprep.mubr.bf16.mxu0 0
  %5068 = vmatmul.mubr.bf16.gmra.mrb[0].mxu0 %v415
  %v5069 = vpop.f32.mrb[0].mxu0
  %v5070 = vadd.f32 %v4969, %v5069
  %v5071 = vpop.f32.mrb[0].mxu0
  %v5072 = vpop.f32.mrb[0].mxu0
  %v5073 = vadd.f32 %v4969, %v5072
  %v5074 = vpop.f32.mrb[0].mxu0
  %5075 = vmatprep.mubr.bf16.mxu0 0
  %5076 = vmatmul.mubr.bf16.gmra.mrb[0].mxu0 %v416
  %v5077 = vpop.f32.mrb[0].mxu0
  %v5078 = vadd.f32 %v4969, %v5077
  %v5079 = vpop.f32.mrb[0].mxu0
  %v5080 = vpop.f32.mrb[0].mxu0
  %v5081 = vadd.f32 %v4969, %v5080
  %v5082 = vpop.f32.mrb[0].mxu0
  %5083 = vmatprep.mubr.bf16.mxu0 0
  %5084 = vmatmul.mubr.bf16.gmra.mrb[0].mxu0 %v417
  %v5085 = vpop.f32.mrb[0].mxu0
  %v5086 = vadd.f32 %v4969, %v5085
  %v5087 = vpop.f32.mrb[0].mxu0
  %v5088 = vpop.f32.mrb[0].mxu0
  %v5089 = vadd.f32 %v4969, %v5088
  %v5090 = vpop.f32.mrb[0].mxu0
  %5091 = vmatprep.mubr.bf16.mxu0 0
  %5092 = vmatmul.mubr.bf16.gmra.mrb[0].mxu0 %v418
  %v5093 = vpop.f32.mrb[0].mxu0
  %v5094 = vadd.f32 %v4969, %v5093
  %v5095 = vpop.f32.mrb[0].mxu0
  %v5096 = vpop.f32.mrb[0].mxu0
  %v5097 = vadd.f32 %v4969, %v5096
  %v5098 = vpop.f32.mrb[0].mxu0
  %5099 = vmatprep.mubr.bf16.mxu0 0
  %5100 = vmatmul.mubr.bf16.gmra.mrb[0].mxu0 %v419
  %v5101 = vpop.f32.mrb[0].mxu0
  %v5102 = vadd.f32 %v4969, %v5101
  %v5103 = vpop.f32.mrb[0].mxu0
  %v5104 = vpop.f32.mrb[0].mxu0
  %v5105 = vadd.f32 %v4969, %v5104
  %v5106 = vpop.f32.mrb[0].mxu0
  %5107 = vmatprep.mubr.bf16.mxu0 0
  %5108 = vmatmul.mubr.bf16.gmra.mrb[0].mxu0 %v420
  %v5109 = vpop.f32.mrb[0].mxu0
  %v5110 = vadd.f32 %v4969, %v5109
  %v5111 = vpop.f32.mrb[0].mxu0
  %v5112 = vpop.f32.mrb[0].mxu0
  %v5113 = vadd.f32 %v4969, %v5112
  %v5114 = vpop.f32.mrb[0].mxu0
  %5115 = vmatprep.mubr.bf16.mxu0 0
  %5116 = vmatmul.mubr.bf16.gmra.mrb[0].mxu0 %v421
  %v5117 = vpop.f32.mrb[0].mxu0
  %v5118 = vadd.f32 %v4969, %v5117
  %v5119 = vpop.f32.mrb[0].mxu0
  %v5120 = vpop.f32.mrb[0].mxu0
  %v5121 = vadd.f32 %v4969, %v5120
  %v5122 = vpop.f32.mrb[0].mxu0
  %5123 = vmatprep.mubr.bf16.mxu0 0
  %5124 = vmatmul.mubr.bf16.gmra.mrb[0].mxu0 %v422
  %v5125 = vpop.f32.mrb[0].mxu0
  %v5126 = vadd.f32 %v4969, %v5125
  %v5127 = vpop.f32.mrb[0].mxu0
  %v5128 = vpop.f32.mrb[0].mxu0
  %v5129 = vadd.f32 %v4969, %v5128
  %v5130 = vpop.f32.mrb[0].mxu0
  %5131 = vdwg.mxu0
  %v5132 = vmax.f32 %v5006, 0.0
  %v5133 = vmax.f32 %v5009, 0.0
  %v5134 = vmax.f32 %v5014, 0.0
  %v5135 = vmax.f32 %v5017, 0.0
  %v5136 = vmax.f32 %v5022, 0.0
  %v5137 = vmax.f32 %v5025, 0.0
  %v5138 = vmax.f32 %v5030, 0.0
  %v5139 = vmax.f32 %v5033, 0.0
  %v5140 = vmax.f32 %v5038, 0.0
  %v5141 = vmax.f32 %v5041, 0.0
  %v5142 = vmax.f32 %v5046, 0.0
  %v5143 = vmax.f32 %v5049, 0.0
  %v5144 = vmax.f32 %v5054, 0.0
  %v5145 = vmax.f32 %v5057, 0.0
  %v5146 = vmax.f32 %v5062, 0.0
  %v5147 = vmax.f32 %v5065, 0.0
  %v5148 = vmax.f32 %v5070, 0.0
  %v5149 = vmax.f32 %v5073, 0.0
  %v5150 = vmax.f32 %v5078, 0.0
  %v5151 = vmax.f32 %v5081, 0.0
  %v5152 = vmax.f32 %v5086, 0.0
  %v5153 = vmax.f32 %v5089, 0.0
  %v5154 = vmax.f32 %v5094, 0.0
  %v5155 = vmax.f32 %v5097, 0.0
  %v5156 = vmax.f32 %v5102, 0.0
  %v5157 = vmax.f32 %v5105, 0.0
  %v5158 = vmax.f32 %v5110, 0.0
  %v5159 = vmax.f32 %v5113, 0.0
  %v5160 = vmax.f32 %v5118, 0.0
  %v5161 = vmax.f32 %v5121, 0.0
  %v5162 = vmax.f32 %v5126, 0.0
  %v5163 = vmax.f32 %v5129, 0.0
  %v5164 = vld [vmem:[%s22] sm:$0xff]
  %v5165 = vld [vmem:[%s22 + $0x8] sm:$0xff]
  %v5166 = vld [vmem:[%s22 + $0x10] sm:$0xff]
  %v5167 = vld [vmem:[%s22 + $0x18] sm:$0xff]
  %v5168 = vld [vmem:[%s23] sm:$0xff]
  %v5169 = vld [vmem:[%s23 + $0x8] sm:$0xff]
  %v5170 = vld [vmem:[%s23 + $0x10] sm:$0xff]
  %v5171 = vld [vmem:[%s23 + $0x18] sm:$0xff]
  %v5173 = vsel %vm640, %v5148, 0
  %v5176 = vsel %vm640, %v5149, 0
  %v5179 = vsel %vm640, %v5150, 0
  %v5182 = vsel %vm640, %v5151, 0
  %v5185 = vsel %vm640, %v5152, 0
  %v5188 = vsel %vm640, %v5153, 0
  %v5191 = vsel %vm640, %v5154, 0
  %v5194 = vsel %vm640, %v5155, 0
  %v5197 = vsel %vm640, %v5156, 0
  %v5200 = vsel %vm640, %v5157, 0
  %v5203 = vsel %vm640, %v5158, 0
  %v5206 = vsel %vm640, %v5159, 0
  %v5209 = vsel %vm640, %v5160, 0
  %v5212 = vsel %vm640, %v5161, 0
  %v5215 = vsel %vm640, %v5162, 0
  %v5218 = vsel %vm640, %v5163, 0
  %5220 = vmatprep.subr.mxu0 0.0
  %5221 = vmatpush1.msra.mxu0 %v5168
  %5222 = vmatprep.subr.mxu0 0.0
  %5223 = vmatpush1.msra.mxu0 %v5169
  %5224 = vmatprep.subr.mxu0 0.0
  %5225 = vmatpush1.msra.mxu0 %v5170
  %5226 = vmatprep.subr.mxu0 0.0
  %5227 = vmatpush1.msra.mxu0 %v5171
  %5228 = vmatprep.subr.mxu0 0.0
  %5229 = vmatpush1.msra.mxu0 0.0
  %5230 = vmatprep.subr.mxu0 0.0
  %5231 = vmatpush1.msra.mxu0 0.0
  %5232 = vmatprep.subr.mxu0 0.0
  %5233 = vmatpush1.msra.mxu0 0.0
  %5234 = vmatprep.subr.mxu0 0.0
  %5235 = vmatpush1.msra.mxu0 0.0
  %5236 = vmatprep.subr.mxu0 0.0
  %5237 = vmatpush1.msra.mxu0 0.0
  %5238 = vmatprep.subr.mxu0 0.0
  %5239 = vmatpush1.msra.mxu0 0.0
  %5240 = vmatprep.subr.mxu0 0.0
  %5241 = vmatpush1.msra.mxu0 0.0
  %5242 = vmatprep.subr.mxu0 0.0
  %5243 = vmatpush1.msra.mxu0 0.0
  %5244 = vmatprep.subr.mxu0 0.0
  %5245 = vmatpush1.msra.mxu0 0.0
  %5246 = vmatprep.subr.mxu0 0.0
  %5247 = vmatpush1.msra.mxu0 0.0
  %5248 = vmatprep.subr.mxu0 0.0
  %5249 = vmatpush1.msra.mxu0 0.0
  %5250 = vmatprep.subr.mxu0 0.0
  %5251 = vmatpush1.msra.mxu0 0.0
  %5252 = vmatprep.subr.mxu0 0.0
  %5253 = vmatpush1.msra.mxu0 0.0
  %5254 = vmatprep.subr.mxu0 0.0
  %5255 = vmatpush1.msra.mxu0 0.0
  %5256 = vmatprep.subr.mxu0 0.0
  %5257 = vmatpush1.msra.mxu0 0.0
  %5258 = vmatprep.subr.mxu0 0.0
  %5259 = vmatpush1.msra.mxu0 0.0
  %5260 = vmatprep.subr.mxu0 0.0
  %5261 = vmatpush1.msra.mxu0 0.0
  %5262 = vmatprep.subr.mxu0 0.0
  %5263 = vmatpush1.msra.mxu0 0.0
  %5264 = vmatprep.subr.mxu0 0.0
  %5265 = vmatpush1.msra.mxu0 0.0
  %5266 = vmatprep.subr.mxu0 0.0
  %5267 = vmatpush1.msra.mxu0 0.0
  %5268 = vmatprep.subr.mxu0 0.0
  %5269 = vmatpush1.msra.mxu0 0.0
  %5270 = vmatprep.subr.mxu0 0.0
  %5271 = vmatpush1.msra.mxu0 0.0
  %5272 = vmatprep.subr.mxu0 0.0
  %5273 = vmatpush1.msra.mxu0 0.0
  %5274 = vmatprep.subr.mxu0 0.0
  %5275 = vmatpush1.msra.mxu0 0.0
  %5276 = vmatprep.subr.mxu0 0.0
  %5277 = vmatpush1.msra.mxu0 0.0
  %5278 = vmatprep.subr.mxu0 0.0
  %5279 = vmatpush1.msra.mxu0 0.0
  %5280 = vmatprep.subr.mxu0 0.0
  %5281 = vmatpush1.msra.mxu0 0.0
  %5282 = vmatprep.subr.mxu0 0.0
  %5283 = vmatpush1.msra.mxu0 0.0
  %5284 = vmatprep.mubr.f32.mxu0 0.0
  %5285 = vmatmul.mubr.f32.gmra.mrb[0].mxu0 %v5173
  %v5286 = vpop.f32.mrb[0].mxu0
  %v5287 = vadd.f32 0.0, %v5286
  %v5288 = vpop.f32.mrb[0].mxu0
  %5289 = vmatprep.mubr.f32.mxu0 0.0
  %5290 = vmatmul.mubr.f32.gmra.mrb[0].mxu0 %v5176
  %v5291 = vpop.f32.mrb[0].mxu0
  %v5292 = vadd.f32 0.0, %v5291
  %v5293 = vpop.f32.mrb[0].mxu0
  %5294 = vmatprep.mubr.f32.mxu0 0.0
  %5295 = vmatmul.mubr.f32.gmra.mrb[0].mxu0 %v5179
  %v5296 = vpop.f32.mrb[0].mxu0
  %v5297 = vadd.f32 0.0, %v5296
  %v5298 = vpop.f32.mrb[0].mxu0
  %5299 = vmatprep.mubr.f32.mxu0 0.0
  %5300 = vmatmul.mubr.f32.gmra.mrb[0].mxu0 %v5182
  %v5301 = vpop.f32.mrb[0].mxu0
  %v5302 = vadd.f32 0.0, %v5301
  %v5303 = vpop.f32.mrb[0].mxu0
  %5304 = vmatprep.mubr.f32.mxu0 0.0
  %5305 = vmatmul.mubr.f32.gmra.mrb[0].mxu0 %v5185
  %v5306 = vpop.f32.mrb[0].mxu0
  %v5307 = vadd.f32 0.0, %v5306
  %v5308 = vpop.f32.mrb[0].mxu0
  %5309 = vmatprep.mubr.f32.mxu0 0.0
  %5310 = vmatmul.mubr.f32.gmra.mrb[0].mxu0 %v5188
  %v5311 = vpop.f32.mrb[0].mxu0
  %v5312 = vadd.f32 0.0, %v5311
  %v5313 = vpop.f32.mrb[0].mxu0
  %5314 = vmatprep.mubr.f32.mxu0 0.0
  %5315 = vmatmul.mubr.f32.gmra.mrb[0].mxu0 %v5191
  %v5316 = vpop.f32.mrb[0].mxu0
  %v5317 = vadd.f32 0.0, %v5316
  %v5318 = vpop.f32.mrb[0].mxu0
  %5319 = vmatprep.mubr.f32.mxu0 0.0
  %5320 = vmatmul.mubr.f32.gmra.mrb[0].mxu0 %v5194
  %v5321 = vpop.f32.mrb[0].mxu0
  %v5322 = vadd.f32 0.0, %v5321
  %v5323 = vpop.f32.mrb[0].mxu0
  %5324 = vmatprep.mubr.f32.mxu0 0.0
  %5325 = vmatmul.mubr.f32.gmra.mrb[0].mxu0 %v5197
  %v5326 = vpop.f32.mrb[0].mxu0
  %v5327 = vadd.f32 0.0, %v5326
  %v5328 = vpop.f32.mrb[0].mxu0
  %5329 = vmatprep.mubr.f32.mxu0 0.0
  %5330 = vmatmul.mubr.f32.gmra.mrb[0].mxu0 %v5200
  %v5331 = vpop.f32.mrb[0].mxu0
  %v5332 = vadd.f32 0.0, %v5331
  %v5333 = vpop.f32.mrb[0].mxu0
  %5334 = vmatprep.mubr.f32.mxu0 0.0
  %5335 = vmatmul.mubr.f32.gmra.mrb[0].mxu0 %v5203
  %v5336 = vpop.f32.mrb[0].mxu0
  %v5337 = vadd.f32 0.0, %v5336
  %v5338 = vpop.f32.mrb[0].mxu0
  %5339 = vmatprep.mubr.f32.mxu0 0.0
  %5340 = vmatmul.mubr.f32.gmra.mrb[0].mxu0 %v5206
  %v5341 = vpop.f32.mrb[0].mxu0
  %v5342 = vadd.f32 0.0, %v5341
  %v5343 = vpop.f32.mrb[0].mxu0
  %5344 = vmatprep.mubr.f32.mxu0 0.0
  %5345 = vmatmul.mubr.f32.gmra.mrb[0].mxu0 %v5209
  %v5346 = vpop.f32.mrb[0].mxu0
  %v5347 = vadd.f32 0.0, %v5346
  %v5348 = vpop.f32.mrb[0].mxu0
  %5349 = vmatprep.mubr.f32.mxu0 0.0
  %5350 = vmatmul.mubr.f32.gmra.mrb[0].mxu0 %v5212
  %v5351 = vpop.f32.mrb[0].mxu0
  %v5352 = vadd.f32 0.0, %v5351
  %v5353 = vpop.f32.mrb[0].mxu0
  %5354 = vmatprep.mubr.f32.mxu0 0.0
  %5355 = vmatmul.mubr.f32.gmra.mrb[0].mxu0 %v5215
  %v5356 = vpop.f32.mrb[0].mxu0
  %v5357 = vadd.f32 0.0, %v5356
  %v5358 = vpop.f32.mrb[0].mxu0
  %5359 = vmatprep.mubr.f32.mxu0 0.0
  %5360 = vmatmul.mubr.f32.gmra.mrb[0].mxu0 %v5218
  %v5361 = vpop.f32.mrb[0].mxu0
  %v5362 = vadd.f32 0.0, %v5361
  %v5363 = vpop.f32.mrb[0].mxu0
  %5364 = vdwg.mxu0
  %v5366 = vsel %vm640, %v5132, 0
  %v5369 = vsel %vm640, %v5133, 0
  %v5372 = vsel %vm640, %v5134, 0
  %v5375 = vsel %vm640, %v5135, 0
  %v5378 = vsel %vm640, %v5136, 0
  %v5381 = vsel %vm640, %v5137, 0
  %v5384 = vsel %vm640, %v5138, 0
  %v5387 = vsel %vm640, %v5139, 0
  %v5390 = vsel %vm640, %v5140, 0
  %v5393 = vsel %vm640, %v5141, 0
  %v5396 = vsel %vm640, %v5142, 0
  %v5399 = vsel %vm640, %v5143, 0
  %v5402 = vsel %vm640, %v5144, 0
  %v5405 = vsel %vm640, %v5145, 0
  %v5408 = vsel %vm640, %v5146, 0
  %v5411 = vsel %vm640, %v5147, 0
  %5413 = vmatprep.subr.mxu0 0.0
  %5414 = vmatpush1.msra.mxu0 %v5164
  %5415 = vmatprep.subr.mxu0 0.0
  %5416 = vmatpush1.msra.mxu0 %v5165
  %5417 = vmatprep.subr.mxu0 0.0
  %5418 = vmatpush1.msra.mxu0 %v5166
  %5419 = vmatprep.subr.mxu0 0.0
  %5420 = vmatpush1.msra.mxu0 %v5167
  %5421 = vmatprep.subr.mxu0 0.0
  %5422 = vmatpush1.msra.mxu0 0.0
  %5423 = vmatprep.subr.mxu0 0.0
  %5424 = vmatpush1.msra.mxu0 0.0
  %5425 = vmatprep.subr.mxu0 0.0
  %5426 = vmatpush1.msra.mxu0 0.0
  %5427 = vmatprep.subr.mxu0 0.0
  %5428 = vmatpush1.msra.mxu0 0.0
  %5429 = vmatprep.subr.mxu0 0.0
  %5430 = vmatpush1.msra.mxu0 0.0
  %5431 = vmatprep.subr.mxu0 0.0
  %5432 = vmatpush1.msra.mxu0 0.0
  %5433 = vmatprep.subr.mxu0 0.0
  %5434 = vmatpush1.msra.mxu0 0.0
  %5435 = vmatprep.subr.mxu0 0.0
  %5436 = vmatpush1.msra.mxu0 0.0
  %5437 = vmatprep.subr.mxu0 0.0
  %5438 = vmatpush1.msra.mxu0 0.0
  %5439 = vmatprep.subr.mxu0 0.0
  %5440 = vmatpush1.msra.mxu0 0.0
  %5441 = vmatprep.subr.mxu0 0.0
  %5442 = vmatpush1.msra.mxu0 0.0
  %5443 = vmatprep.subr.mxu0 0.0
  %5444 = vmatpush1.msra.mxu0 0.0
  %5445 = vmatprep.subr.mxu0 0.0
  %5446 = vmatpush1.msra.mxu0 0.0
  %5447 = vmatprep.subr.mxu0 0.0
  %5448 = vmatpush1.msra.mxu0 0.0
  %5449 = vmatprep.subr.mxu0 0.0
  %5450 = vmatpush1.msra.mxu0 0.0
  %5451 = vmatprep.subr.mxu0 0.0
  %5452 = vmatpush1.msra.mxu0 0.0
  %5453 = vmatprep.subr.mxu0 0.0
  %5454 = vmatpush1.msra.mxu0 0.0
  %5455 = vmatprep.subr.mxu0 0.0
  %5456 = vmatpush1.msra.mxu0 0.0
  %5457 = vmatprep.subr.mxu0 0.0
  %5458 = vmatpush1.msra.mxu0 0.0
  %5459 = vmatprep.subr.mxu0 0.0
  %5460 = vmatpush1.msra.mxu0 0.0
  %5461 = vmatprep.subr.mxu0 0.0
  %5462 = vmatpush1.msra.mxu0 0.0
  %5463 = vmatprep.subr.mxu0 0.0
  %5464 = vmatpush1.msra.mxu0 0.0
  %5465 = vmatprep.subr.mxu0 0.0
  %5466 = vmatpush1.msra.mxu0 0.0
  %5467 = vmatprep.subr.mxu0 0.0
  %5468 = vmatpush1.msra.mxu0 0.0
  %5469 = vmatprep.subr.mxu0 0.0
  %5470 = vmatpush1.msra.mxu0 0.0
  %5471 = vmatprep.subr.mxu0 0.0
  %5472 = vmatpush1.msra.mxu0 0.0
  %5473 = vmatprep.subr.mxu0 0.0
  %5474 = vmatpush1.msra.mxu0 0.0
  %5475 = vmatprep.subr.mxu0 0.0
  %5476 = vmatpush1.msra.mxu0 0.0
  %5477 = vmatprep.mubr.f32.mxu0 0.0
  %5478 = vmatmul.mubr.f32.gmra.mrb[0].mxu0 %v5366
  %v5479 = vpop.f32.mrb[0].mxu0
  %v5480 = vadd.f32 %v5287, %v5479
  %v5481 = vpop.f32.mrb[0].mxu0
  %5482 = vmatprep.mubr.f32.mxu0 0.0
  %5483 = vmatmul.mubr.f32.gmra.mrb[0].mxu0 %v5369
  %v5484 = vpop.f32.mrb[0].mxu0
  %v5485 = vadd.f32 %v5292, %v5484
  %v5486 = vpop.f32.mrb[0].mxu0
  %5487 = vmatprep.mubr.f32.mxu0 0.0
  %5488 = vmatmul.mubr.f32.gmra.mrb[0].mxu0 %v5372
  %v5489 = vpop.f32.mrb[0].mxu0
  %v5490 = vadd.f32 %v5297, %v5489
  %v5491 = vpop.f32.mrb[0].mxu0
  %5492 = vmatprep.mubr.f32.mxu0 0.0
  %5493 = vmatmul.mubr.f32.gmra.mrb[0].mxu0 %v5375
  %v5494 = vpop.f32.mrb[0].mxu0
  %v5495 = vadd.f32 %v5302, %v5494
  %v5496 = vpop.f32.mrb[0].mxu0
  %5497 = vmatprep.mubr.f32.mxu0 0.0
  %5498 = vmatmul.mubr.f32.gmra.mrb[0].mxu0 %v5378
  %v5499 = vpop.f32.mrb[0].mxu0
  %v5500 = vadd.f32 %v5307, %v5499
  %v5501 = vpop.f32.mrb[0].mxu0
  %5502 = vmatprep.mubr.f32.mxu0 0.0
  %5503 = vmatmul.mubr.f32.gmra.mrb[0].mxu0 %v5381
  %v5504 = vpop.f32.mrb[0].mxu0
  %v5505 = vadd.f32 %v5312, %v5504
  %v5506 = vpop.f32.mrb[0].mxu0
  %5507 = vmatprep.mubr.f32.mxu0 0.0
  %5508 = vmatmul.mubr.f32.gmra.mrb[0].mxu0 %v5384
  %v5509 = vpop.f32.mrb[0].mxu0
  %v5510 = vadd.f32 %v5317, %v5509
  %v5511 = vpop.f32.mrb[0].mxu0
  %5512 = vmatprep.mubr.f32.mxu0 0.0
  %5513 = vmatmul.mubr.f32.gmra.mrb[0].mxu0 %v5387
  %v5514 = vpop.f32.mrb[0].mxu0
  %v5515 = vadd.f32 %v5322, %v5514
  %v5516 = vpop.f32.mrb[0].mxu0
  %5517 = vmatprep.mubr.f32.mxu0 0.0
  %5518 = vmatmul.mubr.f32.gmra.mrb[0].mxu0 %v5390
  %v5519 = vpop.f32.mrb[0].mxu0
  %v5520 = vadd.f32 %v5327, %v5519
  %v5521 = vpop.f32.mrb[0].mxu0
  %5522 = vmatprep.mubr.f32.mxu0 0.0
  %5523 = vmatmul.mubr.f32.gmra.mrb[0].mxu0 %v5393
  %v5524 = vpop.f32.mrb[0].mxu0
  %v5525 = vadd.f32 %v5332, %v5524
  %v5526 = vpop.f32.mrb[0].mxu0
  %5527 = vmatprep.mubr.f32.mxu0 0.0
  %5528 = vmatmul.mubr.f32.gmra.mrb[0].mxu0 %v5396
  %v5529 = vpop.f32.mrb[0].mxu0
  %v5530 = vadd.f32 %v5337, %v5529
  %v5531 = vpop.f32.mrb[0].mxu0
  %5532 = vmatprep.mubr.f32.mxu0 0.0
  %5533 = vmatmul.mubr.f32.gmra.mrb[0].mxu0 %v5399
  %v5534 = vpop.f32.mrb[0].mxu0
  %v5535 = vadd.f32 %v5342, %v5534
  %v5536 = vpop.f32.mrb[0].mxu0
  %5537 = vmatprep.mubr.f32.mxu0 0.0
  %5538 = vmatmul.mubr.f32.gmra.mrb[0].mxu0 %v5402
  %v5539 = vpop.f32.mrb[0].mxu0
  %v5540 = vadd.f32 %v5347, %v5539
  %v5541 = vpop.f32.mrb[0].mxu0
  %5542 = vmatprep.mubr.f32.mxu0 0.0
  %5543 = vmatmul.mubr.f32.gmra.mrb[0].mxu0 %v5405
  %v5544 = vpop.f32.mrb[0].mxu0
  %v5545 = vadd.f32 %v5352, %v5544
  %v5546 = vpop.f32.mrb[0].mxu0
  %5547 = vmatprep.mubr.f32.mxu0 0.0
  %5548 = vmatmul.mubr.f32.gmra.mrb[0].mxu0 %v5408
  %v5549 = vpop.f32.mrb[0].mxu0
  %v5550 = vadd.f32 %v5357, %v5549
  %v5551 = vpop.f32.mrb[0].mxu0
  %5552 = vmatprep.mubr.f32.mxu0 0.0
  %5553 = vmatmul.mubr.f32.gmra.mrb[0].mxu0 %v5411
  %v5554 = vpop.f32.mrb[0].mxu0
  %v5555 = vadd.f32 %v5362, %v5554
  %v5556 = vpop.f32.mrb[0].mxu0
  %5557 = vdwg.mxu0
  %v5558 = vpack.c.bf16 %v5485, %v5480
  %v5559 = vpack.c.bf16 %v5495, %v5490
  %v5560 = vpack.c.bf16 %v5505, %v5500
  %v5561 = vpack.c.bf16 %v5515, %v5510
  %v5562 = vpack.c.bf16 %v5525, %v5520
  %v5563 = vpack.c.bf16 %v5535, %v5530
  %v5564 = vpack.c.bf16 %v5545, %v5540
  %v5565 = vpack.c.bf16 %v5555, %v5550
  %v5566 = vld [vmem:[%s0] sm:$0xf]
  %v5567 = vld [vmem:[%s0 + $0x4] sm:$0xf]
  %v5568 = vld [vmem:[%s0 + $0x8] sm:$0xf]
  %v5569 = vld [vmem:[%s0 + $0xc] sm:$0xf]
  %v5570 = vld [vmem:[%s0 + $0x10] sm:$0xf]
  %v5571 = vld [vmem:[%s0 + $0x14] sm:$0xf]
  %v5572 = vld [vmem:[%s0 + $0x18] sm:$0xf]
  %v5573 = vld [vmem:[%s0 + $0x1c] sm:$0xf]
  %v5574 = vld [vmem:[%s0 + $0x20] sm:$0xf]
  %v5575 = vld [vmem:[%s0 + $0x24] sm:$0xf]
  %v5576 = vld [vmem:[%s0 + $0x28] sm:$0xf]
  %v5577 = vld [vmem:[%s0 + $0x2c] sm:$0xf]
  %v5578 = vld [vmem:[%s0 + $0x30] sm:$0xf]
  %v5579 = vld [vmem:[%s0 + $0x34] sm:$0xf]
  %v5580 = vld [vmem:[%s0 + $0x38] sm:$0xf]
  %v5581 = vld [vmem:[%s0 + $0x3c] sm:$0xf]
  %v5582 = vld [vmem:[%s24] sm:$0x1]
  %v5584 = vlaneseq
  %v5585 = vshrl.u32 %v5584, 7
  %v5586 = vsub.s32 0, %v5585
  %v5587 = vrot.slane %v5582, %v5586
  %v5605 = vunpack.c.l.b16 %v5566
  %v5606 = vunpack.c.l.b16 %v5567
  %v5607 = vunpack.c.l.b16 %v5568
  %v5608 = vunpack.c.l.b16 %v5569
  %v5609 = vunpack.c.l.b16 %v5570
  %v5610 = vunpack.c.l.b16 %v5571
  %v5611 = vunpack.c.l.b16 %v5572
  %v5612 = vunpack.c.l.b16 %v5573
  %v5613 = vunpack.c.l.b16 %v5574
  %v5614 = vunpack.c.l.b16 %v5575
  %v5615 = vunpack.c.l.b16 %v5576
  %v5616 = vunpack.c.l.b16 %v5577
  %v5617 = vunpack.c.l.b16 %v5578
  %v5618 = vunpack.c.l.b16 %v5579
  %v5619 = vunpack.c.l.b16 %v5580
  %v5620 = vunpack.c.l.b16 %v5581
  %v5621 = vpack.c.b16 %v5606, %v5605
  %v5622 = vpack.c.b16 %v5608, %v5607
  %v5623 = vpack.c.b16 %v5610, %v5609
  %v5624 = vpack.c.b16 %v5612, %v5611
  %v5625 = vpack.c.b16 %v5614, %v5613
  %v5626 = vpack.c.b16 %v5616, %v5615
  %v5627 = vpack.c.b16 %v5618, %v5617
  %v5628 = vpack.c.b16 %v5620, %v5619
  %5637 = vmatprep.subr.bf16.mxu0 0
  %5638 = vmatpush1.bf16.msra.mxu0 %v5558
  %5639 = vmatprep.subr.bf16.mxu0 0
  %5640 = vmatpush1.bf16.msra.mxu0 %v5559
  %5641 = vmatprep.subr.bf16.mxu0 0
  %5642 = vmatpush1.bf16.msra.mxu0 %v5560
  %5643 = vmatprep.subr.bf16.mxu0 0
  %5644 = vmatpush1.bf16.msra.mxu0 %v5561
  %5645 = vmatprep.subr.bf16.mxu0 0
  %5646 = vmatpush1.bf16.msra.mxu0 %v5562
  %5647 = vmatprep.subr.bf16.mxu0 0
  %5648 = vmatpush1.bf16.msra.mxu0 %v5563
  %5649 = vmatprep.subr.bf16.mxu0 0
  %5650 = vmatpush1.bf16.msra.mxu0 %v5564
  %5651 = vmatprep.subr.bf16.mxu0 0
  %5652 = vmatpush1.bf16.msra.mxu0 %v5565
  %5653 = vmatprep.subr.bf16.mxu0 0
  %5654 = vmatpush1.bf16.msra.mxu0 0
  %5655 = vmatprep.subr.bf16.mxu0 0
  %5656 = vmatpush1.bf16.msra.mxu0 0
  %5657 = vmatprep.subr.bf16.mxu0 0
  %5658 = vmatpush1.bf16.msra.mxu0 0
  %5659 = vmatprep.subr.bf16.mxu0 0
  %5660 = vmatpush1.bf16.msra.mxu0 0
  %5661 = vmatprep.subr.bf16.mxu0 0
  %5662 = vmatpush1.bf16.msra.mxu0 0
  %5663 = vmatprep.subr.bf16.mxu0 0
  %5664 = vmatpush1.bf16.msra.mxu0 0
  %5665 = vmatprep.subr.bf16.mxu0 0
  %5666 = vmatpush1.bf16.msra.mxu0 0
  %5667 = vmatprep.subr.bf16.mxu0 0
  %5668 = vmatpush1.bf16.msra.mxu0 0
  %5669 = vmatprep.mubr.bf16.mxu0 0
  %5670 = vmatmul.mubr.bf16.gmra.mrb[0].mxu0 %v5621
  %v5671 = vpop.f32.mrb[0].mxu0
  %v5672 = vadd.f32 %v5587, %v5671
  %v5673 = vpop.f32.mrb[0].mxu0
  %v5674 = vpop.f32.mrb[0].mxu0
  %v5675 = vadd.f32 %v5587, %v5674
  %v5676 = vpop.f32.mrb[0].mxu0
  %5677 = vmatprep.mubr.bf16.mxu0 0
  %5678 = vmatmul.mubr.bf16.gmra.mrb[0].mxu0 %v5622
  %v5679 = vpop.f32.mrb[0].mxu0
  %v5680 = vadd.f32 %v5587, %v5679
  %v5681 = vpop.f32.mrb[0].mxu0
  %v5682 = vpop.f32.mrb[0].mxu0
  %v5683 = vadd.f32 %v5587, %v5682
  %v5684 = vpop.f32.mrb[0].mxu0
  %5685 = vmatprep.mubr.bf16.mxu0 0
  %5686 = vmatmul.mubr.bf16.gmra.mrb[0].mxu0 %v5623
  %v5687 = vpop.f32.mrb[0].mxu0
  %v5688 = vadd.f32 %v5587, %v5687
  %v5689 = vpop.f32.mrb[0].mxu0
  %v5690 = vpop.f32.mrb[0].mxu0
  %v5691 = vadd.f32 %v5587, %v5690
  %v5692 = vpop.f32.mrb[0].mxu0
  %5693 = vmatprep.mubr.bf16.mxu0 0
  %5694 = vmatmul.mubr.bf16.gmra.mrb[0].mxu0 %v5624
  %v5695 = vpop.f32.mrb[0].mxu0
  %v5696 = vadd.f32 %v5587, %v5695
  %v5697 = vpop.f32.mrb[0].mxu0
  %v5698 = vpop.f32.mrb[0].mxu0
  %v5699 = vadd.f32 %v5587, %v5698
  %v5700 = vpop.f32.mrb[0].mxu0
  %5701 = vmatprep.mubr.bf16.mxu0 0
  %5702 = vmatmul.mubr.bf16.gmra.mrb[0].mxu0 %v5625
  %v5703 = vpop.f32.mrb[0].mxu0
  %v5704 = vadd.f32 %v5587, %v5703
  %v5705 = vpop.f32.mrb[0].mxu0
  %v5706 = vpop.f32.mrb[0].mxu0
  %v5707 = vadd.f32 %v5587, %v5706
  %v5708 = vpop.f32.mrb[0].mxu0
  %5709 = vmatprep.mubr.bf16.mxu0 0
  %5710 = vmatmul.mubr.bf16.gmra.mrb[0].mxu0 %v5626
  %v5711 = vpop.f32.mrb[0].mxu0
  %v5712 = vadd.f32 %v5587, %v5711
  %v5713 = vpop.f32.mrb[0].mxu0
  %v5714 = vpop.f32.mrb[0].mxu0
  %v5715 = vadd.f32 %v5587, %v5714
  %v5716 = vpop.f32.mrb[0].mxu0
  %5717 = vmatprep.mubr.bf16.mxu0 0
  %5718 = vmatmul.mubr.bf16.gmra.mrb[0].mxu0 %v5627
  %v5719 = vpop.f32.mrb[0].mxu0
  %v5720 = vadd.f32 %v5587, %v5719
  %v5721 = vpop.f32.mrb[0].mxu0
  %v5722 = vpop.f32.mrb[0].mxu0
  %v5723 = vadd.f32 %v5587, %v5722
  %v5724 = vpop.f32.mrb[0].mxu0
  %5725 = vmatprep.mubr.bf16.mxu0 0
  %5726 = vmatmul.mubr.bf16.gmra.mrb[0].mxu0 %v5628
  %v5727 = vpop.f32.mrb[0].mxu0
  %v5728 = vadd.f32 %v5587, %v5727
  %v5729 = vpop.f32.mrb[0].mxu0
  %v5730 = vpop.f32.mrb[0].mxu0
  %v5731 = vadd.f32 %v5587, %v5730
  %v5732 = vpop.f32.mrb[0].mxu0
  %5733 = vdwg.mxu0
  %5734 = vst.msk [vmem:[%s25] sm:$0xff] %vm3943, %v5672
  %5735 = vst.msk [vmem:[%s25 + $0x8] sm:$0xff] %vm3943, %v5675
  %5736 = vst.msk [vmem:[%s25 + $0x10] sm:$0xff] %vm3943, %v5680
  %5737 = vst.msk [vmem:[%s25 + $0x18] sm:$0xff] %vm3943, %v5683
  %5738 = vst.msk [vmem:[%s25 + $0x20] sm:$0xff] %vm3943, %v5688
  %5739 = vst.msk [vmem:[%s25 + $0x28] sm:$0xff] %vm3943, %v5691
  %5740 = vst.msk [vmem:[%s25 + $0x30] sm:$0xff] %vm3943, %v5696
  %5741 = vst.msk [vmem:[%s25 + $0x38] sm:$0xff] %vm3943, %v5699
  %5742 = vst.msk [vmem:[%s25 + $0x40] sm:$0xff] %vm3943, %v5704
  %5743 = vst.msk [vmem:[%s25 + $0x48] sm:$0xff] %vm3943, %v5707
  %5744 = vst.msk [vmem:[%s25 + $0x50] sm:$0xff] %vm3943, %v5712
  %5745 = vst.msk [vmem:[%s25 + $0x58] sm:$0xff] %vm3943, %v5715
  %5746 = vst.msk [vmem:[%s25 + $0x60] sm:$0xff] %vm3943, %v5720
  %5747 = vst.msk [vmem:[%s25 + $0x68] sm:$0xff] %vm3943, %v5723
  %5748 = vst.msk [vmem:[%s25 + $0x70] sm:$0xff] %vm3943, %v5728
  %5749 = vst.msk [vmem:[%s25 + $0x78] sm:$0xff] %vm3943, %v5731
  // Predicated region
  $region102: #{tpu_custom_call.1} parent=0 // pred_check
    _
  $region103: #{tpu_custom_call.1} parent=0 // pred_check_branch
    %5751 = sbr.rel (0) target = $region105
  $region104: #{tpu_custom_call.1} parent=0 // pred_region
    _
  $region105: #{tpu_custom_call.1} parent=0 // pred_fallthru
    _
  // Predicated region
  $region106: #{tpu_custom_call.1} parent=0 // pred_check
    _
  $region107: #{tpu_custom_call.1} parent=0 // pred_check_branch
    %5753 = sbr.rel (0) target = $region109
  $region108: #{tpu_custom_call.1} parent=0 // pred_region
    _
  $region109: #{tpu_custom_call.1} parent=0 // pred_fallthru
    _

</llo_original>
